<compile_context>
chip_gen: v7x
topology: tpu7x:2x2x1
jax: 0.10.0
libtpu: 0.0.40
codegen_flags: <defaults>
</compile_context>

<pallas_src>
import functools

import jax
import jax.numpy as jnp
from jax import lax
from jax.experimental import pallas as pl
from jax.experimental.pallas import tpu as pltpu


# 3x3 conv taps in (kh, kw) order — must match the flattened weight layout below.
TAPS = tuple((di, dj) for di in range(3) for dj in range(3))


# ----------------------------------------------------------------------------
# Pallas kernel: full ResBlocks stack for one sample
# ----------------------------------------------------------------------------
def resblocks_kernel(x_ref, w_ref, b_ref, m_ref, o_ref, ext_ref, *,
                     num_blocks, W, eps):
    """x_ref/o_ref: (C, H*W); w_ref: (num_blocks*2*9, C, C) bf16;
    b_ref: (num_blocks*2, C, 1); m_ref: (9, 1, H*W); ext_ref: VMEM (C, 2*H*W)."""
    C, HW = x_ref.shape
    x = x_ref[...]

    def conv3x3(cur, widx):
        # Circularly duplicate along lanes so every tap becomes a static
        # lane-offset VMEM load (im2col stays in VMEM views — never in HBM).
        ext_ref[:, 0:HW] = cur
        ext_ref[:, HW:2 * HW] = cur
        acc = jnp.zeros((C, HW), jnp.float32)
        for t, (di, dj) in enumerate(TAPS):
            if (di, dj) == (1, 1):
                shifted = cur                                  # center: no shift/mask
            else:
                off = ((di - 1) * W + (dj - 1)) % HW           # static offset
                # shifted[:, p] == cur[:, (p + s) mod HW]; boundary mask ==> zero pad
                shifted = ext_ref[:, off:off + HW] * m_ref[t]
            acc = acc + jnp.dot(w_ref[widx * 9 + t],           # (C, C) bf16
                                shifted.astype(jnp.bfloat16),  # (C, HW) bf16
                                preferred_element_type=jnp.float32)
        return acc + b_ref[widx]                               # bias (C, 1)

    def instance_norm(y):
        mean = jnp.mean(y, axis=1, keepdims=True)
        var = jnp.mean((y - mean) ** 2, axis=1, keepdims=True)  # biased, like torch IN
        return (y - mean) * lax.rsqrt(var + eps)

    for blk in range(num_blocks):
        residual = x
        y = conv3x3(x, blk * 2 + 0)
        y = jnp.maximum(instance_norm(y), 0.0)                  # norm='inst' + relu
        y = conv3x3(y, blk * 2 + 1)
        y = instance_norm(y)                                    # norm='inst', act='none'
        x = y + residual

    o_ref[...] = x.astype(o_ref.dtype)


# ----------------------------------------------------------------------------
# Wrapper
# ----------------------------------------------------------------------------
def make_tap_masks(H, W):
    """(9, 1, H*W) {0,1} masks marking in-bounds source pixels per tap (zero pad)."""
    hh = jnp.arange(H).reshape(H, 1)
    ww = jnp.arange(W).reshape(1, W)
    ms = []
    for di, dj in TAPS:
        h2 = hh + (di - 1)
        w2 = ww + (dj - 1)
        m = ((h2 >= 0) & (h2 < H) & (w2 >= 0) & (w2 < W)).astype(jnp.float32)
        ms.append(m.reshape(1, H * W))
    return jnp.stack(ms, axis=0)


def prepare_weights(w, b):
    """w: (nb, 2, Cout, Cin, 3, 3) f32; b: (nb, 2, Cout) f32 ->
    bf16 tap weights (nb*2*9, Cout, Cin) and f32 biases (nb*2, Cout, 1)."""
    nb, _, Cout, Cin, _, _ = w.shape
    w_taps = jnp.transpose(w, (0, 1, 4, 5, 2, 3)).reshape(nb * 2 * 9, Cout, Cin)
    return w_taps.astype(jnp.bfloat16), b.reshape(nb * 2, Cout, 1).astype(jnp.float32)


def resblocks_forward(x_nchw, w_taps, biases, masks, *, num_blocks, eps=1e-5):
    B, C, H, W = x_nchw.shape
    HW = H * W
    x = x_nchw.reshape(B, C, HW)   # NCHW is already channel-major: pure reshape

    out = pl.pallas_call(
        functools.partial(resblocks_kernel, num_blocks=num_blocks, W=W, eps=eps),
        out_shape=jax.ShapeDtypeStruct((B, C, HW), jnp.float32),
        grid=(B,),
        in_specs=[
            pl.BlockSpec((None, C, HW), lambda b: (b, 0, 0)),                 # activations
            pl.BlockSpec((num_blocks * 2 * 9, C, C), lambda b: (0, 0, 0)),    # bf16 weights
            pl.BlockSpec((num_blocks * 2, C, 1), lambda b: (0, 0, 0)),        # biases
            pl.BlockSpec((9, 1, HW), lambda b: (0, 0, 0)),                    # tap masks
        ],
        out_specs=pl.BlockSpec((None, C, HW), lambda b: (b, 0, 0)),
        scratch_shapes=[pltpu.VMEM((C, 2 * HW), jnp.float32)],
        compiler_params=pltpu.CompilerParams(
            dimension_semantics=("parallel",),     # batch axis -> both TCs on v7x
            vmem_limit_bytes=32 * 1024 * 1024,     # safe on v5e/v6e/v7x
        ),
    )(x, w_taps, biases, masks)
    return out.reshape(B, C, H, W)


# ----------------------------------------------------------------------------
# Pure-JAX reference (f32) for a correctness check
# ----------------------------------------------------------------------------
def _instance_norm_ref(x, eps=1e-5):
    mean = x.mean(axis=(2, 3), keepdims=True)
    var = ((x - mean) ** 2).mean(axis=(2, 3), keepdims=True)
    return (x - mean) * lax.rsqrt(var + eps)


def resblocks_ref(x, w, b, num_blocks, eps=1e-5):
    dn = ("NCHW", "OIHW", "NCHW")
    for blk in range(num_blocks):
        res = x
        y = lax.conv_general_dilated(x, w[blk, 0], (1, 1), ((1, 1), (1, 1)),
                                     dimension_numbers=dn)
        y = y + b[blk, 0].reshape(1, -1, 1, 1)
        y = jnp.maximum(_instance_norm_ref(y, eps), 0.0)
        y = lax.conv_general_dilated(y, w[blk, 1], (1, 1), ((1, 1), (1, 1)),
                                     dimension_numbers=dn)
        y = y + b[blk, 1].reshape(1, -1, 1, 1)
        y = _instance_norm_ref(y, eps)
        x = y + res
    return x


# ----------------------------------------------------------------------------
def init_params(key, num_blocks, dim):
    kw, kb = jax.random.split(key)
    w = jax.random.normal(kw, (num_blocks, 2, dim, dim, 3, 3), jnp.float32)
    w = w * (1.0 / (3.0 * float(dim) ** 0.5))
    b = jax.random.normal(kb, (num_blocks, 2, dim), jnp.float32) * 0.1
    return w, b


if __name__ == "__main__":
    key = jax.random.PRNGKey(0)
    kx, kp = jax.random.split(key)

    # ResBlocks(num_blocks=2, dim=16, norm='inst', activation='relu', pad_type='zero', nz=0)
    num_blocks, dim = 2, 16
    B, H, W = 2, 16, 16

    x = jax.random.normal(kx, (B, dim, H, W), jnp.float32)   # NCHW, like PyTorch
    w, b = init_params(kp, num_blocks, dim)
    w_taps, b_k = prepare_weights(w, b)
    masks = make_tap_masks(H, W)

    fwd = jax.jit(functools.partial(resblocks_forward, num_blocks=num_blocks))
    out = fwd(x, w_taps, b_k, masks)
    out = jax.block_until_ready(out)

    assert out.shape == (B, dim, H, W), out.shape
    assert bool(jnp.all(jnp.isfinite(out)))

    # Compare against f32 reference (kernel uses bf16 MXU inputs -> loose tolerance).
    ref = resblocks_ref(x, w, b, num_blocks)
    err = float(jnp.max(jnp.abs(out - ref)))
    assert err < 0.3, f"max abs err vs reference: {err}"

    print("KERNEL_OK")
</pallas_src>

<mosaic_0001>
module attributes {stable_mosaic.version = 11 : i64} {
  func.func @resblocks_kernel(%arg0: i32, %arg1: memref<1x16x256xf32, #tpu.memory_space<vmem>>, %arg2: memref<36x16x16xbf16, #tpu.memory_space<vmem>>, %arg3: memref<4x16x1xf32, #tpu.memory_space<vmem>>, %arg4: memref<9x1x256xf32, #tpu.memory_space<vmem>>, %arg5: memref<1x16x256xf32, #tpu.memory_space<vmem>>, %arg6: memref<16x512xf32, #tpu.memory_space<vmem>>) attributes {dimension_semantics = [#tpu.dimension_semantics<parallel>], iteration_bounds = array<i64: 2>, scalar_prefetch = 0 : i64, scratch_operands = 1 : i64, tpu.core_type = #tpu.core_type<tc>, window_params = [{transform_indices = @transform_0, window_bounds = array<i64: 1, 16, 256>}, {pipeline_mode = #tpu.pipeline_mode<synchronous>, transform_indices = @transform_1, window_bounds = array<i64: 36, 16, 16>}, {pipeline_mode = #tpu.pipeline_mode<synchronous>, transform_indices = @transform_2, window_bounds = array<i64: 4, 16, 1>}, {pipeline_mode = #tpu.pipeline_mode<synchronous>, transform_indices = @transform_3, window_bounds = array<i64: 9, 1, 256>}, {transform_indices = @transform_4, window_bounds = array<i64: 1, 16, 256>}]} {
    %c0 = arith.constant 0 : index
    %c0_0 = arith.constant 0 : index
    %c0_1 = arith.constant 0 : index
    %0 = vector.load %arg1[%c0, %c0_0, %c0_1] : memref<1x16x256xf32, #tpu.memory_space<vmem>>, vector<1x16x256xf32>
    %1 = vector.shape_cast %0 : vector<1x16x256xf32> to vector<16x256xf32>
    %c0_2 = arith.constant 0 : index
    %c0_3 = arith.constant 0 : index
    %2 = vector.load %arg6[%c0_2, %c0_3] : memref<16x512xf32, #tpu.memory_space<vmem>>, vector<16x256xf32>
    tpu.vector_store %arg6[%c0_2, %c0_3], %1 {strides = array<i32>} : memref<16x512xf32, #tpu.memory_space<vmem>>, vector<16x256xf32>,
    %c0_4 = arith.constant 0 : index
    %c256 = arith.constant 256 : index
    %3 = vector.load %arg6[%c0_4, %c256] : memref<16x512xf32, #tpu.memory_space<vmem>>, vector<16x256xf32>
    tpu.vector_store %arg6[%c0_4, %c256], %1 {strides = array<i32>} : memref<16x512xf32, #tpu.memory_space<vmem>>, vector<16x256xf32>,
    %cst = arith.constant 0.000000e+00 : f32
    %4 = vector.broadcast %cst : f32 to vector<16x256xf32>
    %c0_5 = arith.constant 0 : index
    %c239 = arith.constant 239 : index
    %5 = vector.load %arg6[%c0_5, %c239] : memref<16x512xf32, #tpu.memory_space<vmem>>, vector<16x256xf32>
    %c0_6 = arith.constant 0 : index
    %c0_7 = arith.constant 0 : index
    %c0_8 = arith.constant 0 : index
    %6 = vector.load %arg4[%c0_6, %c0_7, %c0_8] : memref<9x1x256xf32, #tpu.memory_space<vmem>>, vector<1x1x256xf32>
    %7 = vector.shape_cast %6 : vector<1x1x256xf32> to vector<1x256xf32>
    %8 = vector.broadcast %7 : vector<1x256xf32> to vector<16x256xf32>
    %9 = arith.mulf %5, %8 : vector<16x256xf32>
    %c0_9 = arith.constant 0 : index
    %c0_10 = arith.constant 0 : index
    %c0_11 = arith.constant 0 : index
    %10 = vector.load %arg2[%c0_9, %c0_10, %c0_11] : memref<36x16x16xbf16, #tpu.memory_space<vmem>>, vector<1x16x16xbf16>
    %11 = vector.shape_cast %10 : vector<1x16x16xbf16> to vector<16x16xbf16>
    %12 = arith.truncf %9 : vector<16x256xf32> to vector<16x256xbf16>
    %cst_12 = arith.constant dense<0.000000e+00> : vector<16x256xf32>
    %13 = tpu.matmul %11, %12, %cst_12 {dimension_numbers = #tpu.dot_dimension_numbers<[1], [0], [0], [1], [0, 0, 1, 1], [], []>} : vector<16x16xbf16>, vector<16x256xbf16>, vector<16x256xf32> -> vector<16x256xf32>
    %14 = arith.addf %4, %13 : vector<16x256xf32>
    %c0_13 = arith.constant 0 : index
    %c240 = arith.constant 240 : index
    %15 = vector.load %arg6[%c0_13, %c240] : memref<16x512xf32, #tpu.memory_space<vmem>>, vector<16x256xf32>
    %c1 = arith.constant 1 : index
    %c0_14 = arith.constant 0 : index
    %c0_15 = arith.constant 0 : index
    %16 = vector.load %arg4[%c1, %c0_14, %c0_15] : memref<9x1x256xf32, #tpu.memory_space<vmem>>, vector<1x1x256xf32>
    %17 = vector.shape_cast %16 : vector<1x1x256xf32> to vector<1x256xf32>
    %18 = vector.broadcast %17 : vector<1x256xf32> to vector<16x256xf32>
    %19 = arith.mulf %15, %18 : vector<16x256xf32>
    %c1_16 = arith.constant 1 : index
    %c0_17 = arith.constant 0 : index
    %c0_18 = arith.constant 0 : index
    %20 = vector.load %arg2[%c1_16, %c0_17, %c0_18] : memref<36x16x16xbf16, #tpu.memory_space<vmem>>, vector<1x16x16xbf16>
    %21 = vector.shape_cast %20 : vector<1x16x16xbf16> to vector<16x16xbf16>
    %22 = arith.truncf %19 : vector<16x256xf32> to vector<16x256xbf16>
    %cst_19 = arith.constant dense<0.000000e+00> : vector<16x256xf32>
    %23 = tpu.matmul %21, %22, %cst_19 {dimension_numbers = #tpu.dot_dimension_numbers<[1], [0], [0], [1], [0, 0, 1, 1], [], []>} : vector<16x16xbf16>, vector<16x256xbf16>, vector<16x256xf32> -> vector<16x256xf32>
    %24 = arith.addf %14, %23 : vector<16x256xf32>
    %c0_20 = arith.constant 0 : index
    %c241 = arith.constant 241 : index
    %25 = vector.load %arg6[%c0_20, %c241] : memref<16x512xf32, #tpu.memory_space<vmem>>, vector<16x256xf32>
    %c2 = arith.constant 2 : index
    %c0_21 = arith.constant 0 : index
    %c0_22 = arith.constant 0 : index
    %26 = vector.load %arg4[%c2, %c0_21, %c0_22] : memref<9x1x256xf32, #tpu.memory_space<vmem>>, vector<1x1x256xf32>
    %27 = vector.shape_cast %26 : vector<1x1x256xf32> to vector<1x256xf32>
    %28 = vector.broadcast %27 : vector<1x256xf32> to vector<16x256xf32>
    %29 = arith.mulf %25, %28 : vector<16x256xf32>
    %c2_23 = arith.constant 2 : index
    %c0_24 = arith.constant 0 : index
    %c0_25 = arith.constant 0 : index
    %30 = vector.load %arg2[%c2_23, %c0_24, %c0_25] : memref<36x16x16xbf16, #tpu.memory_space<vmem>>, vector<1x16x16xbf16>
    %31 = vector.shape_cast %30 : vector<1x16x16xbf16> to vector<16x16xbf16>
    %32 = arith.truncf %29 : vector<16x256xf32> to vector<16x256xbf16>
    %cst_26 = arith.constant dense<0.000000e+00> : vector<16x256xf32>
    %33 = tpu.matmul %31, %32, %cst_26 {dimension_numbers = #tpu.dot_dimension_numbers<[1], [0], [0], [1], [0, 0, 1, 1], [], []>} : vector<16x16xbf16>, vector<16x256xbf16>, vector<16x256xf32> -> vector<16x256xf32>
    %34 = arith.addf %24, %33 : vector<16x256xf32>
    %c0_27 = arith.constant 0 : index
    %c255 = arith.constant 255 : index
    %35 = vector.load %arg6[%c0_27, %c255] : memref<16x512xf32, #tpu.memory_space<vmem>>, vector<16x256xf32>
    %c3 = arith.constant 3 : index
    %c0_28 = arith.constant 0 : index
    %c0_29 = arith.constant 0 : index
    %36 = vector.load %arg4[%c3, %c0_28, %c0_29] : memref<9x1x256xf32, #tpu.memory_space<vmem>>, vector<1x1x256xf32>
    %37 = vector.shape_cast %36 : vector<1x1x256xf32> to vector<1x256xf32>
    %38 = vector.broadcast %37 : vector<1x256xf32> to vector<16x256xf32>
    %39 = arith.mulf %35, %38 : vector<16x256xf32>
    %c3_30 = arith.constant 3 : index
    %c0_31 = arith.constant 0 : index
    %c0_32 = arith.constant 0 : index
    %40 = vector.load %arg2[%c3_30, %c0_31, %c0_32] : memref<36x16x16xbf16, #tpu.memory_space<vmem>>, vector<1x16x16xbf16>
    %41 = vector.shape_cast %40 : vector<1x16x16xbf16> to vector<16x16xbf16>
    %42 = arith.truncf %39 : vector<16x256xf32> to vector<16x256xbf16>
    %cst_33 = arith.constant dense<0.000000e+00> : vector<16x256xf32>
    %43 = tpu.matmul %41, %42, %cst_33 {dimension_numbers = #tpu.dot_dimension_numbers<[1], [0], [0], [1], [0, 0, 1, 1], [], []>} : vector<16x16xbf16>, vector<16x256xbf16>, vector<16x256xf32> -> vector<16x256xf32>
    %44 = arith.addf %34, %43 : vector<16x256xf32>
    %c4 = arith.constant 4 : index
    %c0_34 = arith.constant 0 : index
    %c0_35 = arith.constant 0 : index
    %45 = vector.load %arg2[%c4, %c0_34, %c0_35] : memref<36x16x16xbf16, #tpu.memory_space<vmem>>, vector<1x16x16xbf16>
    %46 = vector.shape_cast %45 : vector<1x16x16xbf16> to vector<16x16xbf16>
    %47 = arith.truncf %1 : vector<16x256xf32> to vector<16x256xbf16>
    %cst_36 = arith.constant dense<0.000000e+00> : vector<16x256xf32>
    %48 = tpu.matmul %46, %47, %cst_36 {dimension_numbers = #tpu.dot_dimension_numbers<[1], [0], [0], [1], [0, 0, 1, 1], [], []>} : vector<16x16xbf16>, vector<16x256xbf16>, vector<16x256xf32> -> vector<16x256xf32>
    %49 = arith.addf %44, %48 : vector<16x256xf32>
    %c0_37 = arith.constant 0 : index
    %c1_38 = arith.constant 1 : index
    %50 = vector.load %arg6[%c0_37, %c1_38] : memref<16x512xf32, #tpu.memory_space<vmem>>, vector<16x256xf32>
    %c5 = arith.constant 5 : index
    %c0_39 = arith.constant 0 : index
    %c0_40 = arith.constant 0 : index
    %51 = vector.load %arg4[%c5, %c0_39, %c0_40] : memref<9x1x256xf32, #tpu.memory_space<vmem>>, vector<1x1x256xf32>
    %52 = vector.shape_cast %51 : vector<1x1x256xf32> to vector<1x256xf32>
    %53 = vector.broadcast %52 : vector<1x256xf32> to vector<16x256xf32>
    %54 = arith.mulf %50, %53 : vector<16x256xf32>
    %c5_41 = arith.constant 5 : index
    %c0_42 = arith.constant 0 : index
    %c0_43 = arith.constant 0 : index
    %55 = vector.load %arg2[%c5_41, %c0_42, %c0_43] : memref<36x16x16xbf16, #tpu.memory_space<vmem>>, vector<1x16x16xbf16>
    %56 = vector.shape_cast %55 : vector<1x16x16xbf16> to vector<16x16xbf16>
    %57 = arith.truncf %54 : vector<16x256xf32> to vector<16x256xbf16>
    %cst_44 = arith.constant dense<0.000000e+00> : vector<16x256xf32>
    %58 = tpu.matmul %56, %57, %cst_44 {dimension_numbers = #tpu.dot_dimension_numbers<[1], [0], [0], [1], [0, 0, 1, 1], [], []>} : vector<16x16xbf16>, vector<16x256xbf16>, vector<16x256xf32> -> vector<16x256xf32>
    %59 = arith.addf %49, %58 : vector<16x256xf32>
    %c0_45 = arith.constant 0 : index
    %c15 = arith.constant 15 : index
    %60 = vector.load %arg6[%c0_45, %c15] : memref<16x512xf32, #tpu.memory_space<vmem>>, vector<16x256xf32>
    %c6 = arith.constant 6 : index
    %c0_46 = arith.constant 0 : index
    %c0_47 = arith.constant 0 : index
    %61 = vector.load %arg4[%c6, %c0_46, %c0_47] : memref<9x1x256xf32, #tpu.memory_space<vmem>>, vector<1x1x256xf32>
    %62 = vector.shape_cast %61 : vector<1x1x256xf32> to vector<1x256xf32>
    %63 = vector.broadcast %62 : vector<1x256xf32> to vector<16x256xf32>
    %64 = arith.mulf %60, %63 : vector<16x256xf32>
    %c6_48 = arith.constant 6 : index
    %c0_49 = arith.constant 0 : index
    %c0_50 = arith.constant 0 : index
    %65 = vector.load %arg2[%c6_48, %c0_49, %c0_50] : memref<36x16x16xbf16, #tpu.memory_space<vmem>>, vector<1x16x16xbf16>
    %66 = vector.shape_cast %65 : vector<1x16x16xbf16> to vector<16x16xbf16>
    %67 = arith.truncf %64 : vector<16x256xf32> to vector<16x256xbf16>
    %cst_51 = arith.constant dense<0.000000e+00> : vector<16x256xf32>
    %68 = tpu.matmul %66, %67, %cst_51 {dimension_numbers = #tpu.dot_dimension_numbers<[1], [0], [0], [1], [0, 0, 1, 1], [], []>} : vector<16x16xbf16>, vector<16x256xbf16>, vector<16x256xf32> -> vector<16x256xf32>
    %69 = arith.addf %59, %68 : vector<16x256xf32>
    %c0_52 = arith.constant 0 : index
    %c16 = arith.constant 16 : index
    %70 = vector.load %arg6[%c0_52, %c16] : memref<16x512xf32, #tpu.memory_space<vmem>>, vector<16x256xf32>
    %c7 = arith.constant 7 : index
    %c0_53 = arith.constant 0 : index
    %c0_54 = arith.constant 0 : index
    %71 = vector.load %arg4[%c7, %c0_53, %c0_54] : memref<9x1x256xf32, #tpu.memory_space<vmem>>, vector<1x1x256xf32>
    %72 = vector.shape_cast %71 : vector<1x1x256xf32> to vector<1x256xf32>
    %73 = vector.broadcast %72 : vector<1x256xf32> to vector<16x256xf32>
    %74 = arith.mulf %70, %73 : vector<16x256xf32>
    %c7_55 = arith.constant 7 : index
    %c0_56 = arith.constant 0 : index
    %c0_57 = arith.constant 0 : index
    %75 = vector.load %arg2[%c7_55, %c0_56, %c0_57] : memref<36x16x16xbf16, #tpu.memory_space<vmem>>, vector<1x16x16xbf16>
    %76 = vector.shape_cast %75 : vector<1x16x16xbf16> to vector<16x16xbf16>
    %77 = arith.truncf %74 : vector<16x256xf32> to vector<16x256xbf16>
    %cst_58 = arith.constant dense<0.000000e+00> : vector<16x256xf32>
    %78 = tpu.matmul %76, %77, %cst_58 {dimension_numbers = #tpu.dot_dimension_numbers<[1], [0], [0], [1], [0, 0, 1, 1], [], []>} : vector<16x16xbf16>, vector<16x256xbf16>, vector<16x256xf32> -> vector<16x256xf32>
    %79 = arith.addf %69, %78 : vector<16x256xf32>
    %c0_59 = arith.constant 0 : index
    %c17 = arith.constant 17 : index
    %80 = vector.load %arg6[%c0_59, %c17] : memref<16x512xf32, #tpu.memory_space<vmem>>, vector<16x256xf32>
    %c8 = arith.constant 8 : index
    %c0_60 = arith.constant 0 : index
    %c0_61 = arith.constant 0 : index
    %81 = vector.load %arg4[%c8, %c0_60, %c0_61] : memref<9x1x256xf32, #tpu.memory_space<vmem>>, vector<1x1x256xf32>
    %82 = vector.shape_cast %81 : vector<1x1x256xf32> to vector<1x256xf32>
    %83 = vector.broadcast %82 : vector<1x256xf32> to vector<16x256xf32>
    %84 = arith.mulf %80, %83 : vector<16x256xf32>
    %c8_62 = arith.constant 8 : index
    %c0_63 = arith.constant 0 : index
    %c0_64 = arith.constant 0 : index
    %85 = vector.load %arg2[%c8_62, %c0_63, %c0_64] : memref<36x16x16xbf16, #tpu.memory_space<vmem>>, vector<1x16x16xbf16>
    %86 = vector.shape_cast %85 : vector<1x16x16xbf16> to vector<16x16xbf16>
    %87 = arith.truncf %84 : vector<16x256xf32> to vector<16x256xbf16>
    %cst_65 = arith.constant dense<0.000000e+00> : vector<16x256xf32>
    %88 = tpu.matmul %86, %87, %cst_65 {dimension_numbers = #tpu.dot_dimension_numbers<[1], [0], [0], [1], [0, 0, 1, 1], [], []>} : vector<16x16xbf16>, vector<16x256xbf16>, vector<16x256xf32> -> vector<16x256xf32>
    %89 = arith.addf %79, %88 : vector<16x256xf32>
    %c0_66 = arith.constant 0 : index
    %c0_67 = arith.constant 0 : index
    %c0_68 = arith.constant 0 : index
    %90 = vector.load %arg3[%c0_66, %c0_67, %c0_68] : memref<4x16x1xf32, #tpu.memory_space<vmem>>, vector<1x16x1xf32>
    %91 = vector.shape_cast %90 : vector<1x16x1xf32> to vector<16x1xf32>
    %92 = vector.broadcast %91 : vector<16x1xf32> to vector<16x256xf32>
    %93 = arith.addf %89, %92 : vector<16x256xf32>
    %cst_69 = arith.constant dense<0.000000e+00> : vector<16xf32>
    %94 = vector.multi_reduction <add>, %93, %cst_69 [1] : vector<16x256xf32> to vector<16xf32>
    %95 = vector.shape_cast %94 : vector<16xf32> to vector<16x1xf32>
    %cst_70 = arith.constant 2.560000e+02 : f32
    %96 = vector.broadcast %cst_70 : f32 to vector<16x1xf32>
    %97 = arith.divf %95, %96 : vector<16x1xf32>
    %98 = vector.broadcast %97 : vector<16x1xf32> to vector<16x256xf32>
    %99 = arith.subf %93, %98 : vector<16x256xf32>
    %100 = arith.mulf %99, %99 : vector<16x256xf32>
    %cst_71 = arith.constant dense<0.000000e+00> : vector<16xf32>
    %101 = vector.multi_reduction <add>, %100, %cst_71 [1] : vector<16x256xf32> to vector<16xf32>
    %102 = vector.shape_cast %101 : vector<16xf32> to vector<16x1xf32>
    %cst_72 = arith.constant 2.560000e+02 : f32
    %103 = vector.broadcast %cst_72 : f32 to vector<16x1xf32>
    %104 = arith.divf %102, %103 : vector<16x1xf32>
    %105 = vector.broadcast %97 : vector<16x1xf32> to vector<16x256xf32>
    %106 = arith.subf %93, %105 : vector<16x256xf32>
    %cst_73 = arith.constant 9.99999974E-6 : f32
    %107 = vector.broadcast %cst_73 : f32 to vector<16x1xf32>
    %108 = arith.addf %104, %107 : vector<16x1xf32>
    %109 = math.rsqrt %108 : vector<16x1xf32>
    %110 = vector.broadcast %109 : vector<16x1xf32> to vector<16x256xf32>
    %111 = arith.mulf %106, %110 : vector<16x256xf32>
    %cst_74 = arith.constant 0.000000e+00 : f32
    %112 = vector.broadcast %cst_74 : f32 to vector<16x256xf32>
    %113 = arith.maximumf %111, %112 : vector<16x256xf32>
    %c0_75 = arith.constant 0 : index
    %c0_76 = arith.constant 0 : index
    %114 = vector.load %arg6[%c0_75, %c0_76] : memref<16x512xf32, #tpu.memory_space<vmem>>, vector<16x256xf32>
    tpu.vector_store %arg6[%c0_75, %c0_76], %113 {strides = array<i32>} : memref<16x512xf32, #tpu.memory_space<vmem>>, vector<16x256xf32>,
    %c0_77 = arith.constant 0 : index
    %c256_78 = arith.constant 256 : index
    %115 = vector.load %arg6[%c0_77, %c256_78] : memref<16x512xf32, #tpu.memory_space<vmem>>, vector<16x256xf32>
    tpu.vector_store %arg6[%c0_77, %c256_78], %113 {strides = array<i32>} : memref<16x512xf32, #tpu.memory_space<vmem>>, vector<16x256xf32>,
    %cst_79 = arith.constant 0.000000e+00 : f32
    %116 = vector.broadcast %cst_79 : f32 to vector<16x256xf32>
    %c0_80 = arith.constant 0 : index
    %c239_81 = arith.constant 239 : index
    %117 = vector.load %arg6[%c0_80, %c239_81] : memref<16x512xf32, #tpu.memory_space<vmem>>, vector<16x256xf32>
    %c0_82 = arith.constant 0 : index
    %c0_83 = arith.constant 0 : index
    %c0_84 = arith.constant 0 : index
    %118 = vector.load %arg4[%c0_82, %c0_83, %c0_84] : memref<9x1x256xf32, #tpu.memory_space<vmem>>, vector<1x1x256xf32>
    %119 = vector.shape_cast %118 : vector<1x1x256xf32> to vector<1x256xf32>
    %120 = vector.broadcast %119 : vector<1x256xf32> to vector<16x256xf32>
    %121 = arith.mulf %117, %120 : vector<16x256xf32>
    %c9 = arith.constant 9 : index
    %c0_85 = arith.constant 0 : index
    %c0_86 = arith.constant 0 : index
    %122 = vector.load %arg2[%c9, %c0_85, %c0_86] : memref<36x16x16xbf16, #tpu.memory_space<vmem>>, vector<1x16x16xbf16>
    %123 = vector.shape_cast %122 : vector<1x16x16xbf16> to vector<16x16xbf16>
    %124 = arith.truncf %121 : vector<16x256xf32> to vector<16x256xbf16>
    %cst_87 = arith.constant dense<0.000000e+00> : vector<16x256xf32>
    %125 = tpu.matmul %123, %124, %cst_87 {dimension_numbers = #tpu.dot_dimension_numbers<[1], [0], [0], [1], [0, 0, 1, 1], [], []>} : vector<16x16xbf16>, vector<16x256xbf16>, vector<16x256xf32> -> vector<16x256xf32>
    %126 = arith.addf %116, %125 : vector<16x256xf32>
    %c0_88 = arith.constant 0 : index
    %c240_89 = arith.constant 240 : index
    %127 = vector.load %arg6[%c0_88, %c240_89] : memref<16x512xf32, #tpu.memory_space<vmem>>, vector<16x256xf32>
    %c1_90 = arith.constant 1 : index
    %c0_91 = arith.constant 0 : index
    %c0_92 = arith.constant 0 : index
    %128 = vector.load %arg4[%c1_90, %c0_91, %c0_92] : memref<9x1x256xf32, #tpu.memory_space<vmem>>, vector<1x1x256xf32>
    %129 = vector.shape_cast %128 : vector<1x1x256xf32> to vector<1x256xf32>
    %130 = vector.broadcast %129 : vector<1x256xf32> to vector<16x256xf32>
    %131 = arith.mulf %127, %130 : vector<16x256xf32>
    %c10 = arith.constant 10 : index
    %c0_93 = arith.constant 0 : index
    %c0_94 = arith.constant 0 : index
    %132 = vector.load %arg2[%c10, %c0_93, %c0_94] : memref<36x16x16xbf16, #tpu.memory_space<vmem>>, vector<1x16x16xbf16>
    %133 = vector.shape_cast %132 : vector<1x16x16xbf16> to vector<16x16xbf16>
    %134 = arith.truncf %131 : vector<16x256xf32> to vector<16x256xbf16>
    %cst_95 = arith.constant dense<0.000000e+00> : vector<16x256xf32>
    %135 = tpu.matmul %133, %134, %cst_95 {dimension_numbers = #tpu.dot_dimension_numbers<[1], [0], [0], [1], [0, 0, 1, 1], [], []>} : vector<16x16xbf16>, vector<16x256xbf16>, vector<16x256xf32> -> vector<16x256xf32>
    %136 = arith.addf %126, %135 : vector<16x256xf32>
    %c0_96 = arith.constant 0 : index
    %c241_97 = arith.constant 241 : index
    %137 = vector.load %arg6[%c0_96, %c241_97] : memref<16x512xf32, #tpu.memory_space<vmem>>, vector<16x256xf32>
    %c2_98 = arith.constant 2 : index
    %c0_99 = arith.constant 0 : index
    %c0_100 = arith.constant 0 : index
    %138 = vector.load %arg4[%c2_98, %c0_99, %c0_100] : memref<9x1x256xf32, #tpu.memory_space<vmem>>, vector<1x1x256xf32>
    %139 = vector.shape_cast %138 : vector<1x1x256xf32> to vector<1x256xf32>
    %140 = vector.broadcast %139 : vector<1x256xf32> to vector<16x256xf32>
    %141 = arith.mulf %137, %140 : vector<16x256xf32>
    %c11 = arith.constant 11 : index
    %c0_101 = arith.constant 0 : index
    %c0_102 = arith.constant 0 : index
    %142 = vector.load %arg2[%c11, %c0_101, %c0_102] : memref<36x16x16xbf16, #tpu.memory_space<vmem>>, vector<1x16x16xbf16>
    %143 = vector.shape_cast %142 : vector<1x16x16xbf16> to vector<16x16xbf16>
    %144 = arith.truncf %141 : vector<16x256xf32> to vector<16x256xbf16>
    %cst_103 = arith.constant dense<0.000000e+00> : vector<16x256xf32>
    %145 = tpu.matmul %143, %144, %cst_103 {dimension_numbers = #tpu.dot_dimension_numbers<[1], [0], [0], [1], [0, 0, 1, 1], [], []>} : vector<16x16xbf16>, vector<16x256xbf16>, vector<16x256xf32> -> vector<16x256xf32>
    %146 = arith.addf %136, %145 : vector<16x256xf32>
    %c0_104 = arith.constant 0 : index
    %c255_105 = arith.constant 255 : index
    %147 = vector.load %arg6[%c0_104, %c255_105] : memref<16x512xf32, #tpu.memory_space<vmem>>, vector<16x256xf32>
    %c3_106 = arith.constant 3 : index
    %c0_107 = arith.constant 0 : index
    %c0_108 = arith.constant 0 : index
    %148 = vector.load %arg4[%c3_106, %c0_107, %c0_108] : memref<9x1x256xf32, #tpu.memory_space<vmem>>, vector<1x1x256xf32>
    %149 = vector.shape_cast %148 : vector<1x1x256xf32> to vector<1x256xf32>
    %150 = vector.broadcast %149 : vector<1x256xf32> to vector<16x256xf32>
    %151 = arith.mulf %147, %150 : vector<16x256xf32>
    %c12 = arith.constant 12 : index
    %c0_109 = arith.constant 0 : index
    %c0_110 = arith.constant 0 : index
    %152 = vector.load %arg2[%c12, %c0_109, %c0_110] : memref<36x16x16xbf16, #tpu.memory_space<vmem>>, vector<1x16x16xbf16>
    %153 = vector.shape_cast %152 : vector<1x16x16xbf16> to vector<16x16xbf16>
    %154 = arith.truncf %151 : vector<16x256xf32> to vector<16x256xbf16>
    %cst_111 = arith.constant dense<0.000000e+00> : vector<16x256xf32>
    %155 = tpu.matmul %153, %154, %cst_111 {dimension_numbers = #tpu.dot_dimension_numbers<[1], [0], [0], [1], [0, 0, 1, 1], [], []>} : vector<16x16xbf16>, vector<16x256xbf16>, vector<16x256xf32> -> vector<16x256xf32>
    %156 = arith.addf %146, %155 : vector<16x256xf32>
    %c13 = arith.constant 13 : index
    %c0_112 = arith.constant 0 : index
    %c0_113 = arith.constant 0 : index
    %157 = vector.load %arg2[%c13, %c0_112, %c0_113] : memref<36x16x16xbf16, #tpu.memory_space<vmem>>, vector<1x16x16xbf16>
    %158 = vector.shape_cast %157 : vector<1x16x16xbf16> to vector<16x16xbf16>
    %159 = arith.truncf %113 : vector<16x256xf32> to vector<16x256xbf16>
    %cst_114 = arith.constant dense<0.000000e+00> : vector<16x256xf32>
    %160 = tpu.matmul %158, %159, %cst_114 {dimension_numbers = #tpu.dot_dimension_numbers<[1], [0], [0], [1], [0, 0, 1, 1], [], []>} : vector<16x16xbf16>, vector<16x256xbf16>, vector<16x256xf32> -> vector<16x256xf32>
    %161 = arith.addf %156, %160 : vector<16x256xf32>
    %c0_115 = arith.constant 0 : index
    %c1_116 = arith.constant 1 : index
    %162 = vector.load %arg6[%c0_115, %c1_116] : memref<16x512xf32, #tpu.memory_space<vmem>>, vector<16x256xf32>
    %c5_117 = arith.constant 5 : index
    %c0_118 = arith.constant 0 : index
    %c0_119 = arith.constant 0 : index
    %163 = vector.load %arg4[%c5_117, %c0_118, %c0_119] : memref<9x1x256xf32, #tpu.memory_space<vmem>>, vector<1x1x256xf32>
    %164 = vector.shape_cast %163 : vector<1x1x256xf32> to vector<1x256xf32>
    %165 = vector.broadcast %164 : vector<1x256xf32> to vector<16x256xf32>
    %166 = arith.mulf %162, %165 : vector<16x256xf32>
    %c14 = arith.constant 14 : index
    %c0_120 = arith.constant 0 : index
    %c0_121 = arith.constant 0 : index
    %167 = vector.load %arg2[%c14, %c0_120, %c0_121] : memref<36x16x16xbf16, #tpu.memory_space<vmem>>, vector<1x16x16xbf16>
    %168 = vector.shape_cast %167 : vector<1x16x16xbf16> to vector<16x16xbf16>
    %169 = arith.truncf %166 : vector<16x256xf32> to vector<16x256xbf16>
    %cst_122 = arith.constant dense<0.000000e+00> : vector<16x256xf32>
    %170 = tpu.matmul %168, %169, %cst_122 {dimension_numbers = #tpu.dot_dimension_numbers<[1], [0], [0], [1], [0, 0, 1, 1], [], []>} : vector<16x16xbf16>, vector<16x256xbf16>, vector<16x256xf32> -> vector<16x256xf32>
    %171 = arith.addf %161, %170 : vector<16x256xf32>
    %c0_123 = arith.constant 0 : index
    %c15_124 = arith.constant 15 : index
    %172 = vector.load %arg6[%c0_123, %c15_124] : memref<16x512xf32, #tpu.memory_space<vmem>>, vector<16x256xf32>
    %c6_125 = arith.constant 6 : index
    %c0_126 = arith.constant 0 : index
    %c0_127 = arith.constant 0 : index
    %173 = vector.load %arg4[%c6_125, %c0_126, %c0_127] : memref<9x1x256xf32, #tpu.memory_space<vmem>>, vector<1x1x256xf32>
    %174 = vector.shape_cast %173 : vector<1x1x256xf32> to vector<1x256xf32>
    %175 = vector.broadcast %174 : vector<1x256xf32> to vector<16x256xf32>
    %176 = arith.mulf %172, %175 : vector<16x256xf32>
    %c15_128 = arith.constant 15 : index
    %c0_129 = arith.constant 0 : index
    %c0_130 = arith.constant 0 : index
    %177 = vector.load %arg2[%c15_128, %c0_129, %c0_130] : memref<36x16x16xbf16, #tpu.memory_space<vmem>>, vector<1x16x16xbf16>
    %178 = vector.shape_cast %177 : vector<1x16x16xbf16> to vector<16x16xbf16>
    %179 = arith.truncf %176 : vector<16x256xf32> to vector<16x256xbf16>
    %cst_131 = arith.constant dense<0.000000e+00> : vector<16x256xf32>
    %180 = tpu.matmul %178, %179, %cst_131 {dimension_numbers = #tpu.dot_dimension_numbers<[1], [0], [0], [1], [0, 0, 1, 1], [], []>} : vector<16x16xbf16>, vector<16x256xbf16>, vector<16x256xf32> -> vector<16x256xf32>
    %181 = arith.addf %171, %180 : vector<16x256xf32>
    %c0_132 = arith.constant 0 : index
    %c16_133 = arith.constant 16 : index
    %182 = vector.load %arg6[%c0_132, %c16_133] : memref<16x512xf32, #tpu.memory_space<vmem>>, vector<16x256xf32>
    %c7_134 = arith.constant 7 : index
    %c0_135 = arith.constant 0 : index
    %c0_136 = arith.constant 0 : index
    %183 = vector.load %arg4[%c7_134, %c0_135, %c0_136] : memref<9x1x256xf32, #tpu.memory_space<vmem>>, vector<1x1x256xf32>
    %184 = vector.shape_cast %183 : vector<1x1x256xf32> to vector<1x256xf32>
    %185 = vector.broadcast %184 : vector<1x256xf32> to vector<16x256xf32>
    %186 = arith.mulf %182, %185 : vector<16x256xf32>
    %c16_137 = arith.constant 16 : index
    %c0_138 = arith.constant 0 : index
    %c0_139 = arith.constant 0 : index
    %187 = vector.load %arg2[%c16_137, %c0_138, %c0_139] : memref<36x16x16xbf16, #tpu.memory_space<vmem>>, vector<1x16x16xbf16>
    %188 = vector.shape_cast %187 : vector<1x16x16xbf16> to vector<16x16xbf16>
    %189 = arith.truncf %186 : vector<16x256xf32> to vector<16x256xbf16>
    %cst_140 = arith.constant dense<0.000000e+00> : vector<16x256xf32>
    %190 = tpu.matmul %188, %189, %cst_140 {dimension_numbers = #tpu.dot_dimension_numbers<[1], [0], [0], [1], [0, 0, 1, 1], [], []>} : vector<16x16xbf16>, vector<16x256xbf16>, vector<16x256xf32> -> vector<16x256xf32>
    %191 = arith.addf %181, %190 : vector<16x256xf32>
    %c0_141 = arith.constant 0 : index
    %c17_142 = arith.constant 17 : index
    %192 = vector.load %arg6[%c0_141, %c17_142] : memref<16x512xf32, #tpu.memory_space<vmem>>, vector<16x256xf32>
    %c8_143 = arith.constant 8 : index
    %c0_144 = arith.constant 0 : index
    %c0_145 = arith.constant 0 : index
    %193 = vector.load %arg4[%c8_143, %c0_144, %c0_145] : memref<9x1x256xf32, #tpu.memory_space<vmem>>, vector<1x1x256xf32>
    %194 = vector.shape_cast %193 : vector<1x1x256xf32> to vector<1x256xf32>
    %195 = vector.broadcast %194 : vector<1x256xf32> to vector<16x256xf32>
    %196 = arith.mulf %192, %195 : vector<16x256xf32>
    %c17_146 = arith.constant 17 : index
    %c0_147 = arith.constant 0 : index
    %c0_148 = arith.constant 0 : index
    %197 = vector.load %arg2[%c17_146, %c0_147, %c0_148] : memref<36x16x16xbf16, #tpu.memory_space<vmem>>, vector<1x16x16xbf16>
    %198 = vector.shape_cast %197 : vector<1x16x16xbf16> to vector<16x16xbf16>
    %199 = arith.truncf %196 : vector<16x256xf32> to vector<16x256xbf16>
    %cst_149 = arith.constant dense<0.000000e+00> : vector<16x256xf32>
    %200 = tpu.matmul %198, %199, %cst_149 {dimension_numbers = #tpu.dot_dimension_numbers<[1], [0], [0], [1], [0, 0, 1, 1], [], []>} : vector<16x16xbf16>, vector<16x256xbf16>, vector<16x256xf32> -> vector<16x256xf32>
    %201 = arith.addf %191, %200 : vector<16x256xf32>
    %c1_150 = arith.constant 1 : index
    %c0_151 = arith.constant 0 : index
    %c0_152 = arith.constant 0 : index
    %202 = vector.load %arg3[%c1_150, %c0_151, %c0_152] : memref<4x16x1xf32, #tpu.memory_space<vmem>>, vector<1x16x1xf32>
    %203 = vector.shape_cast %202 : vector<1x16x1xf32> to vector<16x1xf32>
    %204 = vector.broadcast %203 : vector<16x1xf32> to vector<16x256xf32>
    %205 = arith.addf %201, %204 : vector<16x256xf32>
    %cst_153 = arith.constant dense<0.000000e+00> : vector<16xf32>
    %206 = vector.multi_reduction <add>, %205, %cst_153 [1] : vector<16x256xf32> to vector<16xf32>
    %207 = vector.shape_cast %206 : vector<16xf32> to vector<16x1xf32>
    %cst_154 = arith.constant 2.560000e+02 : f32
    %208 = vector.broadcast %cst_154 : f32 to vector<16x1xf32>
    %209 = arith.divf %207, %208 : vector<16x1xf32>
    %210 = vector.broadcast %209 : vector<16x1xf32> to vector<16x256xf32>
    %211 = arith.subf %205, %210 : vector<16x256xf32>
    %212 = arith.mulf %211, %211 : vector<16x256xf32>
    %cst_155 = arith.constant dense<0.000000e+00> : vector<16xf32>
    %213 = vector.multi_reduction <add>, %212, %cst_155 [1] : vector<16x256xf32> to vector<16xf32>
    %214 = vector.shape_cast %213 : vector<16xf32> to vector<16x1xf32>
    %cst_156 = arith.constant 2.560000e+02 : f32
    %215 = vector.broadcast %cst_156 : f32 to vector<16x1xf32>
    %216 = arith.divf %214, %215 : vector<16x1xf32>
    %217 = vector.broadcast %209 : vector<16x1xf32> to vector<16x256xf32>
    %218 = arith.subf %205, %217 : vector<16x256xf32>
    %cst_157 = arith.constant 9.99999974E-6 : f32
    %219 = vector.broadcast %cst_157 : f32 to vector<16x1xf32>
    %220 = arith.addf %216, %219 : vector<16x1xf32>
    %221 = math.rsqrt %220 : vector<16x1xf32>
    %222 = vector.broadcast %221 : vector<16x1xf32> to vector<16x256xf32>
    %223 = arith.mulf %218, %222 : vector<16x256xf32>
    %224 = arith.addf %223, %1 : vector<16x256xf32>
    %c0_158 = arith.constant 0 : index
    %c0_159 = arith.constant 0 : index
    %225 = vector.load %arg6[%c0_158, %c0_159] : memref<16x512xf32, #tpu.memory_space<vmem>>, vector<16x256xf32>
    tpu.vector_store %arg6[%c0_158, %c0_159], %224 {strides = array<i32>} : memref<16x512xf32, #tpu.memory_space<vmem>>, vector<16x256xf32>,
    %c0_160 = arith.constant 0 : index
    %c256_161 = arith.constant 256 : index
    %226 = vector.load %arg6[%c0_160, %c256_161] : memref<16x512xf32, #tpu.memory_space<vmem>>, vector<16x256xf32>
    tpu.vector_store %arg6[%c0_160, %c256_161], %224 {strides = array<i32>} : memref<16x512xf32, #tpu.memory_space<vmem>>, vector<16x256xf32>,
    %cst_162 = arith.constant 0.000000e+00 : f32
    %227 = vector.broadcast %cst_162 : f32 to vector<16x256xf32>
    %c0_163 = arith.constant 0 : index
    %c239_164 = arith.constant 239 : index
    %228 = vector.load %arg6[%c0_163, %c239_164] : memref<16x512xf32, #tpu.memory_space<vmem>>, vector<16x256xf32>
    %c0_165 = arith.constant 0 : index
    %c0_166 = arith.constant 0 : index
    %c0_167 = arith.constant 0 : index
    %229 = vector.load %arg4[%c0_165, %c0_166, %c0_167] : memref<9x1x256xf32, #tpu.memory_space<vmem>>, vector<1x1x256xf32>
    %230 = vector.shape_cast %229 : vector<1x1x256xf32> to vector<1x256xf32>
    %231 = vector.broadcast %230 : vector<1x256xf32> to vector<16x256xf32>
    %232 = arith.mulf %228, %231 : vector<16x256xf32>
    %c18 = arith.constant 18 : index
    %c0_168 = arith.constant 0 : index
    %c0_169 = arith.constant 0 : index
    %233 = vector.load %arg2[%c18, %c0_168, %c0_169] : memref<36x16x16xbf16, #tpu.memory_space<vmem>>, vector<1x16x16xbf16>
    %234 = vector.shape_cast %233 : vector<1x16x16xbf16> to vector<16x16xbf16>
    %235 = arith.truncf %232 : vector<16x256xf32> to vector<16x256xbf16>
    %cst_170 = arith.constant dense<0.000000e+00> : vector<16x256xf32>
    %236 = tpu.matmul %234, %235, %cst_170 {dimension_numbers = #tpu.dot_dimension_numbers<[1], [0], [0], [1], [0, 0, 1, 1], [], []>} : vector<16x16xbf16>, vector<16x256xbf16>, vector<16x256xf32> -> vector<16x256xf32>
    %237 = arith.addf %227, %236 : vector<16x256xf32>
    %c0_171 = arith.constant 0 : index
    %c240_172 = arith.constant 240 : index
    %238 = vector.load %arg6[%c0_171, %c240_172] : memref<16x512xf32, #tpu.memory_space<vmem>>, vector<16x256xf32>
    %c1_173 = arith.constant 1 : index
    %c0_174 = arith.constant 0 : index
    %c0_175 = arith.constant 0 : index
    %239 = vector.load %arg4[%c1_173, %c0_174, %c0_175] : memref<9x1x256xf32, #tpu.memory_space<vmem>>, vector<1x1x256xf32>
    %240 = vector.shape_cast %239 : vector<1x1x256xf32> to vector<1x256xf32>
    %241 = vector.broadcast %240 : vector<1x256xf32> to vector<16x256xf32>
    %242 = arith.mulf %238, %241 : vector<16x256xf32>
    %c19 = arith.constant 19 : index
    %c0_176 = arith.constant 0 : index
    %c0_177 = arith.constant 0 : index
    %243 = vector.load %arg2[%c19, %c0_176, %c0_177] : memref<36x16x16xbf16, #tpu.memory_space<vmem>>, vector<1x16x16xbf16>
    %244 = vector.shape_cast %243 : vector<1x16x16xbf16> to vector<16x16xbf16>
    %245 = arith.truncf %242 : vector<16x256xf32> to vector<16x256xbf16>
    %cst_178 = arith.constant dense<0.000000e+00> : vector<16x256xf32>
    %246 = tpu.matmul %244, %245, %cst_178 {dimension_numbers = #tpu.dot_dimension_numbers<[1], [0], [0], [1], [0, 0, 1, 1], [], []>} : vector<16x16xbf16>, vector<16x256xbf16>, vector<16x256xf32> -> vector<16x256xf32>
    %247 = arith.addf %237, %246 : vector<16x256xf32>
    %c0_179 = arith.constant 0 : index
    %c241_180 = arith.constant 241 : index
    %248 = vector.load %arg6[%c0_179, %c241_180] : memref<16x512xf32, #tpu.memory_space<vmem>>, vector<16x256xf32>
    %c2_181 = arith.constant 2 : index
    %c0_182 = arith.constant 0 : index
    %c0_183 = arith.constant 0 : index
    %249 = vector.load %arg4[%c2_181, %c0_182, %c0_183] : memref<9x1x256xf32, #tpu.memory_space<vmem>>, vector<1x1x256xf32>
    %250 = vector.shape_cast %249 : vector<1x1x256xf32> to vector<1x256xf32>
    %251 = vector.broadcast %250 : vector<1x256xf32> to vector<16x256xf32>
    %252 = arith.mulf %248, %251 : vector<16x256xf32>
    %c20 = arith.constant 20 : index
    %c0_184 = arith.constant 0 : index
    %c0_185 = arith.constant 0 : index
    %253 = vector.load %arg2[%c20, %c0_184, %c0_185] : memref<36x16x16xbf16, #tpu.memory_space<vmem>>, vector<1x16x16xbf16>
    %254 = vector.shape_cast %253 : vector<1x16x16xbf16> to vector<16x16xbf16>
    %255 = arith.truncf %252 : vector<16x256xf32> to vector<16x256xbf16>
    %cst_186 = arith.constant dense<0.000000e+00> : vector<16x256xf32>
    %256 = tpu.matmul %254, %255, %cst_186 {dimension_numbers = #tpu.dot_dimension_numbers<[1], [0], [0], [1], [0, 0, 1, 1], [], []>} : vector<16x16xbf16>, vector<16x256xbf16>, vector<16x256xf32> -> vector<16x256xf32>
    %257 = arith.addf %247, %256 : vector<16x256xf32>
    %c0_187 = arith.constant 0 : index
    %c255_188 = arith.constant 255 : index
    %258 = vector.load %arg6[%c0_187, %c255_188] : memref<16x512xf32, #tpu.memory_space<vmem>>, vector<16x256xf32>
    %c3_189 = arith.constant 3 : index
    %c0_190 = arith.constant 0 : index
    %c0_191 = arith.constant 0 : index
    %259 = vector.load %arg4[%c3_189, %c0_190, %c0_191] : memref<9x1x256xf32, #tpu.memory_space<vmem>>, vector<1x1x256xf32>
    %260 = vector.shape_cast %259 : vector<1x1x256xf32> to vector<1x256xf32>
    %261 = vector.broadcast %260 : vector<1x256xf32> to vector<16x256xf32>
    %262 = arith.mulf %258, %261 : vector<16x256xf32>
    %c21 = arith.constant 21 : index
    %c0_192 = arith.constant 0 : index
    %c0_193 = arith.constant 0 : index
    %263 = vector.load %arg2[%c21, %c0_192, %c0_193] : memref<36x16x16xbf16, #tpu.memory_space<vmem>>, vector<1x16x16xbf16>
    %264 = vector.shape_cast %263 : vector<1x16x16xbf16> to vector<16x16xbf16>
    %265 = arith.truncf %262 : vector<16x256xf32> to vector<16x256xbf16>
    %cst_194 = arith.constant dense<0.000000e+00> : vector<16x256xf32>
    %266 = tpu.matmul %264, %265, %cst_194 {dimension_numbers = #tpu.dot_dimension_numbers<[1], [0], [0], [1], [0, 0, 1, 1], [], []>} : vector<16x16xbf16>, vector<16x256xbf16>, vector<16x256xf32> -> vector<16x256xf32>
    %267 = arith.addf %257, %266 : vector<16x256xf32>
    %c22 = arith.constant 22 : index
    %c0_195 = arith.constant 0 : index
    %c0_196 = arith.constant 0 : index
    %268 = vector.load %arg2[%c22, %c0_195, %c0_196] : memref<36x16x16xbf16, #tpu.memory_space<vmem>>, vector<1x16x16xbf16>
    %269 = vector.shape_cast %268 : vector<1x16x16xbf16> to vector<16x16xbf16>
    %270 = arith.truncf %224 : vector<16x256xf32> to vector<16x256xbf16>
    %cst_197 = arith.constant dense<0.000000e+00> : vector<16x256xf32>
    %271 = tpu.matmul %269, %270, %cst_197 {dimension_numbers = #tpu.dot_dimension_numbers<[1], [0], [0], [1], [0, 0, 1, 1], [], []>} : vector<16x16xbf16>, vector<16x256xbf16>, vector<16x256xf32> -> vector<16x256xf32>
    %272 = arith.addf %267, %271 : vector<16x256xf32>
    %c0_198 = arith.constant 0 : index
    %c1_199 = arith.constant 1 : index
    %273 = vector.load %arg6[%c0_198, %c1_199] : memref<16x512xf32, #tpu.memory_space<vmem>>, vector<16x256xf32>
    %c5_200 = arith.constant 5 : index
    %c0_201 = arith.constant 0 : index
    %c0_202 = arith.constant 0 : index
    %274 = vector.load %arg4[%c5_200, %c0_201, %c0_202] : memref<9x1x256xf32, #tpu.memory_space<vmem>>, vector<1x1x256xf32>
    %275 = vector.shape_cast %274 : vector<1x1x256xf32> to vector<1x256xf32>
    %276 = vector.broadcast %275 : vector<1x256xf32> to vector<16x256xf32>
    %277 = arith.mulf %273, %276 : vector<16x256xf32>
    %c23 = arith.constant 23 : index
    %c0_203 = arith.constant 0 : index
    %c0_204 = arith.constant 0 : index
    %278 = vector.load %arg2[%c23, %c0_203, %c0_204] : memref<36x16x16xbf16, #tpu.memory_space<vmem>>, vector<1x16x16xbf16>
    %279 = vector.shape_cast %278 : vector<1x16x16xbf16> to vector<16x16xbf16>
    %280 = arith.truncf %277 : vector<16x256xf32> to vector<16x256xbf16>
    %cst_205 = arith.constant dense<0.000000e+00> : vector<16x256xf32>
    %281 = tpu.matmul %279, %280, %cst_205 {dimension_numbers = #tpu.dot_dimension_numbers<[1], [0], [0], [1], [0, 0, 1, 1], [], []>} : vector<16x16xbf16>, vector<16x256xbf16>, vector<16x256xf32> -> vector<16x256xf32>
    %282 = arith.addf %272, %281 : vector<16x256xf32>
    %c0_206 = arith.constant 0 : index
    %c15_207 = arith.constant 15 : index
    %283 = vector.load %arg6[%c0_206, %c15_207] : memref<16x512xf32, #tpu.memory_space<vmem>>, vector<16x256xf32>
    %c6_208 = arith.constant 6 : index
    %c0_209 = arith.constant 0 : index
    %c0_210 = arith.constant 0 : index
    %284 = vector.load %arg4[%c6_208, %c0_209, %c0_210] : memref<9x1x256xf32, #tpu.memory_space<vmem>>, vector<1x1x256xf32>
    %285 = vector.shape_cast %284 : vector<1x1x256xf32> to vector<1x256xf32>
    %286 = vector.broadcast %285 : vector<1x256xf32> to vector<16x256xf32>
    %287 = arith.mulf %283, %286 : vector<16x256xf32>
    %c24 = arith.constant 24 : index
    %c0_211 = arith.constant 0 : index
    %c0_212 = arith.constant 0 : index
    %288 = vector.load %arg2[%c24, %c0_211, %c0_212] : memref<36x16x16xbf16, #tpu.memory_space<vmem>>, vector<1x16x16xbf16>
    %289 = vector.shape_cast %288 : vector<1x16x16xbf16> to vector<16x16xbf16>
    %290 = arith.truncf %287 : vector<16x256xf32> to vector<16x256xbf16>
    %cst_213 = arith.constant dense<0.000000e+00> : vector<16x256xf32>
    %291 = tpu.matmul %289, %290, %cst_213 {dimension_numbers = #tpu.dot_dimension_numbers<[1], [0], [0], [1], [0, 0, 1, 1], [], []>} : vector<16x16xbf16>, vector<16x256xbf16>, vector<16x256xf32> -> vector<16x256xf32>
    %292 = arith.addf %282, %291 : vector<16x256xf32>
    %c0_214 = arith.constant 0 : index
    %c16_215 = arith.constant 16 : index
    %293 = vector.load %arg6[%c0_214, %c16_215] : memref<16x512xf32, #tpu.memory_space<vmem>>, vector<16x256xf32>
    %c7_216 = arith.constant 7 : index
    %c0_217 = arith.constant 0 : index
    %c0_218 = arith.constant 0 : index
    %294 = vector.load %arg4[%c7_216, %c0_217, %c0_218] : memref<9x1x256xf32, #tpu.memory_space<vmem>>, vector<1x1x256xf32>
    %295 = vector.shape_cast %294 : vector<1x1x256xf32> to vector<1x256xf32>
    %296 = vector.broadcast %295 : vector<1x256xf32> to vector<16x256xf32>
    %297 = arith.mulf %293, %296 : vector<16x256xf32>
    %c25 = arith.constant 25 : index
    %c0_219 = arith.constant 0 : index
    %c0_220 = arith.constant 0 : index
    %298 = vector.load %arg2[%c25, %c0_219, %c0_220] : memref<36x16x16xbf16, #tpu.memory_space<vmem>>, vector<1x16x16xbf16>
    %299 = vector.shape_cast %298 : vector<1x16x16xbf16> to vector<16x16xbf16>
    %300 = arith.truncf %297 : vector<16x256xf32> to vector<16x256xbf16>
    %cst_221 = arith.constant dense<0.000000e+00> : vector<16x256xf32>
    %301 = tpu.matmul %299, %300, %cst_221 {dimension_numbers = #tpu.dot_dimension_numbers<[1], [0], [0], [1], [0, 0, 1, 1], [], []>} : vector<16x16xbf16>, vector<16x256xbf16>, vector<16x256xf32> -> vector<16x256xf32>
    %302 = arith.addf %292, %301 : vector<16x256xf32>
    %c0_222 = arith.constant 0 : index
    %c17_223 = arith.constant 17 : index
    %303 = vector.load %arg6[%c0_222, %c17_223] : memref<16x512xf32, #tpu.memory_space<vmem>>, vector<16x256xf32>
    %c8_224 = arith.constant 8 : index
    %c0_225 = arith.constant 0 : index
    %c0_226 = arith.constant 0 : index
    %304 = vector.load %arg4[%c8_224, %c0_225, %c0_226] : memref<9x1x256xf32, #tpu.memory_space<vmem>>, vector<1x1x256xf32>
    %305 = vector.shape_cast %304 : vector<1x1x256xf32> to vector<1x256xf32>
    %306 = vector.broadcast %305 : vector<1x256xf32> to vector<16x256xf32>
    %307 = arith.mulf %303, %306 : vector<16x256xf32>
    %c26 = arith.constant 26 : index
    %c0_227 = arith.constant 0 : index
    %c0_228 = arith.constant 0 : index
    %308 = vector.load %arg2[%c26, %c0_227, %c0_228] : memref<36x16x16xbf16, #tpu.memory_space<vmem>>, vector<1x16x16xbf16>
    %309 = vector.shape_cast %308 : vector<1x16x16xbf16> to vector<16x16xbf16>
    %310 = arith.truncf %307 : vector<16x256xf32> to vector<16x256xbf16>
    %cst_229 = arith.constant dense<0.000000e+00> : vector<16x256xf32>
    %311 = tpu.matmul %309, %310, %cst_229 {dimension_numbers = #tpu.dot_dimension_numbers<[1], [0], [0], [1], [0, 0, 1, 1], [], []>} : vector<16x16xbf16>, vector<16x256xbf16>, vector<16x256xf32> -> vector<16x256xf32>
    %312 = arith.addf %302, %311 : vector<16x256xf32>
    %c2_230 = arith.constant 2 : index
    %c0_231 = arith.constant 0 : index
    %c0_232 = arith.constant 0 : index
    %313 = vector.load %arg3[%c2_230, %c0_231, %c0_232] : memref<4x16x1xf32, #tpu.memory_space<vmem>>, vector<1x16x1xf32>
    %314 = vector.shape_cast %313 : vector<1x16x1xf32> to vector<16x1xf32>
    %315 = vector.broadcast %314 : vector<16x1xf32> to vector<16x256xf32>
    %316 = arith.addf %312, %315 : vector<16x256xf32>
    %cst_233 = arith.constant dense<0.000000e+00> : vector<16xf32>
    %317 = vector.multi_reduction <add>, %316, %cst_233 [1] : vector<16x256xf32> to vector<16xf32>
    %318 = vector.shape_cast %317 : vector<16xf32> to vector<16x1xf32>
    %cst_234 = arith.constant 2.560000e+02 : f32
    %319 = vector.broadcast %cst_234 : f32 to vector<16x1xf32>
    %320 = arith.divf %318, %319 : vector<16x1xf32>
    %321 = vector.broadcast %320 : vector<16x1xf32> to vector<16x256xf32>
    %322 = arith.subf %316, %321 : vector<16x256xf32>
    %323 = arith.mulf %322, %322 : vector<16x256xf32>
    %cst_235 = arith.constant dense<0.000000e+00> : vector<16xf32>
    %324 = vector.multi_reduction <add>, %323, %cst_235 [1] : vector<16x256xf32> to vector<16xf32>
    %325 = vector.shape_cast %324 : vector<16xf32> to vector<16x1xf32>
    %cst_236 = arith.constant 2.560000e+02 : f32
    %326 = vector.broadcast %cst_236 : f32 to vector<16x1xf32>
    %327 = arith.divf %325, %326 : vector<16x1xf32>
    %328 = vector.broadcast %320 : vector<16x1xf32> to vector<16x256xf32>
    %329 = arith.subf %316, %328 : vector<16x256xf32>
    %cst_237 = arith.constant 9.99999974E-6 : f32
    %330 = vector.broadcast %cst_237 : f32 to vector<16x1xf32>
    %331 = arith.addf %327, %330 : vector<16x1xf32>
    %332 = math.rsqrt %331 : vector<16x1xf32>
    %333 = vector.broadcast %332 : vector<16x1xf32> to vector<16x256xf32>
    %334 = arith.mulf %329, %333 : vector<16x256xf32>
    %cst_238 = arith.constant 0.000000e+00 : f32
    %335 = vector.broadcast %cst_238 : f32 to vector<16x256xf32>
    %336 = arith.maximumf %334, %335 : vector<16x256xf32>
    %c0_239 = arith.constant 0 : index
    %c0_240 = arith.constant 0 : index
    %337 = vector.load %arg6[%c0_239, %c0_240] : memref<16x512xf32, #tpu.memory_space<vmem>>, vector<16x256xf32>
    tpu.vector_store %arg6[%c0_239, %c0_240], %336 {strides = array<i32>} : memref<16x512xf32, #tpu.memory_space<vmem>>, vector<16x256xf32>,
    %c0_241 = arith.constant 0 : index
    %c256_242 = arith.constant 256 : index
    %338 = vector.load %arg6[%c0_241, %c256_242] : memref<16x512xf32, #tpu.memory_space<vmem>>, vector<16x256xf32>
    tpu.vector_store %arg6[%c0_241, %c256_242], %336 {strides = array<i32>} : memref<16x512xf32, #tpu.memory_space<vmem>>, vector<16x256xf32>,
    %cst_243 = arith.constant 0.000000e+00 : f32
    %339 = vector.broadcast %cst_243 : f32 to vector<16x256xf32>
    %c0_244 = arith.constant 0 : index
    %c239_245 = arith.constant 239 : index
    %340 = vector.load %arg6[%c0_244, %c239_245] : memref<16x512xf32, #tpu.memory_space<vmem>>, vector<16x256xf32>
    %c0_246 = arith.constant 0 : index
    %c0_247 = arith.constant 0 : index
    %c0_248 = arith.constant 0 : index
    %341 = vector.load %arg4[%c0_246, %c0_247, %c0_248] : memref<9x1x256xf32, #tpu.memory_space<vmem>>, vector<1x1x256xf32>
    %342 = vector.shape_cast %341 : vector<1x1x256xf32> to vector<1x256xf32>
    %343 = vector.broadcast %342 : vector<1x256xf32> to vector<16x256xf32>
    %344 = arith.mulf %340, %343 : vector<16x256xf32>
    %c27 = arith.constant 27 : index
    %c0_249 = arith.constant 0 : index
    %c0_250 = arith.constant 0 : index
    %345 = vector.load %arg2[%c27, %c0_249, %c0_250] : memref<36x16x16xbf16, #tpu.memory_space<vmem>>, vector<1x16x16xbf16>
    %346 = vector.shape_cast %345 : vector<1x16x16xbf16> to vector<16x16xbf16>
    %347 = arith.truncf %344 : vector<16x256xf32> to vector<16x256xbf16>
    %cst_251 = arith.constant dense<0.000000e+00> : vector<16x256xf32>
    %348 = tpu.matmul %346, %347, %cst_251 {dimension_numbers = #tpu.dot_dimension_numbers<[1], [0], [0], [1], [0, 0, 1, 1], [], []>} : vector<16x16xbf16>, vector<16x256xbf16>, vector<16x256xf32> -> vector<16x256xf32>
    %349 = arith.addf %339, %348 : vector<16x256xf32>
    %c0_252 = arith.constant 0 : index
    %c240_253 = arith.constant 240 : index
    %350 = vector.load %arg6[%c0_252, %c240_253] : memref<16x512xf32, #tpu.memory_space<vmem>>, vector<16x256xf32>
    %c1_254 = arith.constant 1 : index
    %c0_255 = arith.constant 0 : index
    %c0_256 = arith.constant 0 : index
    %351 = vector.load %arg4[%c1_254, %c0_255, %c0_256] : memref<9x1x256xf32, #tpu.memory_space<vmem>>, vector<1x1x256xf32>
    %352 = vector.shape_cast %351 : vector<1x1x256xf32> to vector<1x256xf32>
    %353 = vector.broadcast %352 : vector<1x256xf32> to vector<16x256xf32>
    %354 = arith.mulf %350, %353 : vector<16x256xf32>
    %c28 = arith.constant 28 : index
    %c0_257 = arith.constant 0 : index
    %c0_258 = arith.constant 0 : index
    %355 = vector.load %arg2[%c28, %c0_257, %c0_258] : memref<36x16x16xbf16, #tpu.memory_space<vmem>>, vector<1x16x16xbf16>
    %356 = vector.shape_cast %355 : vector<1x16x16xbf16> to vector<16x16xbf16>
    %357 = arith.truncf %354 : vector<16x256xf32> to vector<16x256xbf16>
    %cst_259 = arith.constant dense<0.000000e+00> : vector<16x256xf32>
    %358 = tpu.matmul %356, %357, %cst_259 {dimension_numbers = #tpu.dot_dimension_numbers<[1], [0], [0], [1], [0, 0, 1, 1], [], []>} : vector<16x16xbf16>, vector<16x256xbf16>, vector<16x256xf32> -> vector<16x256xf32>
    %359 = arith.addf %349, %358 : vector<16x256xf32>
    %c0_260 = arith.constant 0 : index
    %c241_261 = arith.constant 241 : index
    %360 = vector.load %arg6[%c0_260, %c241_261] : memref<16x512xf32, #tpu.memory_space<vmem>>, vector<16x256xf32>
    %c2_262 = arith.constant 2 : index
    %c0_263 = arith.constant 0 : index
    %c0_264 = arith.constant 0 : index
    %361 = vector.load %arg4[%c2_262, %c0_263, %c0_264] : memref<9x1x256xf32, #tpu.memory_space<vmem>>, vector<1x1x256xf32>
    %362 = vector.shape_cast %361 : vector<1x1x256xf32> to vector<1x256xf32>
    %363 = vector.broadcast %362 : vector<1x256xf32> to vector<16x256xf32>
    %364 = arith.mulf %360, %363 : vector<16x256xf32>
    %c29 = arith.constant 29 : index
    %c0_265 = arith.constant 0 : index
    %c0_266 = arith.constant 0 : index
    %365 = vector.load %arg2[%c29, %c0_265, %c0_266] : memref<36x16x16xbf16, #tpu.memory_space<vmem>>, vector<1x16x16xbf16>
    %366 = vector.shape_cast %365 : vector<1x16x16xbf16> to vector<16x16xbf16>
    %367 = arith.truncf %364 : vector<16x256xf32> to vector<16x256xbf16>
    %cst_267 = arith.constant dense<0.000000e+00> : vector<16x256xf32>
    %368 = tpu.matmul %366, %367, %cst_267 {dimension_numbers = #tpu.dot_dimension_numbers<[1], [0], [0], [1], [0, 0, 1, 1], [], []>} : vector<16x16xbf16>, vector<16x256xbf16>, vector<16x256xf32> -> vector<16x256xf32>
    %369 = arith.addf %359, %368 : vector<16x256xf32>
    %c0_268 = arith.constant 0 : index
    %c255_269 = arith.constant 255 : index
    %370 = vector.load %arg6[%c0_268, %c255_269] : memref<16x512xf32, #tpu.memory_space<vmem>>, vector<16x256xf32>
    %c3_270 = arith.constant 3 : index
    %c0_271 = arith.constant 0 : index
    %c0_272 = arith.constant 0 : index
    %371 = vector.load %arg4[%c3_270, %c0_271, %c0_272] : memref<9x1x256xf32, #tpu.memory_space<vmem>>, vector<1x1x256xf32>
    %372 = vector.shape_cast %371 : vector<1x1x256xf32> to vector<1x256xf32>
    %373 = vector.broadcast %372 : vector<1x256xf32> to vector<16x256xf32>
    %374 = arith.mulf %370, %373 : vector<16x256xf32>
    %c30 = arith.constant 30 : index
    %c0_273 = arith.constant 0 : index
    %c0_274 = arith.constant 0 : index
    %375 = vector.load %arg2[%c30, %c0_273, %c0_274] : memref<36x16x16xbf16, #tpu.memory_space<vmem>>, vector<1x16x16xbf16>
    %376 = vector.shape_cast %375 : vector<1x16x16xbf16> to vector<16x16xbf16>
    %377 = arith.truncf %374 : vector<16x256xf32> to vector<16x256xbf16>
    %cst_275 = arith.constant dense<0.000000e+00> : vector<16x256xf32>
    %378 = tpu.matmul %376, %377, %cst_275 {dimension_numbers = #tpu.dot_dimension_numbers<[1], [0], [0], [1], [0, 0, 1, 1], [], []>} : vector<16x16xbf16>, vector<16x256xbf16>, vector<16x256xf32> -> vector<16x256xf32>
    %379 = arith.addf %369, %378 : vector<16x256xf32>
    %c31 = arith.constant 31 : index
    %c0_276 = arith.constant 0 : index
    %c0_277 = arith.constant 0 : index
    %380 = vector.load %arg2[%c31, %c0_276, %c0_277] : memref<36x16x16xbf16, #tpu.memory_space<vmem>>, vector<1x16x16xbf16>
    %381 = vector.shape_cast %380 : vector<1x16x16xbf16> to vector<16x16xbf16>
    %382 = arith.truncf %336 : vector<16x256xf32> to vector<16x256xbf16>
    %cst_278 = arith.constant dense<0.000000e+00> : vector<16x256xf32>
    %383 = tpu.matmul %381, %382, %cst_278 {dimension_numbers = #tpu.dot_dimension_numbers<[1], [0], [0], [1], [0, 0, 1, 1], [], []>} : vector<16x16xbf16>, vector<16x256xbf16>, vector<16x256xf32> -> vector<16x256xf32>
    %384 = arith.addf %379, %383 : vector<16x256xf32>
    %c0_279 = arith.constant 0 : index
    %c1_280 = arith.constant 1 : index
    %385 = vector.load %arg6[%c0_279, %c1_280] : memref<16x512xf32, #tpu.memory_space<vmem>>, vector<16x256xf32>
    %c5_281 = arith.constant 5 : index
    %c0_282 = arith.constant 0 : index
    %c0_283 = arith.constant 0 : index
    %386 = vector.load %arg4[%c5_281, %c0_282, %c0_283] : memref<9x1x256xf32, #tpu.memory_space<vmem>>, vector<1x1x256xf32>
    %387 = vector.shape_cast %386 : vector<1x1x256xf32> to vector<1x256xf32>
    %388 = vector.broadcast %387 : vector<1x256xf32> to vector<16x256xf32>
    %389 = arith.mulf %385, %388 : vector<16x256xf32>
    %c32 = arith.constant 32 : index
    %c0_284 = arith.constant 0 : index
    %c0_285 = arith.constant 0 : index
    %390 = vector.load %arg2[%c32, %c0_284, %c0_285] : memref<36x16x16xbf16, #tpu.memory_space<vmem>>, vector<1x16x16xbf16>
    %391 = vector.shape_cast %390 : vector<1x16x16xbf16> to vector<16x16xbf16>
    %392 = arith.truncf %389 : vector<16x256xf32> to vector<16x256xbf16>
    %cst_286 = arith.constant dense<0.000000e+00> : vector<16x256xf32>
    %393 = tpu.matmul %391, %392, %cst_286 {dimension_numbers = #tpu.dot_dimension_numbers<[1], [0], [0], [1], [0, 0, 1, 1], [], []>} : vector<16x16xbf16>, vector<16x256xbf16>, vector<16x256xf32> -> vector<16x256xf32>
    %394 = arith.addf %384, %393 : vector<16x256xf32>
    %c0_287 = arith.constant 0 : index
    %c15_288 = arith.constant 15 : index
    %395 = vector.load %arg6[%c0_287, %c15_288] : memref<16x512xf32, #tpu.memory_space<vmem>>, vector<16x256xf32>
    %c6_289 = arith.constant 6 : index
    %c0_290 = arith.constant 0 : index
    %c0_291 = arith.constant 0 : index
    %396 = vector.load %arg4[%c6_289, %c0_290, %c0_291] : memref<9x1x256xf32, #tpu.memory_space<vmem>>, vector<1x1x256xf32>
    %397 = vector.shape_cast %396 : vector<1x1x256xf32> to vector<1x256xf32>
    %398 = vector.broadcast %397 : vector<1x256xf32> to vector<16x256xf32>
    %399 = arith.mulf %395, %398 : vector<16x256xf32>
    %c33 = arith.constant 33 : index
    %c0_292 = arith.constant 0 : index
    %c0_293 = arith.constant 0 : index
    %400 = vector.load %arg2[%c33, %c0_292, %c0_293] : memref<36x16x16xbf16, #tpu.memory_space<vmem>>, vector<1x16x16xbf16>
    %401 = vector.shape_cast %400 : vector<1x16x16xbf16> to vector<16x16xbf16>
    %402 = arith.truncf %399 : vector<16x256xf32> to vector<16x256xbf16>
    %cst_294 = arith.constant dense<0.000000e+00> : vector<16x256xf32>
    %403 = tpu.matmul %401, %402, %cst_294 {dimension_numbers = #tpu.dot_dimension_numbers<[1], [0], [0], [1], [0, 0, 1, 1], [], []>} : vector<16x16xbf16>, vector<16x256xbf16>, vector<16x256xf32> -> vector<16x256xf32>
    %404 = arith.addf %394, %403 : vector<16x256xf32>
    %c0_295 = arith.constant 0 : index
    %c16_296 = arith.constant 16 : index
    %405 = vector.load %arg6[%c0_295, %c16_296] : memref<16x512xf32, #tpu.memory_space<vmem>>, vector<16x256xf32>
    %c7_297 = arith.constant 7 : index
    %c0_298 = arith.constant 0 : index
    %c0_299 = arith.constant 0 : index
    %406 = vector.load %arg4[%c7_297, %c0_298, %c0_299] : memref<9x1x256xf32, #tpu.memory_space<vmem>>, vector<1x1x256xf32>
    %407 = vector.shape_cast %406 : vector<1x1x256xf32> to vector<1x256xf32>
    %408 = vector.broadcast %407 : vector<1x256xf32> to vector<16x256xf32>
    %409 = arith.mulf %405, %408 : vector<16x256xf32>
    %c34 = arith.constant 34 : index
    %c0_300 = arith.constant 0 : index
    %c0_301 = arith.constant 0 : index
    %410 = vector.load %arg2[%c34, %c0_300, %c0_301] : memref<36x16x16xbf16, #tpu.memory_space<vmem>>, vector<1x16x16xbf16>
    %411 = vector.shape_cast %410 : vector<1x16x16xbf16> to vector<16x16xbf16>
    %412 = arith.truncf %409 : vector<16x256xf32> to vector<16x256xbf16>
    %cst_302 = arith.constant dense<0.000000e+00> : vector<16x256xf32>
    %413 = tpu.matmul %411, %412, %cst_302 {dimension_numbers = #tpu.dot_dimension_numbers<[1], [0], [0], [1], [0, 0, 1, 1], [], []>} : vector<16x16xbf16>, vector<16x256xbf16>, vector<16x256xf32> -> vector<16x256xf32>
    %414 = arith.addf %404, %413 : vector<16x256xf32>
    %c0_303 = arith.constant 0 : index
    %c17_304 = arith.constant 17 : index
    %415 = vector.load %arg6[%c0_303, %c17_304] : memref<16x512xf32, #tpu.memory_space<vmem>>, vector<16x256xf32>
    %c8_305 = arith.constant 8 : index
    %c0_306 = arith.constant 0 : index
    %c0_307 = arith.constant 0 : index
    %416 = vector.load %arg4[%c8_305, %c0_306, %c0_307] : memref<9x1x256xf32, #tpu.memory_space<vmem>>, vector<1x1x256xf32>
    %417 = vector.shape_cast %416 : vector<1x1x256xf32> to vector<1x256xf32>
    %418 = vector.broadcast %417 : vector<1x256xf32> to vector<16x256xf32>
    %419 = arith.mulf %415, %418 : vector<16x256xf32>
    %c35 = arith.constant 35 : index
    %c0_308 = arith.constant 0 : index
    %c0_309 = arith.constant 0 : index
    %420 = vector.load %arg2[%c35, %c0_308, %c0_309] : memref<36x16x16xbf16, #tpu.memory_space<vmem>>, vector<1x16x16xbf16>
    %421 = vector.shape_cast %420 : vector<1x16x16xbf16> to vector<16x16xbf16>
    %422 = arith.truncf %419 : vector<16x256xf32> to vector<16x256xbf16>
    %cst_310 = arith.constant dense<0.000000e+00> : vector<16x256xf32>
    %423 = tpu.matmul %421, %422, %cst_310 {dimension_numbers = #tpu.dot_dimension_numbers<[1], [0], [0], [1], [0, 0, 1, 1], [], []>} : vector<16x16xbf16>, vector<16x256xbf16>, vector<16x256xf32> -> vector<16x256xf32>
    %424 = arith.addf %414, %423 : vector<16x256xf32>
    %c3_311 = arith.constant 3 : index
    %c0_312 = arith.constant 0 : index
    %c0_313 = arith.constant 0 : index
    %425 = vector.load %arg3[%c3_311, %c0_312, %c0_313] : memref<4x16x1xf32, #tpu.memory_space<vmem>>, vector<1x16x1xf32>
    %426 = vector.shape_cast %425 : vector<1x16x1xf32> to vector<16x1xf32>
    %427 = vector.broadcast %426 : vector<16x1xf32> to vector<16x256xf32>
    %428 = arith.addf %424, %427 : vector<16x256xf32>
    %cst_314 = arith.constant dense<0.000000e+00> : vector<16xf32>
    %429 = vector.multi_reduction <add>, %428, %cst_314 [1] : vector<16x256xf32> to vector<16xf32>
    %430 = vector.shape_cast %429 : vector<16xf32> to vector<16x1xf32>
    %cst_315 = arith.constant 2.560000e+02 : f32
    %431 = vector.broadcast %cst_315 : f32 to vector<16x1xf32>
    %432 = arith.divf %430, %431 : vector<16x1xf32>
    %433 = vector.broadcast %432 : vector<16x1xf32> to vector<16x256xf32>
    %434 = arith.subf %428, %433 : vector<16x256xf32>
    %435 = arith.mulf %434, %434 : vector<16x256xf32>
    %cst_316 = arith.constant dense<0.000000e+00> : vector<16xf32>
    %436 = vector.multi_reduction <add>, %435, %cst_316 [1] : vector<16x256xf32> to vector<16xf32>
    %437 = vector.shape_cast %436 : vector<16xf32> to vector<16x1xf32>
    %cst_317 = arith.constant 2.560000e+02 : f32
    %438 = vector.broadcast %cst_317 : f32 to vector<16x1xf32>
    %439 = arith.divf %437, %438 : vector<16x1xf32>
    %440 = vector.broadcast %432 : vector<16x1xf32> to vector<16x256xf32>
    %441 = arith.subf %428, %440 : vector<16x256xf32>
    %cst_318 = arith.constant 9.99999974E-6 : f32
    %442 = vector.broadcast %cst_318 : f32 to vector<16x1xf32>
    %443 = arith.addf %439, %442 : vector<16x1xf32>
    %444 = math.rsqrt %443 : vector<16x1xf32>
    %445 = vector.broadcast %444 : vector<16x1xf32> to vector<16x256xf32>
    %446 = arith.mulf %441, %445 : vector<16x256xf32>
    %447 = arith.addf %446, %224 : vector<16x256xf32>
    %c0_319 = arith.constant 0 : index
    %c0_320 = arith.constant 0 : index
    %c0_321 = arith.constant 0 : index
    %448 = vector.load %arg5[%c0_319, %c0_320, %c0_321] : memref<1x16x256xf32, #tpu.memory_space<vmem>>, vector<1x16x256xf32>
    %449 = vector.shape_cast %448 : vector<1x16x256xf32> to vector<16x256xf32>
    %450 = vector.shape_cast %447 : vector<16x256xf32> to vector<1x16x256xf32>
    tpu.vector_store %arg5[%c0_319, %c0_320, %c0_321], %450 {strides = array<i32>} : memref<1x16x256xf32, #tpu.memory_space<vmem>>, vector<1x16x256xf32>,
    return
  }
  func.func @transform_0(%arg0: i32) -> (i32, i32, i32) {
    %c0_i32 = arith.constant 0 : i32
    %c0_i32_0 = arith.constant 0 : i32
    %c0_i32_1 = arith.constant 0 : i32
    return %arg0, %c0_i32, %c0_i32_0 : i32, i32, i32
  }
  func.func @transform_1(%arg0: i32) -> (i32, i32, i32) {
    %c0_i32 = arith.constant 0 : i32
    %c0_i32_0 = arith.constant 0 : i32
    %c0_i32_1 = arith.constant 0 : i32
    %c0_i32_2 = arith.constant 0 : i32
    return %c0_i32, %c0_i32_0, %c0_i32_1 : i32, i32, i32
  }
  func.func @transform_2(%arg0: i32) -> (i32, i32, i32) {
    %c0_i32 = arith.constant 0 : i32
    %c0_i32_0 = arith.constant 0 : i32
    %c0_i32_1 = arith.constant 0 : i32
    %c0_i32_2 = arith.constant 0 : i32
    return %c0_i32, %c0_i32_0, %c0_i32_1 : i32, i32, i32
  }
  func.func @transform_3(%arg0: i32) -> (i32, i32, i32) {
    %c0_i32 = arith.constant 0 : i32
    %c0_i32_0 = arith.constant 0 : i32
    %c0_i32_1 = arith.constant 0 : i32
    %c0_i32_2 = arith.constant 0 : i32
    return %c0_i32, %c0_i32_0, %c0_i32_1 : i32, i32, i32
  }
  func.func @transform_4(%arg0: i32) -> (i32, i32, i32) {
    %c0_i32 = arith.constant 0 : i32
    %c0_i32_0 = arith.constant 0 : i32
    %c0_i32_1 = arith.constant 0 : i32
    return %arg0, %c0_i32, %c0_i32_0 : i32, i32, i32
  }
}

</mosaic_0001>

<llo_original>
// kernel: resblocks_forward.1
$region0: #{resblocks_forward.1}
  #allocation0 [shape = 'u32[]', space=smem, size = 0x4, offset = 0x4, fixed_abs, tag = 'smem constant byte address 0x4 - core index']
  #allocation1 [shape = 'u32[144,128]{1,0:T(1,128)}', space=vmem, size = 0x12000, scoped, tag = 'internal scratch']
  #allocation2 [shape = 'f32[16,512]{1,0:T(8,128)}', space=vmem, size = 0x8000, scoped, tag = 'scratch operand']
  %s0 = inlined_call_operand.vmem [shape: f32[2,16,256], index: 0, kind: input, shape index: {}]
  %s1 = inlined_call_operand.vmem [shape: bf16[36,16,16], index: 1, kind: input, shape index: {}]
  %s2 = inlined_call_operand.vmem [shape: f32[4,16,1], index: 2, kind: input, shape index: {}]
  %s3 = inlined_call_operand.vmem [shape: f32[9,1,256], index: 3, kind: input, shape index: {}]
  %s4 = inlined_call_operand.vmem [shape: f32[2,16,256], index: 4, kind: output, shape index: {}]
  %s5 = sld [smem:[#allocation0]]
  $region49: #{resblocks_forward.1} parent=0
    _
  %s7 = ssub.s32 1, %s5
  %s8 = scalar_select 0, %s7, %s5
  loop: start=0, step=1, limit=4
  $region2: #{resblocks_forward.1} parent=0 // loop_pre_header
    _
  $region3: #{resblocks_forward.1} parent=0 // loop_header
    %s10 = sphi 0, %s14
    %p11 = scmp.ge.s32.totalorder %s10, 4
    %s20 = sphi 0, %s22
    %s23 = sphi 0, %s20
    %s24 = sphi 0, %s23
    %s40 = sphi 0, %s24
    %s44 = sphi 0, %s44
    %s46 = sphi 0, %s44
    %s47 = sphi 0, %s46
    %s61 = sphi 0, %s47
    %s65 = sphi 0, %s65
    %s67 = sphi 0, %s65
    %s68 = sphi 0, %s67
    %s82 = sphi 0, %s68
    %s86 = sphi 0, %s86
    %s88 = sphi 0, %s86
    %s89 = sphi 0, %s88
    %s103 = sphi 0, %s89
    %s109 = sphi 0, %s111
    %s112 = sphi 0, %s109
    %s113 = sphi 0, %s112
    %s129 = sphi 0, %s113
  $region4: #{resblocks_forward.1} parent=0 // loop_header_branch
    %13 = sbr.rel (%p11) target = $region8
  $region5: #{resblocks_forward.1} parent=0 // loop_body
    %s15 = ssub.s32 %s10, 1
    %s16 = ssub.s32 %s10, 2
    %s17 = sadd.s32 %s10, 1
    %s18 = ssub.s32 %s10, %s17
    %p19 = scmp.eq.s32.totalorder %s18, 0
    %s21 = sadd.s32 %s20, 1
    %s22 = scalar_select %p19, %s20, %s21
    %p25 = pneg %p19
    %p26 = scmp.eq.s32.totalorder %s10, 1
    %p27 = por %p25, %p26
    %p28 = scmp.ne.s32.totalorder %s20, %s23
    %p29 = scmp.eq.s32.totalorder %s10, 0
    %p30 = por %p28, %p29
    %p31 = scmp.ne.s32.totalorder %s20, %s23
    %p32 = scmp.eq.s32.totalorder %s15, 1
    %p33 = por %p31, %p32
    %p34 = scmp.ne.s32.totalorder %s23, %s24
    %p35 = scmp.eq.s32.totalorder %s15, 0
    %p36 = por %p34, %p35
    %p37 = scmp.ne.s32.totalorder %s23, %s24
    %p38 = scmp.eq.s32.totalorder %s16, 1
    %p39 = por %p37, %p38
    %p41 = scmp.ne.s32.totalorder %s24, %s40
    %p42 = scmp.eq.s32.totalorder %s16, 0
    %p43 = por %p41, %p42
    %s45 = sadd.s32 %s44, 1
    %p48 = scmp.eq.s32.totalorder %s10, 1
    %p49 = scmp.ne.s32.totalorder %s44, %s46
    %p50 = scmp.eq.s32.totalorder %s10, 0
    %p51 = por %p49, %p50
    %p52 = scmp.ne.s32.totalorder %s44, %s46
    %p53 = scmp.eq.s32.totalorder %s15, 1
    %p54 = por %p52, %p53
    %p55 = scmp.ne.s32.totalorder %s46, %s47
    %p56 = scmp.eq.s32.totalorder %s15, 0
    %p57 = por %p55, %p56
    %p58 = scmp.ne.s32.totalorder %s46, %s47
    %p59 = scmp.eq.s32.totalorder %s16, 1
    %p60 = por %p58, %p59
    %p62 = scmp.ne.s32.totalorder %s47, %s61
    %p63 = scmp.eq.s32.totalorder %s16, 0
    %p64 = por %p62, %p63
    %s66 = sadd.s32 %s65, 1
    %p69 = scmp.eq.s32.totalorder %s10, 1
    %p70 = scmp.ne.s32.totalorder %s65, %s67
    %p71 = scmp.eq.s32.totalorder %s10, 0
    %p72 = por %p70, %p71
    %p73 = scmp.ne.s32.totalorder %s65, %s67
    %p74 = scmp.eq.s32.totalorder %s15, 1
    %p75 = por %p73, %p74
    %p76 = scmp.ne.s32.totalorder %s67, %s68
    %p77 = scmp.eq.s32.totalorder %s15, 0
    %p78 = por %p76, %p77
    %p79 = scmp.ne.s32.totalorder %s67, %s68
    %p80 = scmp.eq.s32.totalorder %s16, 1
    %p81 = por %p79, %p80
    %p83 = scmp.ne.s32.totalorder %s68, %s82
    %p84 = scmp.eq.s32.totalorder %s16, 0
    %p85 = por %p83, %p84
    %s87 = sadd.s32 %s86, 1
    %p90 = scmp.eq.s32.totalorder %s10, 1
    %p91 = scmp.ne.s32.totalorder %s86, %s88
    %p92 = scmp.eq.s32.totalorder %s10, 0
    %p93 = por %p91, %p92
    %p94 = scmp.ne.s32.totalorder %s86, %s88
    %p95 = scmp.eq.s32.totalorder %s15, 1
    %p96 = por %p94, %p95
    %p97 = scmp.ne.s32.totalorder %s88, %s89
    %p98 = scmp.eq.s32.totalorder %s15, 0
    %p99 = por %p97, %p98
    %p100 = scmp.ne.s32.totalorder %s88, %s89
    %p101 = scmp.eq.s32.totalorder %s16, 1
    %p102 = por %p100, %p101
    %p104 = scmp.ne.s32.totalorder %s89, %s103
    %p105 = scmp.eq.s32.totalorder %s16, 0
    %p106 = por %p104, %p105
    %s107 = ssub.s32 %s10, %s17
    %p108 = scmp.eq.s32.totalorder %s107, 0
    %s110 = sadd.s32 %s109, 1
    %s111 = scalar_select %p108, %s109, %s110
    %p114 = pneg %p108
    %p115 = scmp.eq.s32.totalorder %s10, 1
    %p116 = por %p114, %p115
    %p117 = scmp.ne.s32.totalorder %s109, %s112
    %p118 = scmp.eq.s32.totalorder %s10, 0
    %p119 = por %p117, %p118
    %p120 = scmp.ne.s32.totalorder %s109, %s112
    %p121 = scmp.eq.s32.totalorder %s15, 1
    %p122 = por %p120, %p121
    %p123 = scmp.ne.s32.totalorder %s112, %s113
    %p124 = scmp.eq.s32.totalorder %s15, 0
    %p125 = por %p123, %p124
    %p126 = scmp.ne.s32.totalorder %s112, %s113
    %p127 = scmp.eq.s32.totalorder %s16, 1
    %p128 = por %p126, %p127
    %p130 = scmp.ne.s32.totalorder %s113, %s129
    %p131 = scmp.eq.s32.totalorder %s16, 0
    %p132 = por %p130, %p131
    %p133 = scmp.le.s32.totalorder 1, %s10
    %p134 = scmp.lt.s32.totalorder %s10, 3
    %p135 = pnand %p133, %p134
    %p136 = pneg %p135
    // Predicated region
    $region9: #{resblocks_forward.1} parent=5 // pred_check
      _
    $region10: #{resblocks_forward.1} parent=5 // pred_check_branch
      %138 = sbr.rel (%p135) target = $region12
    $region11: #{resblocks_forward.1} parent=5 // pred_region
      %s139 = ssub.s32 %s10, 1
      // Predicated region
      $region13: #{resblocks_forward.1} parent=11 // pred_check
        %p140 = pneg %p57
      $region14: #{resblocks_forward.1} parent=11 // pred_check_branch
        %142 = sbr.rel (%p140) target = $region16
      $region15: #{resblocks_forward.1} parent=11 // pred_region
        _
      $region16: #{resblocks_forward.1} parent=11 // pred_fallthru
        _
      // Predicated region
      $region17: #{resblocks_forward.1} parent=11 // pred_check
        %p143 = pneg %p78
      $region18: #{resblocks_forward.1} parent=11 // pred_check_branch
        %145 = sbr.rel (%p143) target = $region20
      $region19: #{resblocks_forward.1} parent=11 // pred_region
        _
      $region20: #{resblocks_forward.1} parent=11 // pred_fallthru
        _
      // Predicated region
      $region21: #{resblocks_forward.1} parent=11 // pred_check
        %p146 = pneg %p99
      $region22: #{resblocks_forward.1} parent=11 // pred_check_branch
        %148 = sbr.rel (%p146) target = $region24
      $region23: #{resblocks_forward.1} parent=11 // pred_region
        _
      $region24: #{resblocks_forward.1} parent=11 // pred_fallthru
        _
    $region12: #{resblocks_forward.1} parent=5 // pred_fallthru
      _
    %p149 = scmp.lt.s32.totalorder %s10, 2
    // Predicated region
    $region25: #{resblocks_forward.1} parent=5 // pred_check
      %p150 = pneg %p149
    $region26: #{resblocks_forward.1} parent=5 // pred_check_branch
      %152 = sbr.rel (%p150) target = $region28
    $region27: #{resblocks_forward.1} parent=5 // pred_region
      // Predicated region
      $region29: #{resblocks_forward.1} parent=27 // pred_check
        %p153 = pneg %p30
      $region30: #{resblocks_forward.1} parent=27 // pred_check_branch
        %155 = sbr.rel (%p153) target = $region32
      $region31: #{resblocks_forward.1} parent=27 // pred_region
        %p156 = scmp.lt.s32.totalorder %s10, 1
        %s157 = scalar_select %p156, %s10, 1
        %s158 = smul.addr %s157, 4
        %s159 = smul.addr %s158, 8
        %s160 = scalar_lea.vmem %s0, %s159
      $region32: #{resblocks_forward.1} parent=27 // pred_fallthru
        _
    $region28: #{resblocks_forward.1} parent=5 // pred_fallthru
      _
    %p161 = scmp.le.s32.totalorder 1, %s10
    %p162 = scmp.lt.s32.totalorder %s10, 3
    %p163 = pnand %p161, %p162
    %p164 = pneg %p163
    // Predicated region
    $region33: #{resblocks_forward.1} parent=5 // pred_check
      _
    $region34: #{resblocks_forward.1} parent=5 // pred_check_branch
      %166 = sbr.rel (%p163) target = $region36
    $region35: #{resblocks_forward.1} parent=5 // pred_region
      %s167 = ssub.s32 %s10, 1
      %p168 = scmp.lt.s32.totalorder %s15, 1
      %s169 = scalar_select %p168, %s15, 1
      %s170 = smul.addr %s169, 4
      %s171 = smul.addr %s170, 8
      %s172 = scalar_lea.vmem %s0, %s171
      %p173 = pneg %p36
      %p174 = pneg %p33
      %p175 = pneg %p57
      %p176 = pneg %p54
      %p177 = pneg %p78
      %p178 = pneg %p75
      %p179 = pneg %p99
      %p180 = pneg %p96
      %p181 = pneg %p125
      %p182 = pneg %p122
      %p183 = scmp.lt.s32.totalorder %s15, 1
      %s184 = scalar_select %p183, %s15, 1
      %s185 = smul.addr %s184, 4
      %s186 = smul.addr %s185, 8
      %s187 = scalar_lea.vmem %s4, %s186
      %p188 = scmp.lt.s32.totalorder %s15, 1
      %s189 = scalar_select %p188, %s15, 1
      %s190 = smul.addr %s189, 4
      %s191 = smul.addr %s190, 8
      %s192 = scalar_lea.vmem %s0, %s191
      %p193 = scmp.lt.s32.totalorder %s15, 1
      %s194 = scalar_select %p193, %s15, 1
      %s195 = smul.addr %s194, 4
      %s196 = smul.addr %s195, 8
      %s197 = scalar_lea.vmem %s4, %s196
      %v199 = vld [vmem:[%s192] sm:$0xff]
      %v200 = vld [vmem:[%s192 + $0x8] sm:$0xff]
      %v201 = vld [vmem:[%s192 + $0x10] sm:$0xff]
      %v202 = vld [vmem:[%s192 + $0x18] sm:$0xff]
      %203 = vst [vmem:[#allocation2] sm:$0xff] %v199
      %204 = vst [vmem:[#allocation2 + $0x8] sm:$0xff] %v200
      %205 = vst [vmem:[#allocation2 + $0x20] sm:$0xff] %v201
      %206 = vst [vmem:[#allocation2 + $0x28] sm:$0xff] %v202
      %207 = vst [vmem:[#allocation2 + $0x10] sm:$0xff] %v199
      %208 = vst [vmem:[#allocation2 + $0x18] sm:$0xff] %v200
      %209 = vst [vmem:[#allocation2 + $0x30] sm:$0xff] %v201
      %210 = vst [vmem:[#allocation2 + $0x38] sm:$0xff] %v202
      %v211 = vld [vmem:[#allocation2 + $0x8] sm:$0xff]
      %v212 = vld [vmem:[#allocation2 + $0x10] sm:$0xff]
      %v213 = vld [vmem:[#allocation2 + $0x18] sm:$0xff]
      %v214 = vld [vmem:[#allocation2 + $0x28] sm:$0xff]
      %v215 = vld [vmem:[#allocation2 + $0x30] sm:$0xff]
      %v216 = vld [vmem:[#allocation2 + $0x38] sm:$0xff]
      %v217 = vld [vmem:[%s3] sm:$0x3]
      %v219 = vlaneseq
      %v220 = vshrl.u32 %v219, 7
      %v221 = vsub.s32 0, %v220
      %v222 = vrot.slane %v217, %v221
      %v223 = vlaneseq
      %v224 = vshrl.u32 %v223, 7
      %v225 = vsub.s32 1, %v224
      %v226 = vrot.slane %v217, %v225
      %227 = vrot.lane.b32.xlu0 %v222, 111
      %v228 = vpop.permute.xlu0 %227
      %229 = vrot.lane.b32.xlu0 %v226, 111
      %v230 = vpop.permute.xlu0 %229
      %vm231 = vcmask 908288
      %v232 = vsel %vm231, %v228, %v230
      %v236 = vmul.f32 %v211, %v228
      %v237 = vmul.f32 %v212, %v232
      %v238 = vmul.f32 %v213, %v230
      %v239 = vmul.f32 %v214, %v228
      %v240 = vmul.f32 %v215, %v232
      %v241 = vmul.f32 %v216, %v230
      %v242 = vld [vmem:[%s1] sm:$0xf]
      %v243 = vld [vmem:[%s1 + $0x4] sm:$0xf]
      %v244 = vpack.c.bf16 %v239, %v236
      %v245 = vpack.c.bf16 %v240, %v237
      %v246 = vpack.c.bf16 %v241, %v238
      %s247 = scalar_lea.vmem %s3, 2
      %v248 = vld [vmem:[%s247] sm:$0x3]
      %v250 = vlaneseq
      %v251 = vshrl.u32 %v250, 7
      %v252 = vsub.s32 0, %v251
      %v253 = vrot.slane %v248, %v252
      %v254 = vlaneseq
      %v255 = vshrl.u32 %v254, 7
      %v256 = vsub.s32 1, %v255
      %v257 = vrot.slane %v248, %v256
      %258 = vrot.lane.b32.xlu0 %v253, 112
      %v259 = vpop.permute.xlu0 %258
      %260 = vrot.lane.b32.xlu0 %v257, 112
      %v261 = vpop.permute.xlu0 %260
      %vm262 = vcmask 916480
      %v263 = vsel %vm262, %v259, %v261
      %v267 = vmul.f32 %v211, %v259
      %v268 = vmul.f32 %v212, %v263
      %v269 = vmul.f32 %v213, %v261
      %v270 = vmul.f32 %v214, %v259
      %v271 = vmul.f32 %v215, %v263
      %v272 = vmul.f32 %v216, %v261
      %s273 = scalar_lea.vmem %s1, 8
      %v274 = vld [vmem:[%s273] sm:$0xf]
      %v275 = vld [vmem:[%s273 + $0x4] sm:$0xf]
      %v276 = vpack.c.bf16 %v270, %v267
      %v277 = vpack.c.bf16 %v271, %v268
      %v278 = vpack.c.bf16 %v272, %v269
      %v281 = vunpack.c.l.b16 %v274
      %v282 = vunpack.c.l.b16 %v275
      %v283 = vpack.c.b16 %v282, %v281
      %287 = vrot.lane.b32.xlu0 %v276, 16
      %v288 = vpop.permute.xlu0 %287
      %289 = vrot.lane.b32.xlu0 %v277, 16
      %v290 = vpop.permute.xlu0 %289
      %291 = vrot.lane.b32.xlu0 %v278, 16
      %v292 = vpop.permute.xlu0 %291
      %vm293 = vcmask 130048
      %v294 = vsel %vm293, %v288, %v290
      %v295 = vsel %vm293, %v290, %v292
      %vm298 = vcmask 130048
      %v300 = vsel %vm298, %v283, 0
      %302 = vmatprep.subr.bf16.mxu0 %v295
      %303 = vmatpush1.bf16.msra.mxu0 %v294
      %304 = vmatprep.subr.bf16.mxu0 0
      %305 = vmatpush1.bf16.msra.mxu0 0
      %306 = vmatprep.subr.bf16.mxu0 0
      %307 = vmatpush1.bf16.msra.mxu0 0
      %308 = vmatprep.subr.bf16.mxu0 0
      %309 = vmatpush1.bf16.msra.mxu0 0
      %310 = vmatprep.subr.bf16.mxu0 0
      %311 = vmatpush1.bf16.msra.mxu0 0
      %312 = vmatprep.subr.bf16.mxu0 0
      %313 = vmatpush1.bf16.msra.mxu0 0
      %314 = vmatprep.subr.bf16.mxu0 0
      %315 = vmatpush1.bf16.msra.mxu0 0
      %316 = vmatprep.subr.bf16.mxu0 0
      %317 = vmatpush1.bf16.msra.mxu0 0
      %318 = vmatprep.subr.bf16.mxu0 0
      %319 = vmatpush1.bf16.msra.mxu0 0
      %320 = vmatprep.subr.bf16.mxu0 0
      %321 = vmatpush1.bf16.msra.mxu0 0
      %322 = vmatprep.subr.bf16.mxu0 0
      %323 = vmatpush1.bf16.msra.mxu0 0
      %324 = vmatprep.subr.bf16.mxu0 0
      %325 = vmatpush1.bf16.msra.mxu0 0
      %326 = vmatprep.subr.bf16.mxu0 0
      %327 = vmatpush1.bf16.msra.mxu0 0
      %328 = vmatprep.subr.bf16.mxu0 0
      %329 = vmatpush1.bf16.msra.mxu0 0
      %330 = vmatprep.subr.bf16.mxu0 0
      %331 = vmatpush1.bf16.msra.mxu0 0
      %332 = vmatprep.subr.bf16.mxu0 0
      %333 = vmatpush1.bf16.msra.mxu0 0
      %334 = vmatprep.mubr.bf16.mxu0 0
      %335 = vmatmul.mubr.bf16.gmra.mrb[0].mxu0 %v300
      %v336 = vpop.f32.mrb[0].mxu0
      %v337 = vadd.f32 0.0, %v336
      %v338 = vpop.f32.mrb[0].mxu0
      %v339 = vadd.f32 0.0, %v338
      %v340 = vpop.f32.mrb[0].mxu0
      %v341 = vadd.f32 0.0, %v340
      %v342 = vpop.f32.mrb[0].mxu0
      %v343 = vadd.f32 0.0, %v342
      %344 = vdwg.mxu0
      %v347 = vunpack.c.l.b16 %v242
      %v348 = vunpack.c.l.b16 %v243
      %v349 = vpack.c.b16 %v348, %v347
      %353 = vrot.lane.b32.xlu0 %v244, 17
      %v354 = vpop.permute.xlu0 %353
      %355 = vrot.lane.b32.xlu0 %v245, 17
      %v356 = vpop.permute.xlu0 %355
      %357 = vrot.lane.b32.xlu0 %v246, 17
      %v358 = vpop.permute.xlu0 %357
      %vm359 = vcmask 138240
      %v360 = vsel %vm359, %v354, %v356
      %v361 = vsel %vm359, %v356, %v358
      %v365 = vsel %vm298, %v349, 0
      %367 = vmatprep.subr.bf16.mxu0 %v361
      %368 = vmatpush1.bf16.msra.mxu0 %v360
      %369 = vmatprep.subr.bf16.mxu0 0
      %370 = vmatpush1.bf16.msra.mxu0 0
      %371 = vmatprep.subr.bf16.mxu0 0
      %372 = vmatpush1.bf16.msra.mxu0 0
      %373 = vmatprep.subr.bf16.mxu0 0
      %374 = vmatpush1.bf16.msra.mxu0 0
      %375 = vmatprep.subr.bf16.mxu0 0
      %376 = vmatpush1.bf16.msra.mxu0 0
      %377 = vmatprep.subr.bf16.mxu0 0
      %378 = vmatpush1.bf16.msra.mxu0 0
      %379 = vmatprep.subr.bf16.mxu0 0
      %380 = vmatpush1.bf16.msra.mxu0 0
      %381 = vmatprep.subr.bf16.mxu0 0
      %382 = vmatpush1.bf16.msra.mxu0 0
      %383 = vmatprep.subr.bf16.mxu0 0
      %384 = vmatpush1.bf16.msra.mxu0 0
      %385 = vmatprep.subr.bf16.mxu0 0
      %386 = vmatpush1.bf16.msra.mxu0 0
      %387 = vmatprep.subr.bf16.mxu0 0
      %388 = vmatpush1.bf16.msra.mxu0 0
      %389 = vmatprep.subr.bf16.mxu0 0
      %390 = vmatpush1.bf16.msra.mxu0 0
      %391 = vmatprep.subr.bf16.mxu0 0
      %392 = vmatpush1.bf16.msra.mxu0 0
      %393 = vmatprep.subr.bf16.mxu0 0
      %394 = vmatpush1.bf16.msra.mxu0 0
      %395 = vmatprep.subr.bf16.mxu0 0
      %396 = vmatpush1.bf16.msra.mxu0 0
      %397 = vmatprep.subr.bf16.mxu0 0
      %398 = vmatpush1.bf16.msra.mxu0 0
      %399 = vmatprep.mubr.bf16.mxu0 0
      %400 = vmatmul.mubr.bf16.gmra.mrb[0].mxu0 %v365
      %v401 = vpop.f32.mrb[0].mxu0
      %v402 = vadd.f32 %v337, %v401
      %v403 = vpop.f32.mrb[0].mxu0
      %v404 = vadd.f32 %v339, %v403
      %v405 = vpop.f32.mrb[0].mxu0
      %v406 = vadd.f32 %v341, %v405
      %v407 = vpop.f32.mrb[0].mxu0
      %v408 = vadd.f32 %v343, %v407
      %409 = vdwg.mxu0
      %s410 = scalar_lea.vmem %s3, 4
      %v411 = vld [vmem:[%s410] sm:$0x3]
      %v413 = vlaneseq
      %v414 = vshrl.u32 %v413, 7
      %v415 = vsub.s32 0, %v414
      %v416 = vrot.slane %v411, %v415
      %v417 = vlaneseq
      %v418 = vshrl.u32 %v417, 7
      %v419 = vsub.s32 1, %v418
      %v420 = vrot.slane %v411, %v419
      %421 = vrot.lane.b32.xlu0 %v416, 113
      %v422 = vpop.permute.xlu0 %421
      %423 = vrot.lane.b32.xlu0 %v420, 113
      %v424 = vpop.permute.xlu0 %423
      %vm425 = vcmask 924672
      %v426 = vsel %vm425, %v422, %v424
      %v430 = vmul.f32 %v211, %v422
      %v431 = vmul.f32 %v212, %v426
      %v432 = vmul.f32 %v213, %v424
      %v433 = vmul.f32 %v214, %v422
      %v434 = vmul.f32 %v215, %v426
      %v435 = vmul.f32 %v216, %v424
      %s436 = scalar_lea.vmem %s1, 16
      %v437 = vld [vmem:[%s436] sm:$0xf]
      %v438 = vld [vmem:[%s436 + $0x4] sm:$0xf]
      %v439 = vpack.c.bf16 %v433, %v430
      %v440 = vpack.c.bf16 %v434, %v431
      %v441 = vpack.c.bf16 %v435, %v432
      %v444 = vunpack.c.l.b16 %v437
      %v445 = vunpack.c.l.b16 %v438
      %v446 = vpack.c.b16 %v445, %v444
      %450 = vrot.lane.b32.xlu0 %v439, 15
      %v451 = vpop.permute.xlu0 %450
      %452 = vrot.lane.b32.xlu0 %v440, 15
      %v453 = vpop.permute.xlu0 %452
      %454 = vrot.lane.b32.xlu0 %v441, 15
      %v455 = vpop.permute.xlu0 %454
      %vm456 = vcmask 121856
      %v457 = vsel %vm456, %v451, %v453
      %v458 = vsel %vm456, %v453, %v455
      %v462 = vsel %vm298, %v446, 0
      %464 = vmatprep.subr.bf16.mxu0 %v458
      %465 = vmatpush1.bf16.msra.mxu0 %v457
      %466 = vmatprep.subr.bf16.mxu0 0
      %467 = vmatpush1.bf16.msra.mxu0 0
      %468 = vmatprep.subr.bf16.mxu0 0
      %469 = vmatpush1.bf16.msra.mxu0 0
      %470 = vmatprep.subr.bf16.mxu0 0
      %471 = vmatpush1.bf16.msra.mxu0 0
      %472 = vmatprep.subr.bf16.mxu0 0
      %473 = vmatpush1.bf16.msra.mxu0 0
      %474 = vmatprep.subr.bf16.mxu0 0
      %475 = vmatpush1.bf16.msra.mxu0 0
      %476 = vmatprep.subr.bf16.mxu0 0
      %477 = vmatpush1.bf16.msra.mxu0 0
      %478 = vmatprep.subr.bf16.mxu0 0
      %479 = vmatpush1.bf16.msra.mxu0 0
      %480 = vmatprep.subr.bf16.mxu0 0
      %481 = vmatpush1.bf16.msra.mxu0 0
      %482 = vmatprep.subr.bf16.mxu0 0
      %483 = vmatpush1.bf16.msra.mxu0 0
      %484 = vmatprep.subr.bf16.mxu0 0
      %485 = vmatpush1.bf16.msra.mxu0 0
      %486 = vmatprep.subr.bf16.mxu0 0
      %487 = vmatpush1.bf16.msra.mxu0 0
      %488 = vmatprep.subr.bf16.mxu0 0
      %489 = vmatpush1.bf16.msra.mxu0 0
      %490 = vmatprep.subr.bf16.mxu0 0
      %491 = vmatpush1.bf16.msra.mxu0 0
      %492 = vmatprep.subr.bf16.mxu0 0
      %493 = vmatpush1.bf16.msra.mxu0 0
      %494 = vmatprep.subr.bf16.mxu0 0
      %495 = vmatpush1.bf16.msra.mxu0 0
      %496 = vmatprep.mubr.bf16.mxu0 0
      %497 = vmatmul.mubr.bf16.gmra.mrb[0].mxu0 %v462
      %v498 = vpop.f32.mrb[0].mxu0
      %v499 = vadd.f32 0.0, %v498
      %v500 = vpop.f32.mrb[0].mxu0
      %v501 = vadd.f32 0.0, %v500
      %v502 = vpop.f32.mrb[0].mxu0
      %v503 = vadd.f32 0.0, %v502
      %v504 = vpop.f32.mrb[0].mxu0
      %v505 = vadd.f32 0.0, %v504
      %506 = vdwg.mxu0
      %v507 = vadd.f32 %v402, %v499
      %v508 = vadd.f32 %v404, %v501
      %v509 = vadd.f32 %v406, %v503
      %v510 = vadd.f32 %v408, %v505
      %s511 = scalar_lea.vmem %s3, 6
      %v512 = vld [vmem:[%s511] sm:$0x3]
      %v514 = vlaneseq
      %v515 = vshrl.u32 %v514, 7
      %v516 = vsub.s32 0, %v515
      %v517 = vrot.slane %v512, %v516
      %v518 = vlaneseq
      %v519 = vshrl.u32 %v518, 7
      %v520 = vsub.s32 1, %v519
      %v521 = vrot.slane %v512, %v520
      %522 = vrot.lane.b32.xlu0 %v517, 127
      %v523 = vpop.permute.xlu0 %522
      %524 = vrot.lane.b32.xlu0 %v521, 127
      %v525 = vpop.permute.xlu0 %524
      %vm526 = vcmask 1039360
      %v527 = vsel %vm526, %v523, %v525
      %v531 = vmul.f32 %v211, %v523
      %v532 = vmul.f32 %v212, %v527
      %v533 = vmul.f32 %v213, %v525
      %v534 = vmul.f32 %v214, %v523
      %v535 = vmul.f32 %v215, %v527
      %v536 = vmul.f32 %v216, %v525
      %s537 = scalar_lea.vmem %s1, 24
      %v538 = vld [vmem:[%s537] sm:$0xf]
      %v539 = vld [vmem:[%s537 + $0x4] sm:$0xf]
      %v540 = vpack.c.bf16 %v534, %v531
      %v541 = vpack.c.bf16 %v535, %v532
      %v542 = vpack.c.bf16 %v536, %v533
      %v545 = vunpack.c.l.b16 %v538
      %v546 = vunpack.c.l.b16 %v539
      %v547 = vpack.c.b16 %v546, %v545
      %551 = vrot.lane.b32.xlu0 %v540, 1
      %v552 = vpop.permute.xlu0 %551
      %553 = vrot.lane.b32.xlu0 %v541, 1
      %v554 = vpop.permute.xlu0 %553
      %555 = vrot.lane.b32.xlu0 %v542, 1
      %v556 = vpop.permute.xlu0 %555
      %vm557 = vcmask 7168
      %v558 = vsel %vm557, %v552, %v554
      %v559 = vsel %vm557, %v554, %v556
      %v563 = vsel %vm298, %v547, 0
      %565 = vmatprep.subr.bf16.mxu0 %v559
      %566 = vmatpush1.bf16.msra.mxu0 %v558
      %567 = vmatprep.subr.bf16.mxu0 0
      %568 = vmatpush1.bf16.msra.mxu0 0
      %569 = vmatprep.subr.bf16.mxu0 0
      %570 = vmatpush1.bf16.msra.mxu0 0
      %571 = vmatprep.subr.bf16.mxu0 0
      %572 = vmatpush1.bf16.msra.mxu0 0
      %573 = vmatprep.subr.bf16.mxu0 0
      %574 = vmatpush1.bf16.msra.mxu0 0
      %575 = vmatprep.subr.bf16.mxu0 0
      %576 = vmatpush1.bf16.msra.mxu0 0
      %577 = vmatprep.subr.bf16.mxu0 0
      %578 = vmatpush1.bf16.msra.mxu0 0
      %579 = vmatprep.subr.bf16.mxu0 0
      %580 = vmatpush1.bf16.msra.mxu0 0
      %581 = vmatprep.subr.bf16.mxu0 0
      %582 = vmatpush1.bf16.msra.mxu0 0
      %583 = vmatprep.subr.bf16.mxu0 0
      %584 = vmatpush1.bf16.msra.mxu0 0
      %585 = vmatprep.subr.bf16.mxu0 0
      %586 = vmatpush1.bf16.msra.mxu0 0
      %587 = vmatprep.subr.bf16.mxu0 0
      %588 = vmatpush1.bf16.msra.mxu0 0
      %589 = vmatprep.subr.bf16.mxu0 0
      %590 = vmatpush1.bf16.msra.mxu0 0
      %591 = vmatprep.subr.bf16.mxu0 0
      %592 = vmatpush1.bf16.msra.mxu0 0
      %593 = vmatprep.subr.bf16.mxu0 0
      %594 = vmatpush1.bf16.msra.mxu0 0
      %595 = vmatprep.subr.bf16.mxu0 0
      %596 = vmatpush1.bf16.msra.mxu0 0
      %597 = vmatprep.mubr.bf16.mxu0 0
      %598 = vmatmul.mubr.bf16.gmra.mrb[0].mxu0 %v563
      %v599 = vpop.f32.mrb[0].mxu0
      %v600 = vadd.f32 0.0, %v599
      %v601 = vpop.f32.mrb[0].mxu0
      %v602 = vadd.f32 0.0, %v601
      %v603 = vpop.f32.mrb[0].mxu0
      %v604 = vadd.f32 0.0, %v603
      %v605 = vpop.f32.mrb[0].mxu0
      %v606 = vadd.f32 0.0, %v605
      %607 = vdwg.mxu0
      %v608 = vadd.f32 %v507, %v600
      %v609 = vadd.f32 %v508, %v602
      %v610 = vadd.f32 %v509, %v604
      %v611 = vadd.f32 %v510, %v606
      %s612 = scalar_lea.vmem %s1, 32
      %v613 = vld [vmem:[%s612] sm:$0xf]
      %v614 = vld [vmem:[%s612 + $0x4] sm:$0xf]
      %v615 = vpack.c.bf16 %v201, %v199
      %v616 = vpack.c.bf16 %v202, %v200
      %v619 = vunpack.c.l.b16 %v613
      %v620 = vunpack.c.l.b16 %v614
      %v621 = vpack.c.b16 %v620, %v619
      %v623 = vsel %vm298, %v621, 0
      %625 = vmatprep.subr.bf16.mxu0 %v616
      %626 = vmatpush1.bf16.msra.mxu0 %v615
      %627 = vmatprep.subr.bf16.mxu0 0
      %628 = vmatpush1.bf16.msra.mxu0 0
      %629 = vmatprep.subr.bf16.mxu0 0
      %630 = vmatpush1.bf16.msra.mxu0 0
      %631 = vmatprep.subr.bf16.mxu0 0
      %632 = vmatpush1.bf16.msra.mxu0 0
      %633 = vmatprep.subr.bf16.mxu0 0
      %634 = vmatpush1.bf16.msra.mxu0 0
      %635 = vmatprep.subr.bf16.mxu0 0
      %636 = vmatpush1.bf16.msra.mxu0 0
      %637 = vmatprep.subr.bf16.mxu0 0
      %638 = vmatpush1.bf16.msra.mxu0 0
      %639 = vmatprep.subr.bf16.mxu0 0
      %640 = vmatpush1.bf16.msra.mxu0 0
      %641 = vmatprep.subr.bf16.mxu0 0
      %642 = vmatpush1.bf16.msra.mxu0 0
      %643 = vmatprep.subr.bf16.mxu0 0
      %644 = vmatpush1.bf16.msra.mxu0 0
      %645 = vmatprep.subr.bf16.mxu0 0
      %646 = vmatpush1.bf16.msra.mxu0 0
      %647 = vmatprep.subr.bf16.mxu0 0
      %648 = vmatpush1.bf16.msra.mxu0 0
      %649 = vmatprep.subr.bf16.mxu0 0
      %650 = vmatpush1.bf16.msra.mxu0 0
      %651 = vmatprep.subr.bf16.mxu0 0
      %652 = vmatpush1.bf16.msra.mxu0 0
      %653 = vmatprep.subr.bf16.mxu0 0
      %654 = vmatpush1.bf16.msra.mxu0 0
      %655 = vmatprep.subr.bf16.mxu0 0
      %656 = vmatpush1.bf16.msra.mxu0 0
      %657 = vmatprep.mubr.bf16.mxu0 0
      %658 = vmatmul.mubr.bf16.gmra.mrb[0].mxu0 %v623
      %v659 = vpop.f32.mrb[0].mxu0
      %v660 = vadd.f32 0.0, %v659
      %v661 = vpop.f32.mrb[0].mxu0
      %v662 = vadd.f32 0.0, %v661
      %v663 = vpop.f32.mrb[0].mxu0
      %v664 = vadd.f32 0.0, %v663
      %v665 = vpop.f32.mrb[0].mxu0
      %v666 = vadd.f32 0.0, %v665
      %667 = vdwg.mxu0
      %v668 = vadd.f32 %v608, %v660
      %v669 = vadd.f32 %v609, %v662
      %v670 = vadd.f32 %v610, %v664
      %v671 = vadd.f32 %v611, %v666
      %v672 = vld [vmem:[#allocation2] sm:$0xff]
      %v673 = vld [vmem:[#allocation2 + $0x8] sm:$0xff]
      %v674 = vld [vmem:[#allocation2 + $0x10] sm:$0xff]
      %v675 = vld [vmem:[#allocation2 + $0x20] sm:$0xff]
      %v676 = vld [vmem:[#allocation2 + $0x28] sm:$0xff]
      %v677 = vld [vmem:[#allocation2 + $0x30] sm:$0xff]
      %s678 = scalar_lea.vmem %s3, 10
      %v679 = vld [vmem:[%s678] sm:$0x3]
      %v681 = vlaneseq
      %v682 = vshrl.u32 %v681, 7
      %v683 = vsub.s32 0, %v682
      %v684 = vrot.slane %v679, %v683
      %v685 = vlaneseq
      %v686 = vshrl.u32 %v685, 7
      %v687 = vsub.s32 1, %v686
      %v688 = vrot.slane %v679, %v687
      %689 = vrot.lane.b32.xlu0 %v684, 1
      %v690 = vpop.permute.xlu0 %689
      %691 = vrot.lane.b32.xlu0 %v688, 1
      %v692 = vpop.permute.xlu0 %691
      %vm693 = vcmask 7168
      %v694 = vsel %vm693, %v690, %v692
      %v698 = vmul.f32 %v672, %v690
      %v699 = vmul.f32 %v673, %v694
      %v700 = vmul.f32 %v674, %v692
      %v701 = vmul.f32 %v675, %v690
      %v702 = vmul.f32 %v676, %v694
      %v703 = vmul.f32 %v677, %v692
      %s704 = scalar_lea.vmem %s1, 40
      %v705 = vld [vmem:[%s704] sm:$0xf]
      %v706 = vld [vmem:[%s704 + $0x4] sm:$0xf]
      %v707 = vpack.c.bf16 %v701, %v698
      %v708 = vpack.c.bf16 %v702, %v699
      %v709 = vpack.c.bf16 %v703, %v700
      %v712 = vunpack.c.l.b16 %v705
      %v713 = vunpack.c.l.b16 %v706
      %v714 = vpack.c.b16 %v713, %v712
      %718 = vrot.lane.b32.xlu0 %v707, 127
      %v719 = vpop.permute.xlu0 %718
      %720 = vrot.lane.b32.xlu0 %v708, 127
      %v721 = vpop.permute.xlu0 %720
      %722 = vrot.lane.b32.xlu0 %v709, 127
      %v723 = vpop.permute.xlu0 %722
      %vm724 = vcmask 1039360
      %v725 = vsel %vm724, %v719, %v721
      %v726 = vsel %vm724, %v721, %v723
      %v730 = vsel %vm298, %v714, 0
      %732 = vmatprep.subr.bf16.mxu0 %v726
      %733 = vmatpush1.bf16.msra.mxu0 %v725
      %734 = vmatprep.subr.bf16.mxu0 0
      %735 = vmatpush1.bf16.msra.mxu0 0
      %736 = vmatprep.subr.bf16.mxu0 0
      %737 = vmatpush1.bf16.msra.mxu0 0
      %738 = vmatprep.subr.bf16.mxu0 0
      %739 = vmatpush1.bf16.msra.mxu0 0
      %740 = vmatprep.subr.bf16.mxu0 0
      %741 = vmatpush1.bf16.msra.mxu0 0
      %742 = vmatprep.subr.bf16.mxu0 0
      %743 = vmatpush1.bf16.msra.mxu0 0
      %744 = vmatprep.subr.bf16.mxu0 0
      %745 = vmatpush1.bf16.msra.mxu0 0
      %746 = vmatprep.subr.bf16.mxu0 0
      %747 = vmatpush1.bf16.msra.mxu0 0
      %748 = vmatprep.subr.bf16.mxu0 0
      %749 = vmatpush1.bf16.msra.mxu0 0
      %750 = vmatprep.subr.bf16.mxu0 0
      %751 = vmatpush1.bf16.msra.mxu0 0
      %752 = vmatprep.subr.bf16.mxu0 0
      %753 = vmatpush1.bf16.msra.mxu0 0
      %754 = vmatprep.subr.bf16.mxu0 0
      %755 = vmatpush1.bf16.msra.mxu0 0
      %756 = vmatprep.subr.bf16.mxu0 0
      %757 = vmatpush1.bf16.msra.mxu0 0
      %758 = vmatprep.subr.bf16.mxu0 0
      %759 = vmatpush1.bf16.msra.mxu0 0
      %760 = vmatprep.subr.bf16.mxu0 0
      %761 = vmatpush1.bf16.msra.mxu0 0
      %762 = vmatprep.subr.bf16.mxu0 0
      %763 = vmatpush1.bf16.msra.mxu0 0
      %764 = vmatprep.mubr.bf16.mxu0 0
      %765 = vmatmul.mubr.bf16.gmra.mrb[0].mxu0 %v730
      %v766 = vpop.f32.mrb[0].mxu0
      %v767 = vadd.f32 0.0, %v766
      %v768 = vpop.f32.mrb[0].mxu0
      %v769 = vadd.f32 0.0, %v768
      %v770 = vpop.f32.mrb[0].mxu0
      %v771 = vadd.f32 0.0, %v770
      %v772 = vpop.f32.mrb[0].mxu0
      %v773 = vadd.f32 0.0, %v772
      %774 = vdwg.mxu0
      %v775 = vadd.f32 %v668, %v767
      %v776 = vadd.f32 %v669, %v769
      %v777 = vadd.f32 %v670, %v771
      %v778 = vadd.f32 %v671, %v773
      %s779 = scalar_lea.vmem %s3, 12
      %v780 = vld [vmem:[%s779] sm:$0x3]
      %v782 = vlaneseq
      %v783 = vshrl.u32 %v782, 7
      %v784 = vsub.s32 0, %v783
      %v785 = vrot.slane %v780, %v784
      %v786 = vlaneseq
      %v787 = vshrl.u32 %v786, 7
      %v788 = vsub.s32 1, %v787
      %v789 = vrot.slane %v780, %v788
      %790 = vrot.lane.b32.xlu0 %v785, 15
      %v791 = vpop.permute.xlu0 %790
      %792 = vrot.lane.b32.xlu0 %v789, 15
      %v793 = vpop.permute.xlu0 %792
      %vm794 = vcmask 121856
      %v795 = vsel %vm794, %v791, %v793
      %v799 = vmul.f32 %v672, %v791
      %v800 = vmul.f32 %v673, %v795
      %v801 = vmul.f32 %v674, %v793
      %v802 = vmul.f32 %v675, %v791
      %v803 = vmul.f32 %v676, %v795
      %v804 = vmul.f32 %v677, %v793
      %s805 = scalar_lea.vmem %s1, 48
      %v806 = vld [vmem:[%s805] sm:$0xf]
      %v807 = vld [vmem:[%s805 + $0x4] sm:$0xf]
      %v808 = vpack.c.bf16 %v802, %v799
      %v809 = vpack.c.bf16 %v803, %v800
      %v810 = vpack.c.bf16 %v804, %v801
      %v813 = vunpack.c.l.b16 %v806
      %v814 = vunpack.c.l.b16 %v807
      %v815 = vpack.c.b16 %v814, %v813
      %819 = vrot.lane.b32.xlu0 %v808, 113
      %v820 = vpop.permute.xlu0 %819
      %821 = vrot.lane.b32.xlu0 %v809, 113
      %v822 = vpop.permute.xlu0 %821
      %823 = vrot.lane.b32.xlu0 %v810, 113
      %v824 = vpop.permute.xlu0 %823
      %vm825 = vcmask 924672
      %v826 = vsel %vm825, %v820, %v822
      %v827 = vsel %vm825, %v822, %v824
      %v831 = vsel %vm298, %v815, 0
      %833 = vmatprep.subr.bf16.mxu0 %v827
      %834 = vmatpush1.bf16.msra.mxu0 %v826
      %835 = vmatprep.subr.bf16.mxu0 0
      %836 = vmatpush1.bf16.msra.mxu0 0
      %837 = vmatprep.subr.bf16.mxu0 0
      %838 = vmatpush1.bf16.msra.mxu0 0
      %839 = vmatprep.subr.bf16.mxu0 0
      %840 = vmatpush1.bf16.msra.mxu0 0
      %841 = vmatprep.subr.bf16.mxu0 0
      %842 = vmatpush1.bf16.msra.mxu0 0
      %843 = vmatprep.subr.bf16.mxu0 0
      %844 = vmatpush1.bf16.msra.mxu0 0
      %845 = vmatprep.subr.bf16.mxu0 0
      %846 = vmatpush1.bf16.msra.mxu0 0
      %847 = vmatprep.subr.bf16.mxu0 0
      %848 = vmatpush1.bf16.msra.mxu0 0
      %849 = vmatprep.subr.bf16.mxu0 0
      %850 = vmatpush1.bf16.msra.mxu0 0
      %851 = vmatprep.subr.bf16.mxu0 0
      %852 = vmatpush1.bf16.msra.mxu0 0
      %853 = vmatprep.subr.bf16.mxu0 0
      %854 = vmatpush1.bf16.msra.mxu0 0
      %855 = vmatprep.subr.bf16.mxu0 0
      %856 = vmatpush1.bf16.msra.mxu0 0
      %857 = vmatprep.subr.bf16.mxu0 0
      %858 = vmatpush1.bf16.msra.mxu0 0
      %859 = vmatprep.subr.bf16.mxu0 0
      %860 = vmatpush1.bf16.msra.mxu0 0
      %861 = vmatprep.subr.bf16.mxu0 0
      %862 = vmatpush1.bf16.msra.mxu0 0
      %863 = vmatprep.subr.bf16.mxu0 0
      %864 = vmatpush1.bf16.msra.mxu0 0
      %865 = vmatprep.mubr.bf16.mxu0 0
      %866 = vmatmul.mubr.bf16.gmra.mrb[0].mxu0 %v831
      %v867 = vpop.f32.mrb[0].mxu0
      %v868 = vadd.f32 0.0, %v867
      %v869 = vpop.f32.mrb[0].mxu0
      %v870 = vadd.f32 0.0, %v869
      %v871 = vpop.f32.mrb[0].mxu0
      %v872 = vadd.f32 0.0, %v871
      %v873 = vpop.f32.mrb[0].mxu0
      %v874 = vadd.f32 0.0, %v873
      %875 = vdwg.mxu0
      %v876 = vadd.f32 %v775, %v868
      %v877 = vadd.f32 %v776, %v870
      %v878 = vadd.f32 %v777, %v872
      %v879 = vadd.f32 %v778, %v874
      %s880 = scalar_lea.vmem %s3, 14
      %v881 = vld [vmem:[%s880] sm:$0x3]
      %v883 = vlaneseq
      %v884 = vshrl.u32 %v883, 7
      %v885 = vsub.s32 0, %v884
      %v886 = vrot.slane %v881, %v885
      %v887 = vlaneseq
      %v888 = vshrl.u32 %v887, 7
      %v889 = vsub.s32 1, %v888
      %v890 = vrot.slane %v881, %v889
      %891 = vrot.lane.b32.xlu0 %v886, 16
      %v892 = vpop.permute.xlu0 %891
      %893 = vrot.lane.b32.xlu0 %v890, 16
      %v894 = vpop.permute.xlu0 %893
      %v895 = vsel %vm298, %v892, %v894
      %v899 = vmul.f32 %v672, %v892
      %v900 = vmul.f32 %v673, %v895
      %v901 = vmul.f32 %v674, %v894
      %v902 = vmul.f32 %v675, %v892
      %v903 = vmul.f32 %v676, %v895
      %v904 = vmul.f32 %v677, %v894
      %s905 = scalar_lea.vmem %s1, 56
      %v906 = vld [vmem:[%s905] sm:$0xf]
      %v907 = vld [vmem:[%s905 + $0x4] sm:$0xf]
      %v908 = vpack.c.bf16 %v902, %v899
      %v909 = vpack.c.bf16 %v903, %v900
      %v910 = vpack.c.bf16 %v904, %v901
      %v913 = vunpack.c.l.b16 %v906
      %v914 = vunpack.c.l.b16 %v907
      %v915 = vpack.c.b16 %v914, %v913
      %919 = vrot.lane.b32.xlu0 %v908, 112
      %v920 = vpop.permute.xlu0 %919
      %921 = vrot.lane.b32.xlu0 %v909, 112
      %v922 = vpop.permute.xlu0 %921
      %923 = vrot.lane.b32.xlu0 %v910, 112
      %v924 = vpop.permute.xlu0 %923
      %vm925 = vcmask 916480
      %v926 = vsel %vm925, %v920, %v922
      %v927 = vsel %vm925, %v922, %v924
      %v931 = vsel %vm298, %v915, 0
      %933 = vmatprep.subr.bf16.mxu0 %v927
      %934 = vmatpush1.bf16.msra.mxu0 %v926
      %935 = vmatprep.subr.bf16.mxu0 0
      %936 = vmatpush1.bf16.msra.mxu0 0
      %937 = vmatprep.subr.bf16.mxu0 0
      %938 = vmatpush1.bf16.msra.mxu0 0
      %939 = vmatprep.subr.bf16.mxu0 0
      %940 = vmatpush1.bf16.msra.mxu0 0
      %941 = vmatprep.subr.bf16.mxu0 0
      %942 = vmatpush1.bf16.msra.mxu0 0
      %943 = vmatprep.subr.bf16.mxu0 0
      %944 = vmatpush1.bf16.msra.mxu0 0
      %945 = vmatprep.subr.bf16.mxu0 0
      %946 = vmatpush1.bf16.msra.mxu0 0
      %947 = vmatprep.subr.bf16.mxu0 0
      %948 = vmatpush1.bf16.msra.mxu0 0
      %949 = vmatprep.subr.bf16.mxu0 0
      %950 = vmatpush1.bf16.msra.mxu0 0
      %951 = vmatprep.subr.bf16.mxu0 0
      %952 = vmatpush1.bf16.msra.mxu0 0
      %953 = vmatprep.subr.bf16.mxu0 0
      %954 = vmatpush1.bf16.msra.mxu0 0
      %955 = vmatprep.subr.bf16.mxu0 0
      %956 = vmatpush1.bf16.msra.mxu0 0
      %957 = vmatprep.subr.bf16.mxu0 0
      %958 = vmatpush1.bf16.msra.mxu0 0
      %959 = vmatprep.subr.bf16.mxu0 0
      %960 = vmatpush1.bf16.msra.mxu0 0
      %961 = vmatprep.subr.bf16.mxu0 0
      %962 = vmatpush1.bf16.msra.mxu0 0
      %963 = vmatprep.subr.bf16.mxu0 0
      %964 = vmatpush1.bf16.msra.mxu0 0
      %965 = vmatprep.mubr.bf16.mxu0 0
      %966 = vmatmul.mubr.bf16.gmra.mrb[0].mxu0 %v931
      %v967 = vpop.f32.mrb[0].mxu0
      %v968 = vadd.f32 0.0, %v967
      %v969 = vpop.f32.mrb[0].mxu0
      %v970 = vadd.f32 0.0, %v969
      %v971 = vpop.f32.mrb[0].mxu0
      %v972 = vadd.f32 0.0, %v971
      %v973 = vpop.f32.mrb[0].mxu0
      %v974 = vadd.f32 0.0, %v973
      %975 = vdwg.mxu0
      %v976 = vadd.f32 %v876, %v968
      %v977 = vadd.f32 %v877, %v970
      %v978 = vadd.f32 %v878, %v972
      %v979 = vadd.f32 %v879, %v974
      %s980 = scalar_lea.vmem %s3, 16
      %v981 = vld [vmem:[%s980] sm:$0x3]
      %v983 = vlaneseq
      %v984 = vshrl.u32 %v983, 7
      %v985 = vsub.s32 0, %v984
      %v986 = vrot.slane %v981, %v985
      %v987 = vlaneseq
      %v988 = vshrl.u32 %v987, 7
      %v989 = vsub.s32 1, %v988
      %v990 = vrot.slane %v981, %v989
      %991 = vrot.lane.b32.xlu0 %v986, 17
      %v992 = vpop.permute.xlu0 %991
      %993 = vrot.lane.b32.xlu0 %v990, 17
      %v994 = vpop.permute.xlu0 %993
      %vm995 = vcmask 138240
      %v996 = vsel %vm995, %v992, %v994
      %v1000 = vmul.f32 %v672, %v992
      %v1001 = vmul.f32 %v673, %v996
      %v1002 = vmul.f32 %v674, %v994
      %v1003 = vmul.f32 %v675, %v992
      %v1004 = vmul.f32 %v676, %v996
      %v1005 = vmul.f32 %v677, %v994
      %s1006 = scalar_lea.vmem %s1, 64
      %v1007 = vld [vmem:[%s1006] sm:$0xf]
      %v1008 = vld [vmem:[%s1006 + $0x4] sm:$0xf]
      %v1009 = vpack.c.bf16 %v1003, %v1000
      %v1010 = vpack.c.bf16 %v1004, %v1001
      %v1011 = vpack.c.bf16 %v1005, %v1002
      %v1014 = vunpack.c.l.b16 %v1007
      %v1015 = vunpack.c.l.b16 %v1008
      %v1016 = vpack.c.b16 %v1015, %v1014
      %1020 = vrot.lane.b32.xlu0 %v1009, 111
      %v1021 = vpop.permute.xlu0 %1020
      %1022 = vrot.lane.b32.xlu0 %v1010, 111
      %v1023 = vpop.permute.xlu0 %1022
      %1024 = vrot.lane.b32.xlu0 %v1011, 111
      %v1025 = vpop.permute.xlu0 %1024
      %vm1026 = vcmask 908288
      %v1027 = vsel %vm1026, %v1021, %v1023
      %v1028 = vsel %vm1026, %v1023, %v1025
      %v1032 = vsel %vm298, %v1016, 0
      %1034 = vmatprep.subr.bf16.mxu0 %v1028
      %1035 = vmatpush1.bf16.msra.mxu0 %v1027
      %1036 = vmatprep.subr.bf16.mxu0 0
      %1037 = vmatpush1.bf16.msra.mxu0 0
      %1038 = vmatprep.subr.bf16.mxu0 0
      %1039 = vmatpush1.bf16.msra.mxu0 0
      %1040 = vmatprep.subr.bf16.mxu0 0
      %1041 = vmatpush1.bf16.msra.mxu0 0
      %1042 = vmatprep.subr.bf16.mxu0 0
      %1043 = vmatpush1.bf16.msra.mxu0 0
      %1044 = vmatprep.subr.bf16.mxu0 0
      %1045 = vmatpush1.bf16.msra.mxu0 0
      %1046 = vmatprep.subr.bf16.mxu0 0
      %1047 = vmatpush1.bf16.msra.mxu0 0
      %1048 = vmatprep.subr.bf16.mxu0 0
      %1049 = vmatpush1.bf16.msra.mxu0 0
      %1050 = vmatprep.subr.bf16.mxu0 0
      %1051 = vmatpush1.bf16.msra.mxu0 0
      %1052 = vmatprep.subr.bf16.mxu0 0
      %1053 = vmatpush1.bf16.msra.mxu0 0
      %1054 = vmatprep.subr.bf16.mxu0 0
      %1055 = vmatpush1.bf16.msra.mxu0 0
      %1056 = vmatprep.subr.bf16.mxu0 0
      %1057 = vmatpush1.bf16.msra.mxu0 0
      %1058 = vmatprep.subr.bf16.mxu0 0
      %1059 = vmatpush1.bf16.msra.mxu0 0
      %1060 = vmatprep.subr.bf16.mxu0 0
      %1061 = vmatpush1.bf16.msra.mxu0 0
      %1062 = vmatprep.subr.bf16.mxu0 0
      %1063 = vmatpush1.bf16.msra.mxu0 0
      %1064 = vmatprep.subr.bf16.mxu0 0
      %1065 = vmatpush1.bf16.msra.mxu0 0
      %1066 = vmatprep.mubr.bf16.mxu0 0
      %1067 = vmatmul.mubr.bf16.gmra.mrb[0].mxu0 %v1032
      %v1068 = vpop.f32.mrb[0].mxu0
      %v1069 = vadd.f32 0.0, %v1068
      %v1070 = vpop.f32.mrb[0].mxu0
      %v1071 = vadd.f32 0.0, %v1070
      %v1072 = vpop.f32.mrb[0].mxu0
      %v1073 = vadd.f32 0.0, %v1072
      %v1074 = vpop.f32.mrb[0].mxu0
      %v1075 = vadd.f32 0.0, %v1074
      %1076 = vdwg.mxu0
      %v1077 = vadd.f32 %v976, %v1069
      %v1078 = vadd.f32 %v977, %v1071
      %v1079 = vadd.f32 %v978, %v1073
      %v1080 = vadd.f32 %v979, %v1075
      %v1081 = vld [vmem:[%s2] sm:$0xff]
      %v1082 = vld [vmem:[%s2 + $0x8] sm:$0xff]
      %1084 = vset.pattern.permute.xlu0 0
      %1085 = vperm.xlu0 %1084, %v1081
      %v1086 = vpop.permute.xlu0 %1085
      %1089 = vset.pattern.permute.xlu0 0
      %1090 = vperm.xlu0 %1089, %v1082
      %v1091 = vpop.permute.xlu0 %1090
      %v1093 = vadd.f32 %v1077, %v1086
      %v1094 = vadd.f32 %v1078, %v1086
      %v1095 = vadd.f32 %v1079, %v1091
      %v1096 = vadd.f32 %v1080, %v1091
      %v1097 = vadd.f32 %v1093, %v1094
      %1098 = vadd.xlane.f32.xlu0 %v1097
      %v1099 = vpop.xlane.xlu0 %1098
      %v1100 = vadd.f32 %v1095, %v1096
      %1101 = vadd.xlane.f32.xlu0 %v1100
      %v1102 = vpop.xlane.xlu0 %1101
      %v1103 = vrcp.pop 256.0
      %v1104 = vmul.f32 %v1099, %v1103
      %v1105 = vmul.f32 %v1102, %v1103
      %v1106 = vsub.f32 %v1093, %v1104
      %v1107 = vsub.f32 %v1094, %v1104
      %v1108 = vsub.f32 %v1095, %v1105
      %v1109 = vsub.f32 %v1096, %v1105
      %v1110 = vmul.f32 %v1106, %v1106
      %v1111 = vmul.f32 %v1107, %v1107
      %v1112 = vmul.f32 %v1108, %v1108
      %v1113 = vmul.f32 %v1109, %v1109
      %v1114 = vadd.f32 %v1110, %v1111
      %1115 = vadd.xlane.f32.xlu0 %v1114
      %v1116 = vpop.xlane.xlu0 %1115
      %v1117 = vadd.f32 %v1112, %v1113
      %1118 = vadd.xlane.f32.xlu0 %v1117
      %v1119 = vpop.xlane.xlu0 %1118
      %v1120 = vmul.f32 %v1116, %v1103
      %v1121 = vmul.f32 %v1119, %v1103
      %v1122 = vadd.f32 %v1120, 1e-05
      %v1123 = vadd.f32 %v1121, 1e-05
      %v1124 = vrsqrt.pop %v1122
      %v1125 = vrsqrt.pop %v1123
      %v1126 = vmul.f32 %v1106, %v1124
      %v1127 = vmul.f32 %v1107, %v1124
      %v1128 = vmul.f32 %v1108, %v1125
      %v1129 = vmul.f32 %v1109, %v1125
      %v1130 = vmax.f32 %v1126, 0.0
      %v1131 = vmax.f32 %v1127, 0.0
      %v1132 = vmax.f32 %v1128, 0.0
      %v1133 = vmax.f32 %v1129, 0.0
      %1134 = vst [vmem:[#allocation2] sm:$0xff] %v1130
      %1135 = vst [vmem:[#allocation2 + $0x8] sm:$0xff] %v1131
      %1136 = vst [vmem:[#allocation2 + $0x20] sm:$0xff] %v1132
      %1137 = vst [vmem:[#allocation2 + $0x28] sm:$0xff] %v1133
      %1138 = vst [vmem:[#allocation2 + $0x10] sm:$0xff] %v1130
      %1139 = vst [vmem:[#allocation2 + $0x18] sm:$0xff] %v1131
      %1140 = vst [vmem:[#allocation2 + $0x30] sm:$0xff] %v1132
      %1141 = vst [vmem:[#allocation2 + $0x38] sm:$0xff] %v1133
      %v1142 = vld [vmem:[#allocation2 + $0x8] sm:$0xff]
      %v1143 = vld [vmem:[#allocation2 + $0x10] sm:$0xff]
      %v1144 = vld [vmem:[#allocation2 + $0x18] sm:$0xff]
      %v1145 = vld [vmem:[#allocation2 + $0x28] sm:$0xff]
      %v1146 = vld [vmem:[#allocation2 + $0x30] sm:$0xff]
      %v1147 = vld [vmem:[#allocation2 + $0x38] sm:$0xff]
      %v1148 = vld [vmem:[%s3] sm:$0x3]
      %v1150 = vlaneseq
      %v1151 = vshrl.u32 %v1150, 7
      %v1152 = vsub.s32 0, %v1151
      %v1153 = vrot.slane %v1148, %v1152
      %v1154 = vlaneseq
      %v1155 = vshrl.u32 %v1154, 7
      %v1156 = vsub.s32 1, %v1155
      %v1157 = vrot.slane %v1148, %v1156
      %1158 = vrot.lane.b32.xlu0 %v1153, 111
      %v1159 = vpop.permute.xlu0 %1158
      %1160 = vrot.lane.b32.xlu0 %v1157, 111
      %v1161 = vpop.permute.xlu0 %1160
      %v1162 = vsel %vm231, %v1159, %v1161
      %v1166 = vmul.f32 %v1142, %v1159
      %v1167 = vmul.f32 %v1143, %v1162
      %v1168 = vmul.f32 %v1144, %v1161
      %v1169 = vmul.f32 %v1145, %v1159
      %v1170 = vmul.f32 %v1146, %v1162
      %v1171 = vmul.f32 %v1147, %v1161
      %s1172 = scalar_lea.vmem %s1, 72
      %v1173 = vld [vmem:[%s1172] sm:$0xf]
      %v1174 = vld [vmem:[%s1172 + $0x4] sm:$0xf]
      %v1175 = vpack.c.bf16 %v1169, %v1166
      %v1176 = vpack.c.bf16 %v1170, %v1167
      %v1177 = vpack.c.bf16 %v1171, %v1168
      %v1178 = vld [vmem:[%s247] sm:$0x3]
      %v1180 = vlaneseq
      %v1181 = vshrl.u32 %v1180, 7
      %v1182 = vsub.s32 0, %v1181
      %v1183 = vrot.slane %v1178, %v1182
      %v1184 = vlaneseq
      %v1185 = vshrl.u32 %v1184, 7
      %v1186 = vsub.s32 1, %v1185
      %v1187 = vrot.slane %v1178, %v1186
      %1188 = vrot.lane.b32.xlu0 %v1183, 112
      %v1189 = vpop.permute.xlu0 %1188
      %1190 = vrot.lane.b32.xlu0 %v1187, 112
      %v1191 = vpop.permute.xlu0 %1190
      %v1192 = vsel %vm262, %v1189, %v1191
      %v1196 = vmul.f32 %v1142, %v1189
      %v1197 = vmul.f32 %v1143, %v1192
      %v1198 = vmul.f32 %v1144, %v1191
      %v1199 = vmul.f32 %v1145, %v1189
      %v1200 = vmul.f32 %v1146, %v1192
      %v1201 = vmul.f32 %v1147, %v1191
      %s1202 = scalar_lea.vmem %s1, 80
      %v1203 = vld [vmem:[%s1202] sm:$0xf]
      %v1204 = vld [vmem:[%s1202 + $0x4] sm:$0xf]
      %v1205 = vpack.c.bf16 %v1199, %v1196
      %v1206 = vpack.c.bf16 %v1200, %v1197
      %v1207 = vpack.c.bf16 %v1201, %v1198
      %v1210 = vunpack.c.l.b16 %v1203
      %v1211 = vunpack.c.l.b16 %v1204
      %v1212 = vpack.c.b16 %v1211, %v1210
      %1216 = vrot.lane.b32.xlu0 %v1205, 16
      %v1217 = vpop.permute.xlu0 %1216
      %1218 = vrot.lane.b32.xlu0 %v1206, 16
      %v1219 = vpop.permute.xlu0 %1218
      %1220 = vrot.lane.b32.xlu0 %v1207, 16
      %v1221 = vpop.permute.xlu0 %1220
      %v1222 = vsel %vm293, %v1217, %v1219
      %v1223 = vsel %vm293, %v1219, %v1221
      %v1227 = vsel %vm298, %v1212, 0
      %1229 = vmatprep.subr.bf16.mxu0 %v1223
      %1230 = vmatpush1.bf16.msra.mxu0 %v1222
      %1231 = vmatprep.subr.bf16.mxu0 0
      %1232 = vmatpush1.bf16.msra.mxu0 0
      %1233 = vmatprep.subr.bf16.mxu0 0
      %1234 = vmatpush1.bf16.msra.mxu0 0
      %1235 = vmatprep.subr.bf16.mxu0 0
      %1236 = vmatpush1.bf16.msra.mxu0 0
      %1237 = vmatprep.subr.bf16.mxu0 0
      %1238 = vmatpush1.bf16.msra.mxu0 0
      %1239 = vmatprep.subr.bf16.mxu0 0
      %1240 = vmatpush1.bf16.msra.mxu0 0
      %1241 = vmatprep.subr.bf16.mxu0 0
      %1242 = vmatpush1.bf16.msra.mxu0 0
      %1243 = vmatprep.subr.bf16.mxu0 0
      %1244 = vmatpush1.bf16.msra.mxu0 0
      %1245 = vmatprep.subr.bf16.mxu0 0
      %1246 = vmatpush1.bf16.msra.mxu0 0
      %1247 = vmatprep.subr.bf16.mxu0 0
      %1248 = vmatpush1.bf16.msra.mxu0 0
      %1249 = vmatprep.subr.bf16.mxu0 0
      %1250 = vmatpush1.bf16.msra.mxu0 0
      %1251 = vmatprep.subr.bf16.mxu0 0
      %1252 = vmatpush1.bf16.msra.mxu0 0
      %1253 = vmatprep.subr.bf16.mxu0 0
      %1254 = vmatpush1.bf16.msra.mxu0 0
      %1255 = vmatprep.subr.bf16.mxu0 0
      %1256 = vmatpush1.bf16.msra.mxu0 0
      %1257 = vmatprep.subr.bf16.mxu0 0
      %1258 = vmatpush1.bf16.msra.mxu0 0
      %1259 = vmatprep.subr.bf16.mxu0 0
      %1260 = vmatpush1.bf16.msra.mxu0 0
      %1261 = vmatprep.mubr.bf16.mxu0 0
      %1262 = vmatmul.mubr.bf16.gmra.mrb[0].mxu0 %v1227
      %v1263 = vpop.f32.mrb[0].mxu0
      %v1264 = vadd.f32 0.0, %v1263
      %v1265 = vpop.f32.mrb[0].mxu0
      %v1266 = vadd.f32 0.0, %v1265
      %v1267 = vpop.f32.mrb[0].mxu0
      %v1268 = vadd.f32 0.0, %v1267
      %v1269 = vpop.f32.mrb[0].mxu0
      %v1270 = vadd.f32 0.0, %v1269
      %1271 = vdwg.mxu0
      %v1274 = vunpack.c.l.b16 %v1173
      %v1275 = vunpack.c.l.b16 %v1174
      %v1276 = vpack.c.b16 %v1275, %v1274
      %1280 = vrot.lane.b32.xlu0 %v1175, 17
      %v1281 = vpop.permute.xlu0 %1280
      %1282 = vrot.lane.b32.xlu0 %v1176, 17
      %v1283 = vpop.permute.xlu0 %1282
      %1284 = vrot.lane.b32.xlu0 %v1177, 17
      %v1285 = vpop.permute.xlu0 %1284
      %v1286 = vsel %vm359, %v1281, %v1283
      %v1287 = vsel %vm359, %v1283, %v1285
      %v1291 = vsel %vm298, %v1276, 0
      %1293 = vmatprep.subr.bf16.mxu0 %v1287
      %1294 = vmatpush1.bf16.msra.mxu0 %v1286
      %1295 = vmatprep.subr.bf16.mxu0 0
      %1296 = vmatpush1.bf16.msra.mxu0 0
      %1297 = vmatprep.subr.bf16.mxu0 0
      %1298 = vmatpush1.bf16.msra.mxu0 0
      %1299 = vmatprep.subr.bf16.mxu0 0
      %1300 = vmatpush1.bf16.msra.mxu0 0
      %1301 = vmatprep.subr.bf16.mxu0 0
      %1302 = vmatpush1.bf16.msra.mxu0 0
      %1303 = vmatprep.subr.bf16.mxu0 0
      %1304 = vmatpush1.bf16.msra.mxu0 0
      %1305 = vmatprep.subr.bf16.mxu0 0
      %1306 = vmatpush1.bf16.msra.mxu0 0
      %1307 = vmatprep.subr.bf16.mxu0 0
      %1308 = vmatpush1.bf16.msra.mxu0 0
      %1309 = vmatprep.subr.bf16.mxu0 0
      %1310 = vmatpush1.bf16.msra.mxu0 0
      %1311 = vmatprep.subr.bf16.mxu0 0
      %1312 = vmatpush1.bf16.msra.mxu0 0
      %1313 = vmatprep.subr.bf16.mxu0 0
      %1314 = vmatpush1.bf16.msra.mxu0 0
      %1315 = vmatprep.subr.bf16.mxu0 0
      %1316 = vmatpush1.bf16.msra.mxu0 0
      %1317 = vmatprep.subr.bf16.mxu0 0
      %1318 = vmatpush1.bf16.msra.mxu0 0
      %1319 = vmatprep.subr.bf16.mxu0 0
      %1320 = vmatpush1.bf16.msra.mxu0 0
      %1321 = vmatprep.subr.bf16.mxu0 0
      %1322 = vmatpush1.bf16.msra.mxu0 0
      %1323 = vmatprep.subr.bf16.mxu0 0
      %1324 = vmatpush1.bf16.msra.mxu0 0
      %1325 = vmatprep.mubr.bf16.mxu0 0
      %1326 = vmatmul.mubr.bf16.gmra.mrb[0].mxu0 %v1291
      %v1327 = vpop.f32.mrb[0].mxu0
      %v1328 = vadd.f32 %v1264, %v1327
      %v1329 = vpop.f32.mrb[0].mxu0
      %v1330 = vadd.f32 %v1266, %v1329
      %v1331 = vpop.f32.mrb[0].mxu0
      %v1332 = vadd.f32 %v1268, %v1331
      %v1333 = vpop.f32.mrb[0].mxu0
      %v1334 = vadd.f32 %v1270, %v1333
      %1335 = vdwg.mxu0
      %v1336 = vld [vmem:[%s410] sm:$0x3]
      %v1338 = vlaneseq
      %v1339 = vshrl.u32 %v1338, 7
      %v1340 = vsub.s32 0, %v1339
      %v1341 = vrot.slane %v1336, %v1340
      %v1342 = vlaneseq
      %v1343 = vshrl.u32 %v1342, 7
      %v1344 = vsub.s32 1, %v1343
      %v1345 = vrot.slane %v1336, %v1344
      %1346 = vrot.lane.b32.xlu0 %v1341, 113
      %v1347 = vpop.permute.xlu0 %1346
      %1348 = vrot.lane.b32.xlu0 %v1345, 113
      %v1349 = vpop.permute.xlu0 %1348
      %v1350 = vsel %vm425, %v1347, %v1349
      %v1354 = vmul.f32 %v1142, %v1347
      %v1355 = vmul.f32 %v1143, %v1350
      %v1356 = vmul.f32 %v1144, %v1349
      %v1357 = vmul.f32 %v1145, %v1347
      %v1358 = vmul.f32 %v1146, %v1350
      %v1359 = vmul.f32 %v1147, %v1349
      %s1360 = scalar_lea.vmem %s1, 88
      %v1361 = vld [vmem:[%s1360] sm:$0xf]
      %v1362 = vld [vmem:[%s1360 + $0x4] sm:$0xf]
      %v1363 = vpack.c.bf16 %v1357, %v1354
      %v1364 = vpack.c.bf16 %v1358, %v1355
      %v1365 = vpack.c.bf16 %v1359, %v1356
      %v1368 = vunpack.c.l.b16 %v1361
      %v1369 = vunpack.c.l.b16 %v1362
      %v1370 = vpack.c.b16 %v1369, %v1368
      %1374 = vrot.lane.b32.xlu0 %v1363, 15
      %v1375 = vpop.permute.xlu0 %1374
      %1376 = vrot.lane.b32.xlu0 %v1364, 15
      %v1377 = vpop.permute.xlu0 %1376
      %1378 = vrot.lane.b32.xlu0 %v1365, 15
      %v1379 = vpop.permute.xlu0 %1378
      %v1380 = vsel %vm456, %v1375, %v1377
      %v1381 = vsel %vm456, %v1377, %v1379
      %v1385 = vsel %vm298, %v1370, 0
      %1387 = vmatprep.subr.bf16.mxu0 %v1381
      %1388 = vmatpush1.bf16.msra.mxu0 %v1380
      %1389 = vmatprep.subr.bf16.mxu0 0
      %1390 = vmatpush1.bf16.msra.mxu0 0
      %1391 = vmatprep.subr.bf16.mxu0 0
      %1392 = vmatpush1.bf16.msra.mxu0 0
      %1393 = vmatprep.subr.bf16.mxu0 0
      %1394 = vmatpush1.bf16.msra.mxu0 0
      %1395 = vmatprep.subr.bf16.mxu0 0
      %1396 = vmatpush1.bf16.msra.mxu0 0
      %1397 = vmatprep.subr.bf16.mxu0 0
      %1398 = vmatpush1.bf16.msra.mxu0 0
      %1399 = vmatprep.subr.bf16.mxu0 0
      %1400 = vmatpush1.bf16.msra.mxu0 0
      %1401 = vmatprep.subr.bf16.mxu0 0
      %1402 = vmatpush1.bf16.msra.mxu0 0
      %1403 = vmatprep.subr.bf16.mxu0 0
      %1404 = vmatpush1.bf16.msra.mxu0 0
      %1405 = vmatprep.subr.bf16.mxu0 0
      %1406 = vmatpush1.bf16.msra.mxu0 0
      %1407 = vmatprep.subr.bf16.mxu0 0
      %1408 = vmatpush1.bf16.msra.mxu0 0
      %1409 = vmatprep.subr.bf16.mxu0 0
      %1410 = vmatpush1.bf16.msra.mxu0 0
      %1411 = vmatprep.subr.bf16.mxu0 0
      %1412 = vmatpush1.bf16.msra.mxu0 0
      %1413 = vmatprep.subr.bf16.mxu0 0
      %1414 = vmatpush1.bf16.msra.mxu0 0
      %1415 = vmatprep.subr.bf16.mxu0 0
      %1416 = vmatpush1.bf16.msra.mxu0 0
      %1417 = vmatprep.subr.bf16.mxu0 0
      %1418 = vmatpush1.bf16.msra.mxu0 0
      %1419 = vmatprep.mubr.bf16.mxu0 0
      %1420 = vmatmul.mubr.bf16.gmra.mrb[0].mxu0 %v1385
      %v1421 = vpop.f32.mrb[0].mxu0
      %v1422 = vadd.f32 0.0, %v1421
      %v1423 = vpop.f32.mrb[0].mxu0
      %v1424 = vadd.f32 0.0, %v1423
      %v1425 = vpop.f32.mrb[0].mxu0
      %v1426 = vadd.f32 0.0, %v1425
      %v1427 = vpop.f32.mrb[0].mxu0
      %v1428 = vadd.f32 0.0, %v1427
      %1429 = vdwg.mxu0
      %v1430 = vadd.f32 %v1328, %v1422
      %v1431 = vadd.f32 %v1330, %v1424
      %v1432 = vadd.f32 %v1332, %v1426
      %v1433 = vadd.f32 %v1334, %v1428
      %v1434 = vld [vmem:[%s511] sm:$0x3]
      %v1436 = vlaneseq
      %v1437 = vshrl.u32 %v1436, 7
      %v1438 = vsub.s32 0, %v1437
      %v1439 = vrot.slane %v1434, %v1438
      %v1440 = vlaneseq
      %v1441 = vshrl.u32 %v1440, 7
      %v1442 = vsub.s32 1, %v1441
      %v1443 = vrot.slane %v1434, %v1442
      %1444 = vrot.lane.b32.xlu0 %v1439, 127
      %v1445 = vpop.permute.xlu0 %1444
      %1446 = vrot.lane.b32.xlu0 %v1443, 127
      %v1447 = vpop.permute.xlu0 %1446
      %v1448 = vsel %vm526, %v1445, %v1447
      %v1452 = vmul.f32 %v1142, %v1445
      %v1453 = vmul.f32 %v1143, %v1448
      %v1454 = vmul.f32 %v1144, %v1447
      %v1455 = vmul.f32 %v1145, %v1445
      %v1456 = vmul.f32 %v1146, %v1448
      %v1457 = vmul.f32 %v1147, %v1447
      %s1458 = scalar_lea.vmem %s1, 96
      %v1459 = vld [vmem:[%s1458] sm:$0xf]
      %v1460 = vld [vmem:[%s1458 + $0x4] sm:$0xf]
      %v1461 = vpack.c.bf16 %v1455, %v1452
      %v1462 = vpack.c.bf16 %v1456, %v1453
      %v1463 = vpack.c.bf16 %v1457, %v1454
      %v1466 = vunpack.c.l.b16 %v1459
      %v1467 = vunpack.c.l.b16 %v1460
      %v1468 = vpack.c.b16 %v1467, %v1466
      %1472 = vrot.lane.b32.xlu0 %v1461, 1
      %v1473 = vpop.permute.xlu0 %1472
      %1474 = vrot.lane.b32.xlu0 %v1462, 1
      %v1475 = vpop.permute.xlu0 %1474
      %1476 = vrot.lane.b32.xlu0 %v1463, 1
      %v1477 = vpop.permute.xlu0 %1476
      %v1478 = vsel %vm557, %v1473, %v1475
      %v1479 = vsel %vm557, %v1475, %v1477
      %v1483 = vsel %vm298, %v1468, 0
      %1485 = vmatprep.subr.bf16.mxu0 %v1479
      %1486 = vmatpush1.bf16.msra.mxu0 %v1478
      %1487 = vmatprep.subr.bf16.mxu0 0
      %1488 = vmatpush1.bf16.msra.mxu0 0
      %1489 = vmatprep.subr.bf16.mxu0 0
      %1490 = vmatpush1.bf16.msra.mxu0 0
      %1491 = vmatprep.subr.bf16.mxu0 0
      %1492 = vmatpush1.bf16.msra.mxu0 0
      %1493 = vmatprep.subr.bf16.mxu0 0
      %1494 = vmatpush1.bf16.msra.mxu0 0
      %1495 = vmatprep.subr.bf16.mxu0 0
      %1496 = vmatpush1.bf16.msra.mxu0 0
      %1497 = vmatprep.subr.bf16.mxu0 0
      %1498 = vmatpush1.bf16.msra.mxu0 0
      %1499 = vmatprep.subr.bf16.mxu0 0
      %1500 = vmatpush1.bf16.msra.mxu0 0
      %1501 = vmatprep.subr.bf16.mxu0 0
      %1502 = vmatpush1.bf16.msra.mxu0 0
      %1503 = vmatprep.subr.bf16.mxu0 0
      %1504 = vmatpush1.bf16.msra.mxu0 0
      %1505 = vmatprep.subr.bf16.mxu0 0
      %1506 = vmatpush1.bf16.msra.mxu0 0
      %1507 = vmatprep.subr.bf16.mxu0 0
      %1508 = vmatpush1.bf16.msra.mxu0 0
      %1509 = vmatprep.subr.bf16.mxu0 0
      %1510 = vmatpush1.bf16.msra.mxu0 0
      %1511 = vmatprep.subr.bf16.mxu0 0
      %1512 = vmatpush1.bf16.msra.mxu0 0
      %1513 = vmatprep.subr.bf16.mxu0 0
      %1514 = vmatpush1.bf16.msra.mxu0 0
      %1515 = vmatprep.subr.bf16.mxu0 0
      %1516 = vmatpush1.bf16.msra.mxu0 0
      %1517 = vmatprep.mubr.bf16.mxu0 0
      %1518 = vmatmul.mubr.bf16.gmra.mrb[0].mxu0 %v1483
      %v1519 = vpop.f32.mrb[0].mxu0
      %v1520 = vadd.f32 0.0, %v1519
      %v1521 = vpop.f32.mrb[0].mxu0
      %v1522 = vadd.f32 0.0, %v1521
      %v1523 = vpop.f32.mrb[0].mxu0
      %v1524 = vadd.f32 0.0, %v1523
      %v1525 = vpop.f32.mrb[0].mxu0
      %v1526 = vadd.f32 0.0, %v1525
      %1527 = vdwg.mxu0
      %v1528 = vadd.f32 %v1430, %v1520
      %v1529 = vadd.f32 %v1431, %v1522
      %v1530 = vadd.f32 %v1432, %v1524
      %v1531 = vadd.f32 %v1433, %v1526
      %s1532 = scalar_lea.vmem %s1, 104
      %v1533 = vld [vmem:[%s1532] sm:$0xf]
      %v1534 = vld [vmem:[%s1532 + $0x4] sm:$0xf]
      %v1535 = vpack.c.bf16 %v1132, %v1130
      %v1536 = vpack.c.bf16 %v1133, %v1131
      %v1539 = vunpack.c.l.b16 %v1533
      %v1540 = vunpack.c.l.b16 %v1534
      %v1541 = vpack.c.b16 %v1540, %v1539
      %v1543 = vsel %vm298, %v1541, 0
      %1545 = vmatprep.subr.bf16.mxu0 %v1536
      %1546 = vmatpush1.bf16.msra.mxu0 %v1535
      %1547 = vmatprep.subr.bf16.mxu0 0
      %1548 = vmatpush1.bf16.msra.mxu0 0
      %1549 = vmatprep.subr.bf16.mxu0 0
      %1550 = vmatpush1.bf16.msra.mxu0 0
      %1551 = vmatprep.subr.bf16.mxu0 0
      %1552 = vmatpush1.bf16.msra.mxu0 0
      %1553 = vmatprep.subr.bf16.mxu0 0
      %1554 = vmatpush1.bf16.msra.mxu0 0
      %1555 = vmatprep.subr.bf16.mxu0 0
      %1556 = vmatpush1.bf16.msra.mxu0 0
      %1557 = vmatprep.subr.bf16.mxu0 0
      %1558 = vmatpush1.bf16.msra.mxu0 0
      %1559 = vmatprep.subr.bf16.mxu0 0
      %1560 = vmatpush1.bf16.msra.mxu0 0
      %1561 = vmatprep.subr.bf16.mxu0 0
      %1562 = vmatpush1.bf16.msra.mxu0 0
      %1563 = vmatprep.subr.bf16.mxu0 0
      %1564 = vmatpush1.bf16.msra.mxu0 0
      %1565 = vmatprep.subr.bf16.mxu0 0
      %1566 = vmatpush1.bf16.msra.mxu0 0
      %1567 = vmatprep.subr.bf16.mxu0 0
      %1568 = vmatpush1.bf16.msra.mxu0 0
      %1569 = vmatprep.subr.bf16.mxu0 0
      %1570 = vmatpush1.bf16.msra.mxu0 0
      %1571 = vmatprep.subr.bf16.mxu0 0
      %1572 = vmatpush1.bf16.msra.mxu0 0
      %1573 = vmatprep.subr.bf16.mxu0 0
      %1574 = vmatpush1.bf16.msra.mxu0 0
      %1575 = vmatprep.subr.bf16.mxu0 0
      %1576 = vmatpush1.bf16.msra.mxu0 0
      %1577 = vmatprep.mubr.bf16.mxu0 0
      %1578 = vmatmul.mubr.bf16.gmra.mrb[0].mxu0 %v1543
      %v1579 = vpop.f32.mrb[0].mxu0
      %v1580 = vadd.f32 0.0, %v1579
      %v1581 = vpop.f32.mrb[0].mxu0
      %v1582 = vadd.f32 0.0, %v1581
      %v1583 = vpop.f32.mrb[0].mxu0
      %v1584 = vadd.f32 0.0, %v1583
      %v1585 = vpop.f32.mrb[0].mxu0
      %v1586 = vadd.f32 0.0, %v1585
      %1587 = vdwg.mxu0
      %v1588 = vadd.f32 %v1528, %v1580
      %v1589 = vadd.f32 %v1529, %v1582
      %v1590 = vadd.f32 %v1530, %v1584
      %v1591 = vadd.f32 %v1531, %v1586
      %v1592 = vld [vmem:[#allocation2] sm:$0xff]
      %v1593 = vld [vmem:[#allocation2 + $0x8] sm:$0xff]
      %v1594 = vld [vmem:[#allocation2 + $0x10] sm:$0xff]
      %v1595 = vld [vmem:[#allocation2 + $0x20] sm:$0xff]
      %v1596 = vld [vmem:[#allocation2 + $0x28] sm:$0xff]
      %v1597 = vld [vmem:[#allocation2 + $0x30] sm:$0xff]
      %v1598 = vld [vmem:[%s678] sm:$0x3]
      %v1600 = vlaneseq
      %v1601 = vshrl.u32 %v1600, 7
      %v1602 = vsub.s32 0, %v1601
      %v1603 = vrot.slane %v1598, %v1602
      %v1604 = vlaneseq
      %v1605 = vshrl.u32 %v1604, 7
      %v1606 = vsub.s32 1, %v1605
      %v1607 = vrot.slane %v1598, %v1606
      %1608 = vrot.lane.b32.xlu0 %v1603, 1
      %v1609 = vpop.permute.xlu0 %1608
      %1610 = vrot.lane.b32.xlu0 %v1607, 1
      %v1611 = vpop.permute.xlu0 %1610
      %v1612 = vsel %vm693, %v1609, %v1611
      %v1616 = vmul.f32 %v1592, %v1609
      %v1617 = vmul.f32 %v1593, %v1612
      %v1618 = vmul.f32 %v1594, %v1611
      %v1619 = vmul.f32 %v1595, %v1609
      %v1620 = vmul.f32 %v1596, %v1612
      %v1621 = vmul.f32 %v1597, %v1611
      %s1622 = scalar_lea.vmem %s1, 112
      %v1623 = vld [vmem:[%s1622] sm:$0xf]
      %v1624 = vld [vmem:[%s1622 + $0x4] sm:$0xf]
      %v1625 = vpack.c.bf16 %v1619, %v1616
      %v1626 = vpack.c.bf16 %v1620, %v1617
      %v1627 = vpack.c.bf16 %v1621, %v1618
      %v1630 = vunpack.c.l.b16 %v1623
      %v1631 = vunpack.c.l.b16 %v1624
      %v1632 = vpack.c.b16 %v1631, %v1630
      %1636 = vrot.lane.b32.xlu0 %v1625, 127
      %v1637 = vpop.permute.xlu0 %1636
      %1638 = vrot.lane.b32.xlu0 %v1626, 127
      %v1639 = vpop.permute.xlu0 %1638
      %1640 = vrot.lane.b32.xlu0 %v1627, 127
      %v1641 = vpop.permute.xlu0 %1640
      %v1642 = vsel %vm724, %v1637, %v1639
      %v1643 = vsel %vm724, %v1639, %v1641
      %v1647 = vsel %vm298, %v1632, 0
      %1649 = vmatprep.subr.bf16.mxu0 %v1643
      %1650 = vmatpush1.bf16.msra.mxu0 %v1642
      %1651 = vmatprep.subr.bf16.mxu0 0
      %1652 = vmatpush1.bf16.msra.mxu0 0
      %1653 = vmatprep.subr.bf16.mxu0 0
      %1654 = vmatpush1.bf16.msra.mxu0 0
      %1655 = vmatprep.subr.bf16.mxu0 0
      %1656 = vmatpush1.bf16.msra.mxu0 0
      %1657 = vmatprep.subr.bf16.mxu0 0
      %1658 = vmatpush1.bf16.msra.mxu0 0
      %1659 = vmatprep.subr.bf16.mxu0 0
      %1660 = vmatpush1.bf16.msra.mxu0 0
      %1661 = vmatprep.subr.bf16.mxu0 0
      %1662 = vmatpush1.bf16.msra.mxu0 0
      %1663 = vmatprep.subr.bf16.mxu0 0
      %1664 = vmatpush1.bf16.msra.mxu0 0
      %1665 = vmatprep.subr.bf16.mxu0 0
      %1666 = vmatpush1.bf16.msra.mxu0 0
      %1667 = vmatprep.subr.bf16.mxu0 0
      %1668 = vmatpush1.bf16.msra.mxu0 0
      %1669 = vmatprep.subr.bf16.mxu0 0
      %1670 = vmatpush1.bf16.msra.mxu0 0
      %1671 = vmatprep.subr.bf16.mxu0 0
      %1672 = vmatpush1.bf16.msra.mxu0 0
      %1673 = vmatprep.subr.bf16.mxu0 0
      %1674 = vmatpush1.bf16.msra.mxu0 0
      %1675 = vmatprep.subr.bf16.mxu0 0
      %1676 = vmatpush1.bf16.msra.mxu0 0
      %1677 = vmatprep.subr.bf16.mxu0 0
      %1678 = vmatpush1.bf16.msra.mxu0 0
      %1679 = vmatprep.subr.bf16.mxu0 0
      %1680 = vmatpush1.bf16.msra.mxu0 0
      %1681 = vmatprep.mubr.bf16.mxu0 0
      %1682 = vmatmul.mubr.bf16.gmra.mrb[0].mxu0 %v1647
      %v1683 = vpop.f32.mrb[0].mxu0
      %v1684 = vadd.f32 0.0, %v1683
      %v1685 = vpop.f32.mrb[0].mxu0
      %v1686 = vadd.f32 0.0, %v1685
      %v1687 = vpop.f32.mrb[0].mxu0
      %v1688 = vadd.f32 0.0, %v1687
      %v1689 = vpop.f32.mrb[0].mxu0
      %v1690 = vadd.f32 0.0, %v1689
      %1691 = vdwg.mxu0
      %v1692 = vadd.f32 %v1588, %v1684
      %v1693 = vadd.f32 %v1589, %v1686
      %v1694 = vadd.f32 %v1590, %v1688
      %v1695 = vadd.f32 %v1591, %v1690
      %v1696 = vld [vmem:[%s779] sm:$0x3]
      %v1698 = vlaneseq
      %v1699 = vshrl.u32 %v1698, 7
      %v1700 = vsub.s32 0, %v1699
      %v1701 = vrot.slane %v1696, %v1700
      %v1702 = vlaneseq
      %v1703 = vshrl.u32 %v1702, 7
      %v1704 = vsub.s32 1, %v1703
      %v1705 = vrot.slane %v1696, %v1704
      %1706 = vrot.lane.b32.xlu0 %v1701, 15
      %v1707 = vpop.permute.xlu0 %1706
      %1708 = vrot.lane.b32.xlu0 %v1705, 15
      %v1709 = vpop.permute.xlu0 %1708
      %v1710 = vsel %vm794, %v1707, %v1709
      %v1714 = vmul.f32 %v1592, %v1707
      %v1715 = vmul.f32 %v1593, %v1710
      %v1716 = vmul.f32 %v1594, %v1709
      %v1717 = vmul.f32 %v1595, %v1707
      %v1718 = vmul.f32 %v1596, %v1710
      %v1719 = vmul.f32 %v1597, %v1709
      %s1720 = scalar_lea.vmem %s1, 120
      %v1721 = vld [vmem:[%s1720] sm:$0xf]
      %v1722 = vld [vmem:[%s1720 + $0x4] sm:$0xf]
      %v1723 = vpack.c.bf16 %v1717, %v1714
      %v1724 = vpack.c.bf16 %v1718, %v1715
      %v1725 = vpack.c.bf16 %v1719, %v1716
      %v1728 = vunpack.c.l.b16 %v1721
      %v1729 = vunpack.c.l.b16 %v1722
      %v1730 = vpack.c.b16 %v1729, %v1728
      %1734 = vrot.lane.b32.xlu0 %v1723, 113
      %v1735 = vpop.permute.xlu0 %1734
      %1736 = vrot.lane.b32.xlu0 %v1724, 113
      %v1737 = vpop.permute.xlu0 %1736
      %1738 = vrot.lane.b32.xlu0 %v1725, 113
      %v1739 = vpop.permute.xlu0 %1738
      %v1740 = vsel %vm825, %v1735, %v1737
      %v1741 = vsel %vm825, %v1737, %v1739
      %v1745 = vsel %vm298, %v1730, 0
      %1747 = vmatprep.subr.bf16.mxu0 %v1741
      %1748 = vmatpush1.bf16.msra.mxu0 %v1740
      %1749 = vmatprep.subr.bf16.mxu0 0
      %1750 = vmatpush1.bf16.msra.mxu0 0
      %1751 = vmatprep.subr.bf16.mxu0 0
      %1752 = vmatpush1.bf16.msra.mxu0 0
      %1753 = vmatprep.subr.bf16.mxu0 0
      %1754 = vmatpush1.bf16.msra.mxu0 0
      %1755 = vmatprep.subr.bf16.mxu0 0
      %1756 = vmatpush1.bf16.msra.mxu0 0
      %1757 = vmatprep.subr.bf16.mxu0 0
      %1758 = vmatpush1.bf16.msra.mxu0 0
      %1759 = vmatprep.subr.bf16.mxu0 0
      %1760 = vmatpush1.bf16.msra.mxu0 0
      %1761 = vmatprep.subr.bf16.mxu0 0
      %1762 = vmatpush1.bf16.msra.mxu0 0
      %1763 = vmatprep.subr.bf16.mxu0 0
      %1764 = vmatpush1.bf16.msra.mxu0 0
      %1765 = vmatprep.subr.bf16.mxu0 0
      %1766 = vmatpush1.bf16.msra.mxu0 0
      %1767 = vmatprep.subr.bf16.mxu0 0
      %1768 = vmatpush1.bf16.msra.mxu0 0
      %1769 = vmatprep.subr.bf16.mxu0 0
      %1770 = vmatpush1.bf16.msra.mxu0 0
      %1771 = vmatprep.subr.bf16.mxu0 0
      %1772 = vmatpush1.bf16.msra.mxu0 0
      %1773 = vmatprep.subr.bf16.mxu0 0
      %1774 = vmatpush1.bf16.msra.mxu0 0
      %1775 = vmatprep.subr.bf16.mxu0 0
      %1776 = vmatpush1.bf16.msra.mxu0 0
      %1777 = vmatprep.subr.bf16.mxu0 0
      %1778 = vmatpush1.bf16.msra.mxu0 0
      %1779 = vmatprep.mubr.bf16.mxu0 0
      %1780 = vmatmul.mubr.bf16.gmra.mrb[0].mxu0 %v1745
      %v1781 = vpop.f32.mrb[0].mxu0
      %v1782 = vadd.f32 0.0, %v1781
      %v1783 = vpop.f32.mrb[0].mxu0
      %v1784 = vadd.f32 0.0, %v1783
      %v1785 = vpop.f32.mrb[0].mxu0
      %v1786 = vadd.f32 0.0, %v1785
      %v1787 = vpop.f32.mrb[0].mxu0
      %v1788 = vadd.f32 0.0, %v1787
      %1789 = vdwg.mxu0
      %v1790 = vadd.f32 %v1692, %v1782
      %v1791 = vadd.f32 %v1693, %v1784
      %v1792 = vadd.f32 %v1694, %v1786
      %v1793 = vadd.f32 %v1695, %v1788
      %v1794 = vld [vmem:[%s880] sm:$0x3]
      %v1796 = vlaneseq
      %v1797 = vshrl.u32 %v1796, 7
      %v1798 = vsub.s32 0, %v1797
      %v1799 = vrot.slane %v1794, %v1798
      %v1800 = vlaneseq
      %v1801 = vshrl.u32 %v1800, 7
      %v1802 = vsub.s32 1, %v1801
      %v1803 = vrot.slane %v1794, %v1802
      %1804 = vrot.lane.b32.xlu0 %v1799, 16
      %v1805 = vpop.permute.xlu0 %1804
      %1806 = vrot.lane.b32.xlu0 %v1803, 16
      %v1807 = vpop.permute.xlu0 %1806
      %v1808 = vsel %vm298, %v1805, %v1807
      %v1812 = vmul.f32 %v1592, %v1805
      %v1813 = vmul.f32 %v1593, %v1808
      %v1814 = vmul.f32 %v1594, %v1807
      %v1815 = vmul.f32 %v1595, %v1805
      %v1816 = vmul.f32 %v1596, %v1808
      %v1817 = vmul.f32 %v1597, %v1807
      %s1818 = scalar_lea.vmem %s1, 128
      %v1819 = vld [vmem:[%s1818] sm:$0xf]
      %v1820 = vld [vmem:[%s1818 + $0x4] sm:$0xf]
      %v1821 = vpack.c.bf16 %v1815, %v1812
      %v1822 = vpack.c.bf16 %v1816, %v1813
      %v1823 = vpack.c.bf16 %v1817, %v1814
      %v1826 = vunpack.c.l.b16 %v1819
      %v1827 = vunpack.c.l.b16 %v1820
      %v1828 = vpack.c.b16 %v1827, %v1826
      %1832 = vrot.lane.b32.xlu0 %v1821, 112
      %v1833 = vpop.permute.xlu0 %1832
      %1834 = vrot.lane.b32.xlu0 %v1822, 112
      %v1835 = vpop.permute.xlu0 %1834
      %1836 = vrot.lane.b32.xlu0 %v1823, 112
      %v1837 = vpop.permute.xlu0 %1836
      %v1838 = vsel %vm925, %v1833, %v1835
      %v1839 = vsel %vm925, %v1835, %v1837
      %v1843 = vsel %vm298, %v1828, 0
      %1845 = vmatprep.subr.bf16.mxu0 %v1839
      %1846 = vmatpush1.bf16.msra.mxu0 %v1838
      %1847 = vmatprep.subr.bf16.mxu0 0
      %1848 = vmatpush1.bf16.msra.mxu0 0
      %1849 = vmatprep.subr.bf16.mxu0 0
      %1850 = vmatpush1.bf16.msra.mxu0 0
      %1851 = vmatprep.subr.bf16.mxu0 0
      %1852 = vmatpush1.bf16.msra.mxu0 0
      %1853 = vmatprep.subr.bf16.mxu0 0
      %1854 = vmatpush1.bf16.msra.mxu0 0
      %1855 = vmatprep.subr.bf16.mxu0 0
      %1856 = vmatpush1.bf16.msra.mxu0 0
      %1857 = vmatprep.subr.bf16.mxu0 0
      %1858 = vmatpush1.bf16.msra.mxu0 0
      %1859 = vmatprep.subr.bf16.mxu0 0
      %1860 = vmatpush1.bf16.msra.mxu0 0
      %1861 = vmatprep.subr.bf16.mxu0 0
      %1862 = vmatpush1.bf16.msra.mxu0 0
      %1863 = vmatprep.subr.bf16.mxu0 0
      %1864 = vmatpush1.bf16.msra.mxu0 0
      %1865 = vmatprep.subr.bf16.mxu0 0
      %1866 = vmatpush1.bf16.msra.mxu0 0
      %1867 = vmatprep.subr.bf16.mxu0 0
      %1868 = vmatpush1.bf16.msra.mxu0 0
      %1869 = vmatprep.subr.bf16.mxu0 0
      %1870 = vmatpush1.bf16.msra.mxu0 0
      %1871 = vmatprep.subr.bf16.mxu0 0
      %1872 = vmatpush1.bf16.msra.mxu0 0
      %1873 = vmatprep.subr.bf16.mxu0 0
      %1874 = vmatpush1.bf16.msra.mxu0 0
      %1875 = vmatprep.subr.bf16.mxu0 0
      %1876 = vmatpush1.bf16.msra.mxu0 0
      %1877 = vmatprep.mubr.bf16.mxu0 0
      %1878 = vmatmul.mubr.bf16.gmra.mrb[0].mxu0 %v1843
      %v1879 = vpop.f32.mrb[0].mxu0
      %v1880 = vadd.f32 0.0, %v1879
      %v1881 = vpop.f32.mrb[0].mxu0
      %v1882 = vadd.f32 0.0, %v1881
      %v1883 = vpop.f32.mrb[0].mxu0
      %v1884 = vadd.f32 0.0, %v1883
      %v1885 = vpop.f32.mrb[0].mxu0
      %v1886 = vadd.f32 0.0, %v1885
      %1887 = vdwg.mxu0
      %v1888 = vadd.f32 %v1790, %v1880
      %v1889 = vadd.f32 %v1791, %v1882
      %v1890 = vadd.f32 %v1792, %v1884
      %v1891 = vadd.f32 %v1793, %v1886
      %v1892 = vld [vmem:[%s980] sm:$0x3]
      %v1894 = vlaneseq
      %v1895 = vshrl.u32 %v1894, 7
      %v1896 = vsub.s32 0, %v1895
      %v1897 = vrot.slane %v1892, %v1896
      %v1898 = vlaneseq
      %v1899 = vshrl.u32 %v1898, 7
      %v1900 = vsub.s32 1, %v1899
      %v1901 = vrot.slane %v1892, %v1900
      %1902 = vrot.lane.b32.xlu0 %v1897, 17
      %v1903 = vpop.permute.xlu0 %1902
      %1904 = vrot.lane.b32.xlu0 %v1901, 17
      %v1905 = vpop.permute.xlu0 %1904
      %v1906 = vsel %vm995, %v1903, %v1905
      %v1910 = vmul.f32 %v1592, %v1903
      %v1911 = vmul.f32 %v1593, %v1906
      %v1912 = vmul.f32 %v1594, %v1905
      %v1913 = vmul.f32 %v1595, %v1903
      %v1914 = vmul.f32 %v1596, %v1906
      %v1915 = vmul.f32 %v1597, %v1905
      %s1916 = scalar_lea.vmem %s1, 136
      %v1917 = vld [vmem:[%s1916] sm:$0xf]
      %v1918 = vld [vmem:[%s1916 + $0x4] sm:$0xf]
      %v1919 = vpack.c.bf16 %v1913, %v1910
      %v1920 = vpack.c.bf16 %v1914, %v1911
      %v1921 = vpack.c.bf16 %v1915, %v1912
      %v1924 = vunpack.c.l.b16 %v1917
      %v1925 = vunpack.c.l.b16 %v1918
      %v1926 = vpack.c.b16 %v1925, %v1924
      %1930 = vrot.lane.b32.xlu0 %v1919, 111
      %v1931 = vpop.permute.xlu0 %1930
      %1932 = vrot.lane.b32.xlu0 %v1920, 111
      %v1933 = vpop.permute.xlu0 %1932
      %1934 = vrot.lane.b32.xlu0 %v1921, 111
      %v1935 = vpop.permute.xlu0 %1934
      %v1936 = vsel %vm1026, %v1931, %v1933
      %v1937 = vsel %vm1026, %v1933, %v1935
      %v1941 = vsel %vm298, %v1926, 0
      %1943 = vmatprep.subr.bf16.mxu0 %v1937
      %1944 = vmatpush1.bf16.msra.mxu0 %v1936
      %1945 = vmatprep.subr.bf16.mxu0 0
      %1946 = vmatpush1.bf16.msra.mxu0 0
      %1947 = vmatprep.subr.bf16.mxu0 0
      %1948 = vmatpush1.bf16.msra.mxu0 0
      %1949 = vmatprep.subr.bf16.mxu0 0
      %1950 = vmatpush1.bf16.msra.mxu0 0
      %1951 = vmatprep.subr.bf16.mxu0 0
      %1952 = vmatpush1.bf16.msra.mxu0 0
      %1953 = vmatprep.subr.bf16.mxu0 0
      %1954 = vmatpush1.bf16.msra.mxu0 0
      %1955 = vmatprep.subr.bf16.mxu0 0
      %1956 = vmatpush1.bf16.msra.mxu0 0
      %1957 = vmatprep.subr.bf16.mxu0 0
      %1958 = vmatpush1.bf16.msra.mxu0 0
      %1959 = vmatprep.subr.bf16.mxu0 0
      %1960 = vmatpush1.bf16.msra.mxu0 0
      %1961 = vmatprep.subr.bf16.mxu0 0
      %1962 = vmatpush1.bf16.msra.mxu0 0
      %1963 = vmatprep.subr.bf16.mxu0 0
      %1964 = vmatpush1.bf16.msra.mxu0 0
      %1965 = vmatprep.subr.bf16.mxu0 0
      %1966 = vmatpush1.bf16.msra.mxu0 0
      %1967 = vmatprep.subr.bf16.mxu0 0
      %1968 = vmatpush1.bf16.msra.mxu0 0
      %1969 = vmatprep.subr.bf16.mxu0 0
      %1970 = vmatpush1.bf16.msra.mxu0 0
      %1971 = vmatprep.subr.bf16.mxu0 0
      %1972 = vmatpush1.bf16.msra.mxu0 0
      %1973 = vmatprep.subr.bf16.mxu0 0
      %1974 = vmatpush1.bf16.msra.mxu0 0
      %1975 = vmatprep.mubr.bf16.mxu0 0
      %1976 = vmatmul.mubr.bf16.gmra.mrb[0].mxu0 %v1941
      %v1977 = vpop.f32.mrb[0].mxu0
      %v1978 = vadd.f32 0.0, %v1977
      %v1979 = vpop.f32.mrb[0].mxu0
      %v1980 = vadd.f32 0.0, %v1979
      %v1981 = vpop.f32.mrb[0].mxu0
      %v1982 = vadd.f32 0.0, %v1981
      %v1983 = vpop.f32.mrb[0].mxu0
      %v1984 = vadd.f32 0.0, %v1983
      %1985 = vdwg.mxu0
      %v1986 = vadd.f32 %v1888, %v1978
      %v1987 = vadd.f32 %v1889, %v1980
      %v1988 = vadd.f32 %v1890, %v1982
      %v1989 = vadd.f32 %v1891, %v1984
      %s1990 = scalar_lea.vmem %s2, 16
      %v1991 = vld [vmem:[%s1990] sm:$0xff]
      %v1992 = vld [vmem:[%s1990 + $0x8] sm:$0xff]
      %1994 = vset.pattern.permute.xlu0 0
      %1995 = vperm.xlu0 %1994, %v1991
      %v1996 = vpop.permute.xlu0 %1995
      %1999 = vset.pattern.permute.xlu0 0
      %2000 = vperm.xlu0 %1999, %v1992
      %v2001 = vpop.permute.xlu0 %2000
      %v2003 = vadd.f32 %v1986, %v1996
      %v2004 = vadd.f32 %v1987, %v1996
      %v2005 = vadd.f32 %v1988, %v2001
      %v2006 = vadd.f32 %v1989, %v2001
      %v2007 = vadd.f32 %v2003, %v2004
      %2008 = vadd.xlane.f32.xlu0 %v2007
      %v2009 = vpop.xlane.xlu0 %2008
      %v2010 = vadd.f32 %v2005, %v2006
      %2011 = vadd.xlane.f32.xlu0 %v2010
      %v2012 = vpop.xlane.xlu0 %2011
      %v2013 = vmul.f32 %v2009, %v1103
      %v2014 = vmul.f32 %v2012, %v1103
      %v2015 = vsub.f32 %v2003, %v2013
      %v2016 = vsub.f32 %v2004, %v2013
      %v2017 = vsub.f32 %v2005, %v2014
      %v2018 = vsub.f32 %v2006, %v2014
      %v2019 = vmul.f32 %v2015, %v2015
      %v2020 = vmul.f32 %v2016, %v2016
      %v2021 = vmul.f32 %v2017, %v2017
      %v2022 = vmul.f32 %v2018, %v2018
      %v2023 = vadd.f32 %v2019, %v2020
      %2024 = vadd.xlane.f32.xlu0 %v2023
      %v2025 = vpop.xlane.xlu0 %2024
      %v2026 = vadd.f32 %v2021, %v2022
      %2027 = vadd.xlane.f32.xlu0 %v2026
      %v2028 = vpop.xlane.xlu0 %2027
      %v2029 = vmul.f32 %v2025, %v1103
      %v2030 = vmul.f32 %v2028, %v1103
      %v2031 = vadd.f32 %v2029, 1e-05
      %v2032 = vadd.f32 %v2030, 1e-05
      %v2033 = vrsqrt.pop %v2031
      %v2034 = vrsqrt.pop %v2032
      %v2035 = vmul.f32 %v2015, %v2033
      %v2036 = vmul.f32 %v2016, %v2033
      %v2037 = vmul.f32 %v2017, %v2034
      %v2038 = vmul.f32 %v2018, %v2034
      %v2039 = vadd.f32 %v2035, %v199
      %v2040 = vadd.f32 %v2036, %v200
      %v2041 = vadd.f32 %v2037, %v201
      %v2042 = vadd.f32 %v2038, %v202
      %2043 = vst [vmem:[#allocation2] sm:$0xff] %v2039
      %2044 = vst [vmem:[#allocation2 + $0x8] sm:$0xff] %v2040
      %2045 = vst [vmem:[#allocation2 + $0x20] sm:$0xff] %v2041
      %2046 = vst [vmem:[#allocation2 + $0x28] sm:$0xff] %v2042
      %2047 = vst [vmem:[#allocation2 + $0x10] sm:$0xff] %v2039
      %2048 = vst [vmem:[#allocation2 + $0x18] sm:$0xff] %v2040
      %2049 = vst [vmem:[#allocation2 + $0x30] sm:$0xff] %v2041
      %2050 = vst [vmem:[#allocation2 + $0x38] sm:$0xff] %v2042
      %v2051 = vld [vmem:[#allocation2 + $0x8] sm:$0xff]
      %v2052 = vld [vmem:[#allocation2 + $0x10] sm:$0xff]
      %v2053 = vld [vmem:[#allocation2 + $0x18] sm:$0xff]
      %v2054 = vld [vmem:[#allocation2 + $0x28] sm:$0xff]
      %v2055 = vld [vmem:[#allocation2 + $0x30] sm:$0xff]
      %v2056 = vld [vmem:[#allocation2 + $0x38] sm:$0xff]
      %v2057 = vld [vmem:[%s3] sm:$0x3]
      %v2059 = vlaneseq
      %v2060 = vshrl.u32 %v2059, 7
      %v2061 = vsub.s32 0, %v2060
      %v2062 = vrot.slane %v2057, %v2061
      %v2063 = vlaneseq
      %v2064 = vshrl.u32 %v2063, 7
      %v2065 = vsub.s32 1, %v2064
      %v2066 = vrot.slane %v2057, %v2065
      %2067 = vrot.lane.b32.xlu0 %v2062, 111
      %v2068 = vpop.permute.xlu0 %2067
      %2069 = vrot.lane.b32.xlu0 %v2066, 111
      %v2070 = vpop.permute.xlu0 %2069
      %v2071 = vsel %vm231, %v2068, %v2070
      %v2075 = vmul.f32 %v2051, %v2068
      %v2076 = vmul.f32 %v2052, %v2071
      %v2077 = vmul.f32 %v2053, %v2070
      %v2078 = vmul.f32 %v2054, %v2068
      %v2079 = vmul.f32 %v2055, %v2071
      %v2080 = vmul.f32 %v2056, %v2070
      %s2081 = scalar_lea.vmem %s1, 144
      %v2082 = vld [vmem:[%s2081] sm:$0xf]
      %v2083 = vld [vmem:[%s2081 + $0x4] sm:$0xf]
      %v2084 = vpack.c.bf16 %v2078, %v2075
      %v2085 = vpack.c.bf16 %v2079, %v2076
      %v2086 = vpack.c.bf16 %v2080, %v2077
      %v2087 = vld [vmem:[%s247] sm:$0x3]
      %v2089 = vlaneseq
      %v2090 = vshrl.u32 %v2089, 7
      %v2091 = vsub.s32 0, %v2090
      %v2092 = vrot.slane %v2087, %v2091
      %v2093 = vlaneseq
      %v2094 = vshrl.u32 %v2093, 7
      %v2095 = vsub.s32 1, %v2094
      %v2096 = vrot.slane %v2087, %v2095
      %2097 = vrot.lane.b32.xlu0 %v2092, 112
      %v2098 = vpop.permute.xlu0 %2097
      %2099 = vrot.lane.b32.xlu0 %v2096, 112
      %v2100 = vpop.permute.xlu0 %2099
      %v2101 = vsel %vm262, %v2098, %v2100
      %v2105 = vmul.f32 %v2051, %v2098
      %v2106 = vmul.f32 %v2052, %v2101
      %v2107 = vmul.f32 %v2053, %v2100
      %v2108 = vmul.f32 %v2054, %v2098
      %v2109 = vmul.f32 %v2055, %v2101
      %v2110 = vmul.f32 %v2056, %v2100
      %s2111 = scalar_lea.vmem %s1, 152
      %v2112 = vld [vmem:[%s2111] sm:$0xf]
      %v2113 = vld [vmem:[%s2111 + $0x4] sm:$0xf]
      %v2114 = vpack.c.bf16 %v2108, %v2105
      %v2115 = vpack.c.bf16 %v2109, %v2106
      %v2116 = vpack.c.bf16 %v2110, %v2107
      %v2119 = vunpack.c.l.b16 %v2112
      %v2120 = vunpack.c.l.b16 %v2113
      %v2121 = vpack.c.b16 %v2120, %v2119
      %2125 = vrot.lane.b32.xlu0 %v2114, 16
      %v2126 = vpop.permute.xlu0 %2125
      %2127 = vrot.lane.b32.xlu0 %v2115, 16
      %v2128 = vpop.permute.xlu0 %2127
      %2129 = vrot.lane.b32.xlu0 %v2116, 16
      %v2130 = vpop.permute.xlu0 %2129
      %v2131 = vsel %vm293, %v2126, %v2128
      %v2132 = vsel %vm293, %v2128, %v2130
      %v2136 = vsel %vm298, %v2121, 0
      %2138 = vmatprep.subr.bf16.mxu0 %v2132
      %2139 = vmatpush1.bf16.msra.mxu0 %v2131
      %2140 = vmatprep.subr.bf16.mxu0 0
      %2141 = vmatpush1.bf16.msra.mxu0 0
      %2142 = vmatprep.subr.bf16.mxu0 0
      %2143 = vmatpush1.bf16.msra.mxu0 0
      %2144 = vmatprep.subr.bf16.mxu0 0
      %2145 = vmatpush1.bf16.msra.mxu0 0
      %2146 = vmatprep.subr.bf16.mxu0 0
      %2147 = vmatpush1.bf16.msra.mxu0 0
      %2148 = vmatprep.subr.bf16.mxu0 0
      %2149 = vmatpush1.bf16.msra.mxu0 0
      %2150 = vmatprep.subr.bf16.mxu0 0
      %2151 = vmatpush1.bf16.msra.mxu0 0
      %2152 = vmatprep.subr.bf16.mxu0 0
      %2153 = vmatpush1.bf16.msra.mxu0 0
      %2154 = vmatprep.subr.bf16.mxu0 0
      %2155 = vmatpush1.bf16.msra.mxu0 0
      %2156 = vmatprep.subr.bf16.mxu0 0
      %2157 = vmatpush1.bf16.msra.mxu0 0
      %2158 = vmatprep.subr.bf16.mxu0 0
      %2159 = vmatpush1.bf16.msra.mxu0 0
      %2160 = vmatprep.subr.bf16.mxu0 0
      %2161 = vmatpush1.bf16.msra.mxu0 0
      %2162 = vmatprep.subr.bf16.mxu0 0
      %2163 = vmatpush1.bf16.msra.mxu0 0
      %2164 = vmatprep.subr.bf16.mxu0 0
      %2165 = vmatpush1.bf16.msra.mxu0 0
      %2166 = vmatprep.subr.bf16.mxu0 0
      %2167 = vmatpush1.bf16.msra.mxu0 0
      %2168 = vmatprep.subr.bf16.mxu0 0
      %2169 = vmatpush1.bf16.msra.mxu0 0
      %2170 = vmatprep.mubr.bf16.mxu0 0
      %2171 = vmatmul.mubr.bf16.gmra.mrb[0].mxu0 %v2136
      %v2172 = vpop.f32.mrb[0].mxu0
      %v2173 = vadd.f32 0.0, %v2172
      %v2174 = vpop.f32.mrb[0].mxu0
      %v2175 = vadd.f32 0.0, %v2174
      %v2176 = vpop.f32.mrb[0].mxu0
      %v2177 = vadd.f32 0.0, %v2176
      %v2178 = vpop.f32.mrb[0].mxu0
      %v2179 = vadd.f32 0.0, %v2178
      %2180 = vdwg.mxu0
      %v2183 = vunpack.c.l.b16 %v2082
      %v2184 = vunpack.c.l.b16 %v2083
      %v2185 = vpack.c.b16 %v2184, %v2183
      %2189 = vrot.lane.b32.xlu0 %v2084, 17
      %v2190 = vpop.permute.xlu0 %2189
      %2191 = vrot.lane.b32.xlu0 %v2085, 17
      %v2192 = vpop.permute.xlu0 %2191
      %2193 = vrot.lane.b32.xlu0 %v2086, 17
      %v2194 = vpop.permute.xlu0 %2193
      %v2195 = vsel %vm359, %v2190, %v2192
      %v2196 = vsel %vm359, %v2192, %v2194
      %v2200 = vsel %vm298, %v2185, 0
      %2202 = vmatprep.subr.bf16.mxu0 %v2196
      %2203 = vmatpush1.bf16.msra.mxu0 %v2195
      %2204 = vmatprep.subr.bf16.mxu0 0
      %2205 = vmatpush1.bf16.msra.mxu0 0
      %2206 = vmatprep.subr.bf16.mxu0 0
      %2207 = vmatpush1.bf16.msra.mxu0 0
      %2208 = vmatprep.subr.bf16.mxu0 0
      %2209 = vmatpush1.bf16.msra.mxu0 0
      %2210 = vmatprep.subr.bf16.mxu0 0
      %2211 = vmatpush1.bf16.msra.mxu0 0
      %2212 = vmatprep.subr.bf16.mxu0 0
      %2213 = vmatpush1.bf16.msra.mxu0 0
      %2214 = vmatprep.subr.bf16.mxu0 0
      %2215 = vmatpush1.bf16.msra.mxu0 0
      %2216 = vmatprep.subr.bf16.mxu0 0
      %2217 = vmatpush1.bf16.msra.mxu0 0
      %2218 = vmatprep.subr.bf16.mxu0 0
      %2219 = vmatpush1.bf16.msra.mxu0 0
      %2220 = vmatprep.subr.bf16.mxu0 0
      %2221 = vmatpush1.bf16.msra.mxu0 0
      %2222 = vmatprep.subr.bf16.mxu0 0
      %2223 = vmatpush1.bf16.msra.mxu0 0
      %2224 = vmatprep.subr.bf16.mxu0 0
      %2225 = vmatpush1.bf16.msra.mxu0 0
      %2226 = vmatprep.subr.bf16.mxu0 0
      %2227 = vmatpush1.bf16.msra.mxu0 0
      %2228 = vmatprep.subr.bf16.mxu0 0
      %2229 = vmatpush1.bf16.msra.mxu0 0
      %2230 = vmatprep.subr.bf16.mxu0 0
      %2231 = vmatpush1.bf16.msra.mxu0 0
      %2232 = vmatprep.subr.bf16.mxu0 0
      %2233 = vmatpush1.bf16.msra.mxu0 0
      %2234 = vmatprep.mubr.bf16.mxu0 0
      %2235 = vmatmul.mubr.bf16.gmra.mrb[0].mxu0 %v2200
      %v2236 = vpop.f32.mrb[0].mxu0
      %v2237 = vadd.f32 %v2173, %v2236
      %v2238 = vpop.f32.mrb[0].mxu0
      %v2239 = vadd.f32 %v2175, %v2238
      %v2240 = vpop.f32.mrb[0].mxu0
      %v2241 = vadd.f32 %v2177, %v2240
      %v2242 = vpop.f32.mrb[0].mxu0
      %v2243 = vadd.f32 %v2179, %v2242
      %2244 = vdwg.mxu0
      %v2245 = vld [vmem:[%s410] sm:$0x3]
      %v2247 = vlaneseq
      %v2248 = vshrl.u32 %v2247, 7
      %v2249 = vsub.s32 0, %v2248
      %v2250 = vrot.slane %v2245, %v2249
      %v2251 = vlaneseq
      %v2252 = vshrl.u32 %v2251, 7
      %v2253 = vsub.s32 1, %v2252
      %v2254 = vrot.slane %v2245, %v2253
      %2255 = vrot.lane.b32.xlu0 %v2250, 113
      %v2256 = vpop.permute.xlu0 %2255
      %2257 = vrot.lane.b32.xlu0 %v2254, 113
      %v2258 = vpop.permute.xlu0 %2257
      %v2259 = vsel %vm425, %v2256, %v2258
      %v2263 = vmul.f32 %v2051, %v2256
      %v2264 = vmul.f32 %v2052, %v2259
      %v2265 = vmul.f32 %v2053, %v2258
      %v2266 = vmul.f32 %v2054, %v2256
      %v2267 = vmul.f32 %v2055, %v2259
      %v2268 = vmul.f32 %v2056, %v2258
      %s2269 = scalar_lea.vmem %s1, 160
      %v2270 = vld [vmem:[%s2269] sm:$0xf]
      %v2271 = vld [vmem:[%s2269 + $0x4] sm:$0xf]
      %v2272 = vpack.c.bf16 %v2266, %v2263
      %v2273 = vpack.c.bf16 %v2267, %v2264
      %v2274 = vpack.c.bf16 %v2268, %v2265
      %v2277 = vunpack.c.l.b16 %v2270
      %v2278 = vunpack.c.l.b16 %v2271
      %v2279 = vpack.c.b16 %v2278, %v2277
      %2283 = vrot.lane.b32.xlu0 %v2272, 15
      %v2284 = vpop.permute.xlu0 %2283
      %2285 = vrot.lane.b32.xlu0 %v2273, 15
      %v2286 = vpop.permute.xlu0 %2285
      %2287 = vrot.lane.b32.xlu0 %v2274, 15
      %v2288 = vpop.permute.xlu0 %2287
      %v2289 = vsel %vm456, %v2284, %v2286
      %v2290 = vsel %vm456, %v2286, %v2288
      %v2294 = vsel %vm298, %v2279, 0
      %2296 = vmatprep.subr.bf16.mxu0 %v2290
      %2297 = vmatpush1.bf16.msra.mxu0 %v2289
      %2298 = vmatprep.subr.bf16.mxu0 0
      %2299 = vmatpush1.bf16.msra.mxu0 0
      %2300 = vmatprep.subr.bf16.mxu0 0
      %2301 = vmatpush1.bf16.msra.mxu0 0
      %2302 = vmatprep.subr.bf16.mxu0 0
      %2303 = vmatpush1.bf16.msra.mxu0 0
      %2304 = vmatprep.subr.bf16.mxu0 0
      %2305 = vmatpush1.bf16.msra.mxu0 0
      %2306 = vmatprep.subr.bf16.mxu0 0
      %2307 = vmatpush1.bf16.msra.mxu0 0
      %2308 = vmatprep.subr.bf16.mxu0 0
      %2309 = vmatpush1.bf16.msra.mxu0 0
      %2310 = vmatprep.subr.bf16.mxu0 0
      %2311 = vmatpush1.bf16.msra.mxu0 0
      %2312 = vmatprep.subr.bf16.mxu0 0
      %2313 = vmatpush1.bf16.msra.mxu0 0
      %2314 = vmatprep.subr.bf16.mxu0 0
      %2315 = vmatpush1.bf16.msra.mxu0 0
      %2316 = vmatprep.subr.bf16.mxu0 0
      %2317 = vmatpush1.bf16.msra.mxu0 0
      %2318 = vmatprep.subr.bf16.mxu0 0
      %2319 = vmatpush1.bf16.msra.mxu0 0
      %2320 = vmatprep.subr.bf16.mxu0 0
      %2321 = vmatpush1.bf16.msra.mxu0 0
      %2322 = vmatprep.subr.bf16.mxu0 0
      %2323 = vmatpush1.bf16.msra.mxu0 0
      %2324 = vmatprep.subr.bf16.mxu0 0
      %2325 = vmatpush1.bf16.msra.mxu0 0
      %2326 = vmatprep.subr.bf16.mxu0 0
      %2327 = vmatpush1.bf16.msra.mxu0 0
      %2328 = vmatprep.mubr.bf16.mxu0 0
      %2329 = vmatmul.mubr.bf16.gmra.mrb[0].mxu0 %v2294
      %v2330 = vpop.f32.mrb[0].mxu0
      %v2331 = vadd.f32 0.0, %v2330
      %v2332 = vpop.f32.mrb[0].mxu0
      %v2333 = vadd.f32 0.0, %v2332
      %v2334 = vpop.f32.mrb[0].mxu0
      %v2335 = vadd.f32 0.0, %v2334
      %v2336 = vpop.f32.mrb[0].mxu0
      %v2337 = vadd.f32 0.0, %v2336
      %2338 = vdwg.mxu0
      %v2339 = vadd.f32 %v2237, %v2331
      %v2340 = vadd.f32 %v2239, %v2333
      %v2341 = vadd.f32 %v2241, %v2335
      %v2342 = vadd.f32 %v2243, %v2337
      %v2343 = vld [vmem:[%s511] sm:$0x3]
      %v2345 = vlaneseq
      %v2346 = vshrl.u32 %v2345, 7
      %v2347 = vsub.s32 0, %v2346
      %v2348 = vrot.slane %v2343, %v2347
      %v2349 = vlaneseq
      %v2350 = vshrl.u32 %v2349, 7
      %v2351 = vsub.s32 1, %v2350
      %v2352 = vrot.slane %v2343, %v2351
      %2353 = vrot.lane.b32.xlu0 %v2348, 127
      %v2354 = vpop.permute.xlu0 %2353
      %2355 = vrot.lane.b32.xlu0 %v2352, 127
      %v2356 = vpop.permute.xlu0 %2355
      %v2357 = vsel %vm526, %v2354, %v2356
      %v2361 = vmul.f32 %v2051, %v2354
      %v2362 = vmul.f32 %v2052, %v2357
      %v2363 = vmul.f32 %v2053, %v2356
      %v2364 = vmul.f32 %v2054, %v2354
      %v2365 = vmul.f32 %v2055, %v2357
      %v2366 = vmul.f32 %v2056, %v2356
      %s2367 = scalar_lea.vmem %s1, 168
      %v2368 = vld [vmem:[%s2367] sm:$0xf]
      %v2369 = vld [vmem:[%s2367 + $0x4] sm:$0xf]
      %v2370 = vpack.c.bf16 %v2364, %v2361
      %v2371 = vpack.c.bf16 %v2365, %v2362
      %v2372 = vpack.c.bf16 %v2366, %v2363
      %v2375 = vunpack.c.l.b16 %v2368
      %v2376 = vunpack.c.l.b16 %v2369
      %v2377 = vpack.c.b16 %v2376, %v2375
      %2381 = vrot.lane.b32.xlu0 %v2370, 1
      %v2382 = vpop.permute.xlu0 %2381
      %2383 = vrot.lane.b32.xlu0 %v2371, 1
      %v2384 = vpop.permute.xlu0 %2383
      %2385 = vrot.lane.b32.xlu0 %v2372, 1
      %v2386 = vpop.permute.xlu0 %2385
      %v2387 = vsel %vm557, %v2382, %v2384
      %v2388 = vsel %vm557, %v2384, %v2386
      %v2392 = vsel %vm298, %v2377, 0
      %2394 = vmatprep.subr.bf16.mxu0 %v2388
      %2395 = vmatpush1.bf16.msra.mxu0 %v2387
      %2396 = vmatprep.subr.bf16.mxu0 0
      %2397 = vmatpush1.bf16.msra.mxu0 0
      %2398 = vmatprep.subr.bf16.mxu0 0
      %2399 = vmatpush1.bf16.msra.mxu0 0
      %2400 = vmatprep.subr.bf16.mxu0 0
      %2401 = vmatpush1.bf16.msra.mxu0 0
      %2402 = vmatprep.subr.bf16.mxu0 0
      %2403 = vmatpush1.bf16.msra.mxu0 0
      %2404 = vmatprep.subr.bf16.mxu0 0
      %2405 = vmatpush1.bf16.msra.mxu0 0
      %2406 = vmatprep.subr.bf16.mxu0 0
      %2407 = vmatpush1.bf16.msra.mxu0 0
      %2408 = vmatprep.subr.bf16.mxu0 0
      %2409 = vmatpush1.bf16.msra.mxu0 0
      %2410 = vmatprep.subr.bf16.mxu0 0
      %2411 = vmatpush1.bf16.msra.mxu0 0
      %2412 = vmatprep.subr.bf16.mxu0 0
      %2413 = vmatpush1.bf16.msra.mxu0 0
      %2414 = vmatprep.subr.bf16.mxu0 0
      %2415 = vmatpush1.bf16.msra.mxu0 0
      %2416 = vmatprep.subr.bf16.mxu0 0
      %2417 = vmatpush1.bf16.msra.mxu0 0
      %2418 = vmatprep.subr.bf16.mxu0 0
      %2419 = vmatpush1.bf16.msra.mxu0 0
      %2420 = vmatprep.subr.bf16.mxu0 0
      %2421 = vmatpush1.bf16.msra.mxu0 0
      %2422 = vmatprep.subr.bf16.mxu0 0
      %2423 = vmatpush1.bf16.msra.mxu0 0
      %2424 = vmatprep.subr.bf16.mxu0 0
      %2425 = vmatpush1.bf16.msra.mxu0 0
      %2426 = vmatprep.mubr.bf16.mxu0 0
      %2427 = vmatmul.mubr.bf16.gmra.mrb[0].mxu0 %v2392
      %v2428 = vpop.f32.mrb[0].mxu0
      %v2429 = vadd.f32 0.0, %v2428
      %v2430 = vpop.f32.mrb[0].mxu0
      %v2431 = vadd.f32 0.0, %v2430
      %v2432 = vpop.f32.mrb[0].mxu0
      %v2433 = vadd.f32 0.0, %v2432
      %v2434 = vpop.f32.mrb[0].mxu0
      %v2435 = vadd.f32 0.0, %v2434
      %2436 = vdwg.mxu0
      %v2437 = vadd.f32 %v2339, %v2429
      %v2438 = vadd.f32 %v2340, %v2431
      %v2439 = vadd.f32 %v2341, %v2433
      %v2440 = vadd.f32 %v2342, %v2435
      %s2441 = scalar_lea.vmem %s1, 176
      %v2442 = vld [vmem:[%s2441] sm:$0xf]
      %v2443 = vld [vmem:[%s2441 + $0x4] sm:$0xf]
      %v2444 = vpack.c.bf16 %v2041, %v2039
      %v2445 = vpack.c.bf16 %v2042, %v2040
      %v2448 = vunpack.c.l.b16 %v2442
      %v2449 = vunpack.c.l.b16 %v2443
      %v2450 = vpack.c.b16 %v2449, %v2448
      %v2452 = vsel %vm298, %v2450, 0
      %2454 = vmatprep.subr.bf16.mxu0 %v2445
      %2455 = vmatpush1.bf16.msra.mxu0 %v2444
      %2456 = vmatprep.subr.bf16.mxu0 0
      %2457 = vmatpush1.bf16.msra.mxu0 0
      %2458 = vmatprep.subr.bf16.mxu0 0
      %2459 = vmatpush1.bf16.msra.mxu0 0
      %2460 = vmatprep.subr.bf16.mxu0 0
      %2461 = vmatpush1.bf16.msra.mxu0 0
      %2462 = vmatprep.subr.bf16.mxu0 0
      %2463 = vmatpush1.bf16.msra.mxu0 0
      %2464 = vmatprep.subr.bf16.mxu0 0
      %2465 = vmatpush1.bf16.msra.mxu0 0
      %2466 = vmatprep.subr.bf16.mxu0 0
      %2467 = vmatpush1.bf16.msra.mxu0 0
      %2468 = vmatprep.subr.bf16.mxu0 0
      %2469 = vmatpush1.bf16.msra.mxu0 0
      %2470 = vmatprep.subr.bf16.mxu0 0
      %2471 = vmatpush1.bf16.msra.mxu0 0
      %2472 = vmatprep.subr.bf16.mxu0 0
      %2473 = vmatpush1.bf16.msra.mxu0 0
      %2474 = vmatprep.subr.bf16.mxu0 0
      %2475 = vmatpush1.bf16.msra.mxu0 0
      %2476 = vmatprep.subr.bf16.mxu0 0
      %2477 = vmatpush1.bf16.msra.mxu0 0
      %2478 = vmatprep.subr.bf16.mxu0 0
      %2479 = vmatpush1.bf16.msra.mxu0 0
      %2480 = vmatprep.subr.bf16.mxu0 0
      %2481 = vmatpush1.bf16.msra.mxu0 0
      %2482 = vmatprep.subr.bf16.mxu0 0
      %2483 = vmatpush1.bf16.msra.mxu0 0
      %2484 = vmatprep.subr.bf16.mxu0 0
      %2485 = vmatpush1.bf16.msra.mxu0 0
      %2486 = vmatprep.mubr.bf16.mxu0 0
      %2487 = vmatmul.mubr.bf16.gmra.mrb[0].mxu0 %v2452
      %v2488 = vpop.f32.mrb[0].mxu0
      %v2489 = vadd.f32 0.0, %v2488
      %v2490 = vpop.f32.mrb[0].mxu0
      %v2491 = vadd.f32 0.0, %v2490
      %v2492 = vpop.f32.mrb[0].mxu0
      %v2493 = vadd.f32 0.0, %v2492
      %v2494 = vpop.f32.mrb[0].mxu0
      %v2495 = vadd.f32 0.0, %v2494
      %2496 = vdwg.mxu0
      %v2497 = vadd.f32 %v2437, %v2489
      %v2498 = vadd.f32 %v2438, %v2491
      %v2499 = vadd.f32 %v2439, %v2493
      %v2500 = vadd.f32 %v2440, %v2495
      %v2501 = vld [vmem:[#allocation2] sm:$0xff]
      %v2502 = vld [vmem:[#allocation2 + $0x8] sm:$0xff]
      %v2503 = vld [vmem:[#allocation2 + $0x10] sm:$0xff]
      %v2504 = vld [vmem:[#allocation2 + $0x20] sm:$0xff]
      %v2505 = vld [vmem:[#allocation2 + $0x28] sm:$0xff]
      %v2506 = vld [vmem:[#allocation2 + $0x30] sm:$0xff]
      %v2507 = vld [vmem:[%s678] sm:$0x3]
      %v2509 = vlaneseq
      %v2510 = vshrl.u32 %v2509, 7
      %v2511 = vsub.s32 0, %v2510
      %v2512 = vrot.slane %v2507, %v2511
      %v2513 = vlaneseq
      %v2514 = vshrl.u32 %v2513, 7
      %v2515 = vsub.s32 1, %v2514
      %v2516 = vrot.slane %v2507, %v2515
      %2517 = vrot.lane.b32.xlu0 %v2512, 1
      %v2518 = vpop.permute.xlu0 %2517
      %2519 = vrot.lane.b32.xlu0 %v2516, 1
      %v2520 = vpop.permute.xlu0 %2519
      %v2521 = vsel %vm693, %v2518, %v2520
      %v2525 = vmul.f32 %v2501, %v2518
      %v2526 = vmul.f32 %v2502, %v2521
      %v2527 = vmul.f32 %v2503, %v2520
      %v2528 = vmul.f32 %v2504, %v2518
      %v2529 = vmul.f32 %v2505, %v2521
      %v2530 = vmul.f32 %v2506, %v2520
      %s2531 = scalar_lea.vmem %s1, 184
      %v2532 = vld [vmem:[%s2531] sm:$0xf]
      %v2533 = vld [vmem:[%s2531 + $0x4] sm:$0xf]
      %v2534 = vpack.c.bf16 %v2528, %v2525
      %v2535 = vpack.c.bf16 %v2529, %v2526
      %v2536 = vpack.c.bf16 %v2530, %v2527
      %v2539 = vunpack.c.l.b16 %v2532
      %v2540 = vunpack.c.l.b16 %v2533
      %v2541 = vpack.c.b16 %v2540, %v2539
      %2545 = vrot.lane.b32.xlu0 %v2534, 127
      %v2546 = vpop.permute.xlu0 %2545
      %2547 = vrot.lane.b32.xlu0 %v2535, 127
      %v2548 = vpop.permute.xlu0 %2547
      %2549 = vrot.lane.b32.xlu0 %v2536, 127
      %v2550 = vpop.permute.xlu0 %2549
      %v2551 = vsel %vm724, %v2546, %v2548
      %v2552 = vsel %vm724, %v2548, %v2550
      %v2556 = vsel %vm298, %v2541, 0
      %2558 = vmatprep.subr.bf16.mxu0 %v2552
      %2559 = vmatpush1.bf16.msra.mxu0 %v2551
      %2560 = vmatprep.subr.bf16.mxu0 0
      %2561 = vmatpush1.bf16.msra.mxu0 0
      %2562 = vmatprep.subr.bf16.mxu0 0
      %2563 = vmatpush1.bf16.msra.mxu0 0
      %2564 = vmatprep.subr.bf16.mxu0 0
      %2565 = vmatpush1.bf16.msra.mxu0 0
      %2566 = vmatprep.subr.bf16.mxu0 0
      %2567 = vmatpush1.bf16.msra.mxu0 0
      %2568 = vmatprep.subr.bf16.mxu0 0
      %2569 = vmatpush1.bf16.msra.mxu0 0
      %2570 = vmatprep.subr.bf16.mxu0 0
      %2571 = vmatpush1.bf16.msra.mxu0 0
      %2572 = vmatprep.subr.bf16.mxu0 0
      %2573 = vmatpush1.bf16.msra.mxu0 0
      %2574 = vmatprep.subr.bf16.mxu0 0
      %2575 = vmatpush1.bf16.msra.mxu0 0
      %2576 = vmatprep.subr.bf16.mxu0 0
      %2577 = vmatpush1.bf16.msra.mxu0 0
      %2578 = vmatprep.subr.bf16.mxu0 0
      %2579 = vmatpush1.bf16.msra.mxu0 0
      %2580 = vmatprep.subr.bf16.mxu0 0
      %2581 = vmatpush1.bf16.msra.mxu0 0
      %2582 = vmatprep.subr.bf16.mxu0 0
      %2583 = vmatpush1.bf16.msra.mxu0 0
      %2584 = vmatprep.subr.bf16.mxu0 0
      %2585 = vmatpush1.bf16.msra.mxu0 0
      %2586 = vmatprep.subr.bf16.mxu0 0
      %2587 = vmatpush1.bf16.msra.mxu0 0
      %2588 = vmatprep.subr.bf16.mxu0 0
      %2589 = vmatpush1.bf16.msra.mxu0 0
      %2590 = vmatprep.mubr.bf16.mxu0 0
      %2591 = vmatmul.mubr.bf16.gmra.mrb[0].mxu0 %v2556
      %v2592 = vpop.f32.mrb[0].mxu0
      %v2593 = vadd.f32 0.0, %v2592
      %v2594 = vpop.f32.mrb[0].mxu0
      %v2595 = vadd.f32 0.0, %v2594
      %v2596 = vpop.f32.mrb[0].mxu0
      %v2597 = vadd.f32 0.0, %v2596
      %v2598 = vpop.f32.mrb[0].mxu0
      %v2599 = vadd.f32 0.0, %v2598
      %2600 = vdwg.mxu0
      %v2601 = vadd.f32 %v2497, %v2593
      %v2602 = vadd.f32 %v2498, %v2595
      %v2603 = vadd.f32 %v2499, %v2597
      %v2604 = vadd.f32 %v2500, %v2599
      %v2605 = vld [vmem:[%s779] sm:$0x3]
      %v2607 = vlaneseq
      %v2608 = vshrl.u32 %v2607, 7
      %v2609 = vsub.s32 0, %v2608
      %v2610 = vrot.slane %v2605, %v2609
      %v2611 = vlaneseq
      %v2612 = vshrl.u32 %v2611, 7
      %v2613 = vsub.s32 1, %v2612
      %v2614 = vrot.slane %v2605, %v2613
      %2615 = vrot.lane.b32.xlu0 %v2610, 15
      %v2616 = vpop.permute.xlu0 %2615
      %2617 = vrot.lane.b32.xlu0 %v2614, 15
      %v2618 = vpop.permute.xlu0 %2617
      %v2619 = vsel %vm794, %v2616, %v2618
      %v2623 = vmul.f32 %v2501, %v2616
      %v2624 = vmul.f32 %v2502, %v2619
      %v2625 = vmul.f32 %v2503, %v2618
      %v2626 = vmul.f32 %v2504, %v2616
      %v2627 = vmul.f32 %v2505, %v2619
      %v2628 = vmul.f32 %v2506, %v2618
      %s2629 = scalar_lea.vmem %s1, 192
      %v2630 = vld [vmem:[%s2629] sm:$0xf]
      %v2631 = vld [vmem:[%s2629 + $0x4] sm:$0xf]
      %v2632 = vpack.c.bf16 %v2626, %v2623
      %v2633 = vpack.c.bf16 %v2627, %v2624
      %v2634 = vpack.c.bf16 %v2628, %v2625
      %v2637 = vunpack.c.l.b16 %v2630
      %v2638 = vunpack.c.l.b16 %v2631
      %v2639 = vpack.c.b16 %v2638, %v2637
      %2643 = vrot.lane.b32.xlu0 %v2632, 113
      %v2644 = vpop.permute.xlu0 %2643
      %2645 = vrot.lane.b32.xlu0 %v2633, 113
      %v2646 = vpop.permute.xlu0 %2645
      %2647 = vrot.lane.b32.xlu0 %v2634, 113
      %v2648 = vpop.permute.xlu0 %2647
      %v2649 = vsel %vm825, %v2644, %v2646
      %v2650 = vsel %vm825, %v2646, %v2648
      %v2654 = vsel %vm298, %v2639, 0
      %2656 = vmatprep.subr.bf16.mxu0 %v2650
      %2657 = vmatpush1.bf16.msra.mxu0 %v2649
      %2658 = vmatprep.subr.bf16.mxu0 0
      %2659 = vmatpush1.bf16.msra.mxu0 0
      %2660 = vmatprep.subr.bf16.mxu0 0
      %2661 = vmatpush1.bf16.msra.mxu0 0
      %2662 = vmatprep.subr.bf16.mxu0 0
      %2663 = vmatpush1.bf16.msra.mxu0 0
      %2664 = vmatprep.subr.bf16.mxu0 0
      %2665 = vmatpush1.bf16.msra.mxu0 0
      %2666 = vmatprep.subr.bf16.mxu0 0
      %2667 = vmatpush1.bf16.msra.mxu0 0
      %2668 = vmatprep.subr.bf16.mxu0 0
      %2669 = vmatpush1.bf16.msra.mxu0 0
      %2670 = vmatprep.subr.bf16.mxu0 0
      %2671 = vmatpush1.bf16.msra.mxu0 0
      %2672 = vmatprep.subr.bf16.mxu0 0
      %2673 = vmatpush1.bf16.msra.mxu0 0
      %2674 = vmatprep.subr.bf16.mxu0 0
      %2675 = vmatpush1.bf16.msra.mxu0 0
      %2676 = vmatprep.subr.bf16.mxu0 0
      %2677 = vmatpush1.bf16.msra.mxu0 0
      %2678 = vmatprep.subr.bf16.mxu0 0
      %2679 = vmatpush1.bf16.msra.mxu0 0
      %2680 = vmatprep.subr.bf16.mxu0 0
      %2681 = vmatpush1.bf16.msra.mxu0 0
      %2682 = vmatprep.subr.bf16.mxu0 0
      %2683 = vmatpush1.bf16.msra.mxu0 0
      %2684 = vmatprep.subr.bf16.mxu0 0
      %2685 = vmatpush1.bf16.msra.mxu0 0
      %2686 = vmatprep.subr.bf16.mxu0 0
      %2687 = vmatpush1.bf16.msra.mxu0 0
      %2688 = vmatprep.mubr.bf16.mxu0 0
      %2689 = vmatmul.mubr.bf16.gmra.mrb[0].mxu0 %v2654
      %v2690 = vpop.f32.mrb[0].mxu0
      %v2691 = vadd.f32 0.0, %v2690
      %v2692 = vpop.f32.mrb[0].mxu0
      %v2693 = vadd.f32 0.0, %v2692
      %v2694 = vpop.f32.mrb[0].mxu0
      %v2695 = vadd.f32 0.0, %v2694
      %v2696 = vpop.f32.mrb[0].mxu0
      %v2697 = vadd.f32 0.0, %v2696
      %2698 = vdwg.mxu0
      %v2699 = vadd.f32 %v2601, %v2691
      %v2700 = vadd.f32 %v2602, %v2693
      %v2701 = vadd.f32 %v2603, %v2695
      %v2702 = vadd.f32 %v2604, %v2697
      %v2703 = vld [vmem:[%s880] sm:$0x3]
      %v2705 = vlaneseq
      %v2706 = vshrl.u32 %v2705, 7
      %v2707 = vsub.s32 0, %v2706
      %v2708 = vrot.slane %v2703, %v2707
      %v2709 = vlaneseq
      %v2710 = vshrl.u32 %v2709, 7
      %v2711 = vsub.s32 1, %v2710
      %v2712 = vrot.slane %v2703, %v2711
      %2713 = vrot.lane.b32.xlu0 %v2708, 16
      %v2714 = vpop.permute.xlu0 %2713
      %2715 = vrot.lane.b32.xlu0 %v2712, 16
      %v2716 = vpop.permute.xlu0 %2715
      %v2717 = vsel %vm298, %v2714, %v2716
      %v2721 = vmul.f32 %v2501, %v2714
      %v2722 = vmul.f32 %v2502, %v2717
      %v2723 = vmul.f32 %v2503, %v2716
      %v2724 = vmul.f32 %v2504, %v2714
      %v2725 = vmul.f32 %v2505, %v2717
      %v2726 = vmul.f32 %v2506, %v2716
      %s2727 = scalar_lea.vmem %s1, 200
      %v2728 = vld [vmem:[%s2727] sm:$0xf]
      %v2729 = vld [vmem:[%s2727 + $0x4] sm:$0xf]
      %v2730 = vpack.c.bf16 %v2724, %v2721
      %v2731 = vpack.c.bf16 %v2725, %v2722
      %v2732 = vpack.c.bf16 %v2726, %v2723
      %v2735 = vunpack.c.l.b16 %v2728
      %v2736 = vunpack.c.l.b16 %v2729
      %v2737 = vpack.c.b16 %v2736, %v2735
      %2741 = vrot.lane.b32.xlu0 %v2730, 112
      %v2742 = vpop.permute.xlu0 %2741
      %2743 = vrot.lane.b32.xlu0 %v2731, 112
      %v2744 = vpop.permute.xlu0 %2743
      %2745 = vrot.lane.b32.xlu0 %v2732, 112
      %v2746 = vpop.permute.xlu0 %2745
      %v2747 = vsel %vm925, %v2742, %v2744
      %v2748 = vsel %vm925, %v2744, %v2746
      %v2752 = vsel %vm298, %v2737, 0
      %2754 = vmatprep.subr.bf16.mxu0 %v2748
      %2755 = vmatpush1.bf16.msra.mxu0 %v2747
      %2756 = vmatprep.subr.bf16.mxu0 0
      %2757 = vmatpush1.bf16.msra.mxu0 0
      %2758 = vmatprep.subr.bf16.mxu0 0
      %2759 = vmatpush1.bf16.msra.mxu0 0
      %2760 = vmatprep.subr.bf16.mxu0 0
      %2761 = vmatpush1.bf16.msra.mxu0 0
      %2762 = vmatprep.subr.bf16.mxu0 0
      %2763 = vmatpush1.bf16.msra.mxu0 0
      %2764 = vmatprep.subr.bf16.mxu0 0
      %2765 = vmatpush1.bf16.msra.mxu0 0
      %2766 = vmatprep.subr.bf16.mxu0 0
      %2767 = vmatpush1.bf16.msra.mxu0 0
      %2768 = vmatprep.subr.bf16.mxu0 0
      %2769 = vmatpush1.bf16.msra.mxu0 0
      %2770 = vmatprep.subr.bf16.mxu0 0
      %2771 = vmatpush1.bf16.msra.mxu0 0
      %2772 = vmatprep.subr.bf16.mxu0 0
      %2773 = vmatpush1.bf16.msra.mxu0 0
      %2774 = vmatprep.subr.bf16.mxu0 0
      %2775 = vmatpush1.bf16.msra.mxu0 0
      %2776 = vmatprep.subr.bf16.mxu0 0
      %2777 = vmatpush1.bf16.msra.mxu0 0
      %2778 = vmatprep.subr.bf16.mxu0 0
      %2779 = vmatpush1.bf16.msra.mxu0 0
      %2780 = vmatprep.subr.bf16.mxu0 0
      %2781 = vmatpush1.bf16.msra.mxu0 0
      %2782 = vmatprep.subr.bf16.mxu0 0
      %2783 = vmatpush1.bf16.msra.mxu0 0
      %2784 = vmatprep.subr.bf16.mxu0 0
      %2785 = vmatpush1.bf16.msra.mxu0 0
      %2786 = vmatprep.mubr.bf16.mxu0 0
      %2787 = vmatmul.mubr.bf16.gmra.mrb[0].mxu0 %v2752
      %v2788 = vpop.f32.mrb[0].mxu0
      %v2789 = vadd.f32 0.0, %v2788
      %v2790 = vpop.f32.mrb[0].mxu0
      %v2791 = vadd.f32 0.0, %v2790
      %v2792 = vpop.f32.mrb[0].mxu0
      %v2793 = vadd.f32 0.0, %v2792
      %v2794 = vpop.f32.mrb[0].mxu0
      %v2795 = vadd.f32 0.0, %v2794
      %2796 = vdwg.mxu0
      %v2797 = vadd.f32 %v2699, %v2789
      %v2798 = vadd.f32 %v2700, %v2791
      %v2799 = vadd.f32 %v2701, %v2793
      %v2800 = vadd.f32 %v2702, %v2795
      %v2801 = vld [vmem:[%s980] sm:$0x3]
      %v2803 = vlaneseq
      %v2804 = vshrl.u32 %v2803, 7
      %v2805 = vsub.s32 0, %v2804
      %v2806 = vrot.slane %v2801, %v2805
      %v2807 = vlaneseq
      %v2808 = vshrl.u32 %v2807, 7
      %v2809 = vsub.s32 1, %v2808
      %v2810 = vrot.slane %v2801, %v2809
      %2811 = vrot.lane.b32.xlu0 %v2806, 17
      %v2812 = vpop.permute.xlu0 %2811
      %2813 = vrot.lane.b32.xlu0 %v2810, 17
      %v2814 = vpop.permute.xlu0 %2813
      %v2815 = vsel %vm995, %v2812, %v2814
      %v2819 = vmul.f32 %v2501, %v2812
      %v2820 = vmul.f32 %v2502, %v2815
      %v2821 = vmul.f32 %v2503, %v2814
      %v2822 = vmul.f32 %v2504, %v2812
      %v2823 = vmul.f32 %v2505, %v2815
      %v2824 = vmul.f32 %v2506, %v2814
      %s2825 = scalar_lea.vmem %s1, 208
      %v2826 = vld [vmem:[%s2825] sm:$0xf]
      %v2827 = vld [vmem:[%s2825 + $0x4] sm:$0xf]
      %v2828 = vpack.c.bf16 %v2822, %v2819
      %v2829 = vpack.c.bf16 %v2823, %v2820
      %v2830 = vpack.c.bf16 %v2824, %v2821
      %v2833 = vunpack.c.l.b16 %v2826
      %v2834 = vunpack.c.l.b16 %v2827
      %v2835 = vpack.c.b16 %v2834, %v2833
      %2839 = vrot.lane.b32.xlu0 %v2828, 111
      %v2840 = vpop.permute.xlu0 %2839
      %2841 = vrot.lane.b32.xlu0 %v2829, 111
      %v2842 = vpop.permute.xlu0 %2841
      %2843 = vrot.lane.b32.xlu0 %v2830, 111
      %v2844 = vpop.permute.xlu0 %2843
      %v2845 = vsel %vm1026, %v2840, %v2842
      %v2846 = vsel %vm1026, %v2842, %v2844
      %v2850 = vsel %vm298, %v2835, 0
      %2852 = vmatprep.subr.bf16.mxu0 %v2846
      %2853 = vmatpush1.bf16.msra.mxu0 %v2845
      %2854 = vmatprep.subr.bf16.mxu0 0
      %2855 = vmatpush1.bf16.msra.mxu0 0
      %2856 = vmatprep.subr.bf16.mxu0 0
      %2857 = vmatpush1.bf16.msra.mxu0 0
      %2858 = vmatprep.subr.bf16.mxu0 0
      %2859 = vmatpush1.bf16.msra.mxu0 0
      %2860 = vmatprep.subr.bf16.mxu0 0
      %2861 = vmatpush1.bf16.msra.mxu0 0
      %2862 = vmatprep.subr.bf16.mxu0 0
      %2863 = vmatpush1.bf16.msra.mxu0 0
      %2864 = vmatprep.subr.bf16.mxu0 0
      %2865 = vmatpush1.bf16.msra.mxu0 0
      %2866 = vmatprep.subr.bf16.mxu0 0
      %2867 = vmatpush1.bf16.msra.mxu0 0
      %2868 = vmatprep.subr.bf16.mxu0 0
      %2869 = vmatpush1.bf16.msra.mxu0 0
      %2870 = vmatprep.subr.bf16.mxu0 0
      %2871 = vmatpush1.bf16.msra.mxu0 0
      %2872 = vmatprep.subr.bf16.mxu0 0
      %2873 = vmatpush1.bf16.msra.mxu0 0
      %2874 = vmatprep.subr.bf16.mxu0 0
      %2875 = vmatpush1.bf16.msra.mxu0 0
      %2876 = vmatprep.subr.bf16.mxu0 0
      %2877 = vmatpush1.bf16.msra.mxu0 0
      %2878 = vmatprep.subr.bf16.mxu0 0
      %2879 = vmatpush1.bf16.msra.mxu0 0
      %2880 = vmatprep.subr.bf16.mxu0 0
      %2881 = vmatpush1.bf16.msra.mxu0 0
      %2882 = vmatprep.subr.bf16.mxu0 0
      %2883 = vmatpush1.bf16.msra.mxu0 0
      %2884 = vmatprep.mubr.bf16.mxu0 0
      %2885 = vmatmul.mubr.bf16.gmra.mrb[0].mxu0 %v2850
      %v2886 = vpop.f32.mrb[0].mxu0
      %v2887 = vadd.f32 0.0, %v2886
      %v2888 = vpop.f32.mrb[0].mxu0
      %v2889 = vadd.f32 0.0, %v2888
      %v2890 = vpop.f32.mrb[0].mxu0
      %v2891 = vadd.f32 0.0, %v2890
      %v2892 = vpop.f32.mrb[0].mxu0
      %v2893 = vadd.f32 0.0, %v2892
      %2894 = vdwg.mxu0
      %v2895 = vadd.f32 %v2797, %v2887
      %v2896 = vadd.f32 %v2798, %v2889
      %v2897 = vadd.f32 %v2799, %v2891
      %v2898 = vadd.f32 %v2800, %v2893
      %s2899 = scalar_lea.vmem %s2, 32
      %v2900 = vld [vmem:[%s2899] sm:$0xff]
      %v2901 = vld [vmem:[%s2899 + $0x8] sm:$0xff]
      %2903 = vset.pattern.permute.xlu0 0
      %2904 = vperm.xlu0 %2903, %v2900
      %v2905 = vpop.permute.xlu0 %2904
      %2908 = vset.pattern.permute.xlu0 0
      %2909 = vperm.xlu0 %2908, %v2901
      %v2910 = vpop.permute.xlu0 %2909
      %v2912 = vadd.f32 %v2895, %v2905
      %v2913 = vadd.f32 %v2896, %v2905
      %v2914 = vadd.f32 %v2897, %v2910
      %v2915 = vadd.f32 %v2898, %v2910
      %v2916 = vadd.f32 %v2912, %v2913
      %2917 = vadd.xlane.f32.xlu0 %v2916
      %v2918 = vpop.xlane.xlu0 %2917
      %v2919 = vadd.f32 %v2914, %v2915
      %2920 = vadd.xlane.f32.xlu0 %v2919
      %v2921 = vpop.xlane.xlu0 %2920
      %v2922 = vmul.f32 %v2918, %v1103
      %v2923 = vmul.f32 %v2921, %v1103
      %v2924 = vsub.f32 %v2912, %v2922
      %v2925 = vsub.f32 %v2913, %v2922
      %v2926 = vsub.f32 %v2914, %v2923
      %v2927 = vsub.f32 %v2915, %v2923
      %v2928 = vmul.f32 %v2924, %v2924
      %v2929 = vmul.f32 %v2925, %v2925
      %v2930 = vmul.f32 %v2926, %v2926
      %v2931 = vmul.f32 %v2927, %v2927
      %v2932 = vadd.f32 %v2928, %v2929
      %2933 = vadd.xlane.f32.xlu0 %v2932
      %v2934 = vpop.xlane.xlu0 %2933
      %v2935 = vadd.f32 %v2930, %v2931
      %2936 = vadd.xlane.f32.xlu0 %v2935
      %v2937 = vpop.xlane.xlu0 %2936
      %v2938 = vmul.f32 %v2934, %v1103
      %v2939 = vmul.f32 %v2937, %v1103
      %v2940 = vadd.f32 %v2938, 1e-05
      %v2941 = vadd.f32 %v2939, 1e-05
      %v2942 = vrsqrt.pop %v2940
      %v2943 = vrsqrt.pop %v2941
      %v2944 = vmul.f32 %v2924, %v2942
      %v2945 = vmul.f32 %v2925, %v2942
      %v2946 = vmul.f32 %v2926, %v2943
      %v2947 = vmul.f32 %v2927, %v2943
      %v2948 = vmax.f32 %v2944, 0.0
      %v2949 = vmax.f32 %v2945, 0.0
      %v2950 = vmax.f32 %v2946, 0.0
      %v2951 = vmax.f32 %v2947, 0.0
      %2952 = vst [vmem:[#allocation2] sm:$0xff] %v2948
      %2953 = vst [vmem:[#allocation2 + $0x8] sm:$0xff] %v2949
      %2954 = vst [vmem:[#allocation2 + $0x20] sm:$0xff] %v2950
      %2955 = vst [vmem:[#allocation2 + $0x28] sm:$0xff] %v2951
      %2956 = vst [vmem:[#allocation2 + $0x10] sm:$0xff] %v2948
      %2957 = vst [vmem:[#allocation2 + $0x18] sm:$0xff] %v2949
      %2958 = vst [vmem:[#allocation2 + $0x30] sm:$0xff] %v2950
      %2959 = vst [vmem:[#allocation2 + $0x38] sm:$0xff] %v2951
      %v2960 = vld [vmem:[#allocation2 + $0x8] sm:$0xff]
      %v2961 = vld [vmem:[#allocation2 + $0x10] sm:$0xff]
      %v2962 = vld [vmem:[#allocation2 + $0x18] sm:$0xff]
      %v2963 = vld [vmem:[#allocation2 + $0x28] sm:$0xff]
      %v2964 = vld [vmem:[#allocation2 + $0x30] sm:$0xff]
      %v2965 = vld [vmem:[#allocation2 + $0x38] sm:$0xff]
      %v2966 = vld [vmem:[%s3] sm:$0x3]
      %v2968 = vlaneseq
      %v2969 = vshrl.u32 %v2968, 7
      %v2970 = vsub.s32 0, %v2969
      %v2971 = vrot.slane %v2966, %v2970
      %v2972 = vlaneseq
      %v2973 = vshrl.u32 %v2972, 7
      %v2974 = vsub.s32 1, %v2973
      %v2975 = vrot.slane %v2966, %v2974
      %2976 = vrot.lane.b32.xlu0 %v2971, 111
      %v2977 = vpop.permute.xlu0 %2976
      %2978 = vrot.lane.b32.xlu0 %v2975, 111
      %v2979 = vpop.permute.xlu0 %2978
      %v2980 = vsel %vm231, %v2977, %v2979
      %v2984 = vmul.f32 %v2960, %v2977
      %v2985 = vmul.f32 %v2961, %v2980
      %v2986 = vmul.f32 %v2962, %v2979
      %v2987 = vmul.f32 %v2963, %v2977
      %v2988 = vmul.f32 %v2964, %v2980
      %v2989 = vmul.f32 %v2965, %v2979
      %s2990 = scalar_lea.vmem %s1, 216
      %v2991 = vld [vmem:[%s2990] sm:$0xf]
      %v2992 = vld [vmem:[%s2990 + $0x4] sm:$0xf]
      %v2993 = vpack.c.bf16 %v2987, %v2984
      %v2994 = vpack.c.bf16 %v2988, %v2985
      %v2995 = vpack.c.bf16 %v2989, %v2986
      %v2996 = vld [vmem:[%s247] sm:$0x3]
      %v2998 = vlaneseq
      %v2999 = vshrl.u32 %v2998, 7
      %v3000 = vsub.s32 0, %v2999
      %v3001 = vrot.slane %v2996, %v3000
      %v3002 = vlaneseq
      %v3003 = vshrl.u32 %v3002, 7
      %v3004 = vsub.s32 1, %v3003
      %v3005 = vrot.slane %v2996, %v3004
      %3006 = vrot.lane.b32.xlu0 %v3001, 112
      %v3007 = vpop.permute.xlu0 %3006
      %3008 = vrot.lane.b32.xlu0 %v3005, 112
      %v3009 = vpop.permute.xlu0 %3008
      %v3010 = vsel %vm262, %v3007, %v3009
      %v3014 = vmul.f32 %v2960, %v3007
      %v3015 = vmul.f32 %v2961, %v3010
      %v3016 = vmul.f32 %v2962, %v3009
      %v3017 = vmul.f32 %v2963, %v3007
      %v3018 = vmul.f32 %v2964, %v3010
      %v3019 = vmul.f32 %v2965, %v3009
      %s3020 = scalar_lea.vmem %s1, 224
      %v3021 = vld [vmem:[%s3020] sm:$0xf]
      %v3022 = vld [vmem:[%s3020 + $0x4] sm:$0xf]
      %v3023 = vpack.c.bf16 %v3017, %v3014
      %v3024 = vpack.c.bf16 %v3018, %v3015
      %v3025 = vpack.c.bf16 %v3019, %v3016
      %v3028 = vunpack.c.l.b16 %v3021
      %v3029 = vunpack.c.l.b16 %v3022
      %v3030 = vpack.c.b16 %v3029, %v3028
      %3034 = vrot.lane.b32.xlu0 %v3023, 16
      %v3035 = vpop.permute.xlu0 %3034
      %3036 = vrot.lane.b32.xlu0 %v3024, 16
      %v3037 = vpop.permute.xlu0 %3036
      %3038 = vrot.lane.b32.xlu0 %v3025, 16
      %v3039 = vpop.permute.xlu0 %3038
      %v3040 = vsel %vm293, %v3035, %v3037
      %v3041 = vsel %vm293, %v3037, %v3039
      %v3045 = vsel %vm298, %v3030, 0
      %3047 = vmatprep.subr.bf16.mxu0 %v3041
      %3048 = vmatpush1.bf16.msra.mxu0 %v3040
      %3049 = vmatprep.subr.bf16.mxu0 0
      %3050 = vmatpush1.bf16.msra.mxu0 0
      %3051 = vmatprep.subr.bf16.mxu0 0
      %3052 = vmatpush1.bf16.msra.mxu0 0
      %3053 = vmatprep.subr.bf16.mxu0 0
      %3054 = vmatpush1.bf16.msra.mxu0 0
      %3055 = vmatprep.subr.bf16.mxu0 0
      %3056 = vmatpush1.bf16.msra.mxu0 0
      %3057 = vmatprep.subr.bf16.mxu0 0
      %3058 = vmatpush1.bf16.msra.mxu0 0
      %3059 = vmatprep.subr.bf16.mxu0 0
      %3060 = vmatpush1.bf16.msra.mxu0 0
      %3061 = vmatprep.subr.bf16.mxu0 0
      %3062 = vmatpush1.bf16.msra.mxu0 0
      %3063 = vmatprep.subr.bf16.mxu0 0
      %3064 = vmatpush1.bf16.msra.mxu0 0
      %3065 = vmatprep.subr.bf16.mxu0 0
      %3066 = vmatpush1.bf16.msra.mxu0 0
      %3067 = vmatprep.subr.bf16.mxu0 0
      %3068 = vmatpush1.bf16.msra.mxu0 0
      %3069 = vmatprep.subr.bf16.mxu0 0
      %3070 = vmatpush1.bf16.msra.mxu0 0
      %3071 = vmatprep.subr.bf16.mxu0 0
      %3072 = vmatpush1.bf16.msra.mxu0 0
      %3073 = vmatprep.subr.bf16.mxu0 0
      %3074 = vmatpush1.bf16.msra.mxu0 0
      %3075 = vmatprep.subr.bf16.mxu0 0
      %3076 = vmatpush1.bf16.msra.mxu0 0
      %3077 = vmatprep.subr.bf16.mxu0 0
      %3078 = vmatpush1.bf16.msra.mxu0 0
      %3079 = vmatprep.mubr.bf16.mxu0 0
      %3080 = vmatmul.mubr.bf16.gmra.mrb[0].mxu0 %v3045
      %v3081 = vpop.f32.mrb[0].mxu0
      %v3082 = vadd.f32 0.0, %v3081
      %v3083 = vpop.f32.mrb[0].mxu0
      %v3084 = vadd.f32 0.0, %v3083
      %v3085 = vpop.f32.mrb[0].mxu0
      %v3086 = vadd.f32 0.0, %v3085
      %v3087 = vpop.f32.mrb[0].mxu0
      %v3088 = vadd.f32 0.0, %v3087
      %3089 = vdwg.mxu0
      %v3092 = vunpack.c.l.b16 %v2991
      %v3093 = vunpack.c.l.b16 %v2992
      %v3094 = vpack.c.b16 %v3093, %v3092
      %3098 = vrot.lane.b32.xlu0 %v2993, 17
      %v3099 = vpop.permute.xlu0 %3098
      %3100 = vrot.lane.b32.xlu0 %v2994, 17
      %v3101 = vpop.permute.xlu0 %3100
      %3102 = vrot.lane.b32.xlu0 %v2995, 17
      %v3103 = vpop.permute.xlu0 %3102
      %v3104 = vsel %vm359, %v3099, %v3101
      %v3105 = vsel %vm359, %v3101, %v3103
      %v3109 = vsel %vm298, %v3094, 0
      %3111 = vmatprep.subr.bf16.mxu0 %v3105
      %3112 = vmatpush1.bf16.msra.mxu0 %v3104
      %3113 = vmatprep.subr.bf16.mxu0 0
      %3114 = vmatpush1.bf16.msra.mxu0 0
      %3115 = vmatprep.subr.bf16.mxu0 0
      %3116 = vmatpush1.bf16.msra.mxu0 0
      %3117 = vmatprep.subr.bf16.mxu0 0
      %3118 = vmatpush1.bf16.msra.mxu0 0
      %3119 = vmatprep.subr.bf16.mxu0 0
      %3120 = vmatpush1.bf16.msra.mxu0 0
      %3121 = vmatprep.subr.bf16.mxu0 0
      %3122 = vmatpush1.bf16.msra.mxu0 0
      %3123 = vmatprep.subr.bf16.mxu0 0
      %3124 = vmatpush1.bf16.msra.mxu0 0
      %3125 = vmatprep.subr.bf16.mxu0 0
      %3126 = vmatpush1.bf16.msra.mxu0 0
      %3127 = vmatprep.subr.bf16.mxu0 0
      %3128 = vmatpush1.bf16.msra.mxu0 0
      %3129 = vmatprep.subr.bf16.mxu0 0
      %3130 = vmatpush1.bf16.msra.mxu0 0
      %3131 = vmatprep.subr.bf16.mxu0 0
      %3132 = vmatpush1.bf16.msra.mxu0 0
      %3133 = vmatprep.subr.bf16.mxu0 0
      %3134 = vmatpush1.bf16.msra.mxu0 0
      %3135 = vmatprep.subr.bf16.mxu0 0
      %3136 = vmatpush1.bf16.msra.mxu0 0
      %3137 = vmatprep.subr.bf16.mxu0 0
      %3138 = vmatpush1.bf16.msra.mxu0 0
      %3139 = vmatprep.subr.bf16.mxu0 0
      %3140 = vmatpush1.bf16.msra.mxu0 0
      %3141 = vmatprep.subr.bf16.mxu0 0
      %3142 = vmatpush1.bf16.msra.mxu0 0
      %3143 = vmatprep.mubr.bf16.mxu0 0
      %3144 = vmatmul.mubr.bf16.gmra.mrb[0].mxu0 %v3109
      %v3145 = vpop.f32.mrb[0].mxu0
      %v3146 = vadd.f32 %v3082, %v3145
      %v3147 = vpop.f32.mrb[0].mxu0
      %v3148 = vadd.f32 %v3084, %v3147
      %v3149 = vpop.f32.mrb[0].mxu0
      %v3150 = vadd.f32 %v3086, %v3149
      %v3151 = vpop.f32.mrb[0].mxu0
      %v3152 = vadd.f32 %v3088, %v3151
      %3153 = vdwg.mxu0
      %v3154 = vld [vmem:[%s410] sm:$0x3]
      %v3156 = vlaneseq
      %v3157 = vshrl.u32 %v3156, 7
      %v3158 = vsub.s32 0, %v3157
      %v3159 = vrot.slane %v3154, %v3158
      %v3160 = vlaneseq
      %v3161 = vshrl.u32 %v3160, 7
      %v3162 = vsub.s32 1, %v3161
      %v3163 = vrot.slane %v3154, %v3162
      %3164 = vrot.lane.b32.xlu0 %v3159, 113
      %v3165 = vpop.permute.xlu0 %3164
      %3166 = vrot.lane.b32.xlu0 %v3163, 113
      %v3167 = vpop.permute.xlu0 %3166
      %v3168 = vsel %vm425, %v3165, %v3167
      %v3172 = vmul.f32 %v2960, %v3165
      %v3173 = vmul.f32 %v2961, %v3168
      %v3174 = vmul.f32 %v2962, %v3167
      %v3175 = vmul.f32 %v2963, %v3165
      %v3176 = vmul.f32 %v2964, %v3168
      %v3177 = vmul.f32 %v2965, %v3167
      %s3178 = scalar_lea.vmem %s1, 232
      %v3179 = vld [vmem:[%s3178] sm:$0xf]
      %v3180 = vld [vmem:[%s3178 + $0x4] sm:$0xf]
      %v3181 = vpack.c.bf16 %v3175, %v3172
      %v3182 = vpack.c.bf16 %v3176, %v3173
      %v3183 = vpack.c.bf16 %v3177, %v3174
      %v3186 = vunpack.c.l.b16 %v3179
      %v3187 = vunpack.c.l.b16 %v3180
      %v3188 = vpack.c.b16 %v3187, %v3186
      %3192 = vrot.lane.b32.xlu0 %v3181, 15
      %v3193 = vpop.permute.xlu0 %3192
      %3194 = vrot.lane.b32.xlu0 %v3182, 15
      %v3195 = vpop.permute.xlu0 %3194
      %3196 = vrot.lane.b32.xlu0 %v3183, 15
      %v3197 = vpop.permute.xlu0 %3196
      %v3198 = vsel %vm456, %v3193, %v3195
      %v3199 = vsel %vm456, %v3195, %v3197
      %v3203 = vsel %vm298, %v3188, 0
      %3205 = vmatprep.subr.bf16.mxu0 %v3199
      %3206 = vmatpush1.bf16.msra.mxu0 %v3198
      %3207 = vmatprep.subr.bf16.mxu0 0
      %3208 = vmatpush1.bf16.msra.mxu0 0
      %3209 = vmatprep.subr.bf16.mxu0 0
      %3210 = vmatpush1.bf16.msra.mxu0 0
      %3211 = vmatprep.subr.bf16.mxu0 0
      %3212 = vmatpush1.bf16.msra.mxu0 0
      %3213 = vmatprep.subr.bf16.mxu0 0
      %3214 = vmatpush1.bf16.msra.mxu0 0
      %3215 = vmatprep.subr.bf16.mxu0 0
      %3216 = vmatpush1.bf16.msra.mxu0 0
      %3217 = vmatprep.subr.bf16.mxu0 0
      %3218 = vmatpush1.bf16.msra.mxu0 0
      %3219 = vmatprep.subr.bf16.mxu0 0
      %3220 = vmatpush1.bf16.msra.mxu0 0
      %3221 = vmatprep.subr.bf16.mxu0 0
      %3222 = vmatpush1.bf16.msra.mxu0 0
      %3223 = vmatprep.subr.bf16.mxu0 0
      %3224 = vmatpush1.bf16.msra.mxu0 0
      %3225 = vmatprep.subr.bf16.mxu0 0
      %3226 = vmatpush1.bf16.msra.mxu0 0
      %3227 = vmatprep.subr.bf16.mxu0 0
      %3228 = vmatpush1.bf16.msra.mxu0 0
      %3229 = vmatprep.subr.bf16.mxu0 0
      %3230 = vmatpush1.bf16.msra.mxu0 0
      %3231 = vmatprep.subr.bf16.mxu0 0
      %3232 = vmatpush1.bf16.msra.mxu0 0
      %3233 = vmatprep.subr.bf16.mxu0 0
      %3234 = vmatpush1.bf16.msra.mxu0 0
      %3235 = vmatprep.subr.bf16.mxu0 0
      %3236 = vmatpush1.bf16.msra.mxu0 0
      %3237 = vmatprep.mubr.bf16.mxu0 0
      %3238 = vmatmul.mubr.bf16.gmra.mrb[0].mxu0 %v3203
      %v3239 = vpop.f32.mrb[0].mxu0
      %v3240 = vadd.f32 0.0, %v3239
      %v3241 = vpop.f32.mrb[0].mxu0
      %v3242 = vadd.f32 0.0, %v3241
      %v3243 = vpop.f32.mrb[0].mxu0
      %v3244 = vadd.f32 0.0, %v3243
      %v3245 = vpop.f32.mrb[0].mxu0
      %v3246 = vadd.f32 0.0, %v3245
      %3247 = vdwg.mxu0
      %v3248 = vadd.f32 %v3146, %v3240
      %v3249 = vadd.f32 %v3148, %v3242
      %v3250 = vadd.f32 %v3150, %v3244
      %v3251 = vadd.f32 %v3152, %v3246
      %v3252 = vld [vmem:[%s511] sm:$0x3]
      %v3254 = vlaneseq
      %v3255 = vshrl.u32 %v3254, 7
      %v3256 = vsub.s32 0, %v3255
      %v3257 = vrot.slane %v3252, %v3256
      %v3258 = vlaneseq
      %v3259 = vshrl.u32 %v3258, 7
      %v3260 = vsub.s32 1, %v3259
      %v3261 = vrot.slane %v3252, %v3260
      %3262 = vrot.lane.b32.xlu0 %v3257, 127
      %v3263 = vpop.permute.xlu0 %3262
      %3264 = vrot.lane.b32.xlu0 %v3261, 127
      %v3265 = vpop.permute.xlu0 %3264
      %v3266 = vsel %vm526, %v3263, %v3265
      %v3270 = vmul.f32 %v2960, %v3263
      %v3271 = vmul.f32 %v2961, %v3266
      %v3272 = vmul.f32 %v2962, %v3265
      %v3273 = vmul.f32 %v2963, %v3263
      %v3274 = vmul.f32 %v2964, %v3266
      %v3275 = vmul.f32 %v2965, %v3265
      %s3276 = scalar_lea.vmem %s1, 240
      %v3277 = vld [vmem:[%s3276] sm:$0xf]
      %v3278 = vld [vmem:[%s3276 + $0x4] sm:$0xf]
      %v3279 = vpack.c.bf16 %v3273, %v3270
      %v3280 = vpack.c.bf16 %v3274, %v3271
      %v3281 = vpack.c.bf16 %v3275, %v3272
      %v3284 = vunpack.c.l.b16 %v3277
      %v3285 = vunpack.c.l.b16 %v3278
      %v3286 = vpack.c.b16 %v3285, %v3284
      %3290 = vrot.lane.b32.xlu0 %v3279, 1
      %v3291 = vpop.permute.xlu0 %3290
      %3292 = vrot.lane.b32.xlu0 %v3280, 1
      %v3293 = vpop.permute.xlu0 %3292
      %3294 = vrot.lane.b32.xlu0 %v3281, 1
      %v3295 = vpop.permute.xlu0 %3294
      %v3296 = vsel %vm557, %v3291, %v3293
      %v3297 = vsel %vm557, %v3293, %v3295
      %v3301 = vsel %vm298, %v3286, 0
      %3303 = vmatprep.subr.bf16.mxu0 %v3297
      %3304 = vmatpush1.bf16.msra.mxu0 %v3296
      %3305 = vmatprep.subr.bf16.mxu0 0
      %3306 = vmatpush1.bf16.msra.mxu0 0
      %3307 = vmatprep.subr.bf16.mxu0 0
      %3308 = vmatpush1.bf16.msra.mxu0 0
      %3309 = vmatprep.subr.bf16.mxu0 0
      %3310 = vmatpush1.bf16.msra.mxu0 0
      %3311 = vmatprep.subr.bf16.mxu0 0
      %3312 = vmatpush1.bf16.msra.mxu0 0
      %3313 = vmatprep.subr.bf16.mxu0 0
      %3314 = vmatpush1.bf16.msra.mxu0 0
      %3315 = vmatprep.subr.bf16.mxu0 0
      %3316 = vmatpush1.bf16.msra.mxu0 0
      %3317 = vmatprep.subr.bf16.mxu0 0
      %3318 = vmatpush1.bf16.msra.mxu0 0
      %3319 = vmatprep.subr.bf16.mxu0 0
      %3320 = vmatpush1.bf16.msra.mxu0 0
      %3321 = vmatprep.subr.bf16.mxu0 0
      %3322 = vmatpush1.bf16.msra.mxu0 0
      %3323 = vmatprep.subr.bf16.mxu0 0
      %3324 = vmatpush1.bf16.msra.mxu0 0
      %3325 = vmatprep.subr.bf16.mxu0 0
      %3326 = vmatpush1.bf16.msra.mxu0 0
      %3327 = vmatprep.subr.bf16.mxu0 0
      %3328 = vmatpush1.bf16.msra.mxu0 0
      %3329 = vmatprep.subr.bf16.mxu0 0
      %3330 = vmatpush1.bf16.msra.mxu0 0
      %3331 = vmatprep.subr.bf16.mxu0 0
      %3332 = vmatpush1.bf16.msra.mxu0 0
      %3333 = vmatprep.subr.bf16.mxu0 0
      %3334 = vmatpush1.bf16.msra.mxu0 0
      %3335 = vmatprep.mubr.bf16.mxu0 0
      %3336 = vmatmul.mubr.bf16.gmra.mrb[0].mxu0 %v3301
      %v3337 = vpop.f32.mrb[0].mxu0
      %v3338 = vadd.f32 0.0, %v3337
      %v3339 = vpop.f32.mrb[0].mxu0
      %v3340 = vadd.f32 0.0, %v3339
      %v3341 = vpop.f32.mrb[0].mxu0
      %v3342 = vadd.f32 0.0, %v3341
      %v3343 = vpop.f32.mrb[0].mxu0
      %v3344 = vadd.f32 0.0, %v3343
      %3345 = vdwg.mxu0
      %v3346 = vadd.f32 %v3248, %v3338
      %v3347 = vadd.f32 %v3249, %v3340
      %v3348 = vadd.f32 %v3250, %v3342
      %v3349 = vadd.f32 %v3251, %v3344
      %s3350 = scalar_lea.vmem %s1, 248
      %v3351 = vld [vmem:[%s3350] sm:$0xf]
      %v3352 = vld [vmem:[%s3350 + $0x4] sm:$0xf]
      %v3353 = vpack.c.bf16 %v2950, %v2948
      %v3354 = vpack.c.bf16 %v2951, %v2949
      %v3357 = vunpack.c.l.b16 %v3351
      %v3358 = vunpack.c.l.b16 %v3352
      %v3359 = vpack.c.b16 %v3358, %v3357
      %v3361 = vsel %vm298, %v3359, 0
      %3363 = vmatprep.subr.bf16.mxu0 %v3354
      %3364 = vmatpush1.bf16.msra.mxu0 %v3353
      %3365 = vmatprep.subr.bf16.mxu0 0
      %3366 = vmatpush1.bf16.msra.mxu0 0
      %3367 = vmatprep.subr.bf16.mxu0 0
      %3368 = vmatpush1.bf16.msra.mxu0 0
      %3369 = vmatprep.subr.bf16.mxu0 0
      %3370 = vmatpush1.bf16.msra.mxu0 0
      %3371 = vmatprep.subr.bf16.mxu0 0
      %3372 = vmatpush1.bf16.msra.mxu0 0
      %3373 = vmatprep.subr.bf16.mxu0 0
      %3374 = vmatpush1.bf16.msra.mxu0 0
      %3375 = vmatprep.subr.bf16.mxu0 0
      %3376 = vmatpush1.bf16.msra.mxu0 0
      %3377 = vmatprep.subr.bf16.mxu0 0
      %3378 = vmatpush1.bf16.msra.mxu0 0
      %3379 = vmatprep.subr.bf16.mxu0 0
      %3380 = vmatpush1.bf16.msra.mxu0 0
      %3381 = vmatprep.subr.bf16.mxu0 0
      %3382 = vmatpush1.bf16.msra.mxu0 0
      %3383 = vmatprep.subr.bf16.mxu0 0
      %3384 = vmatpush1.bf16.msra.mxu0 0
      %3385 = vmatprep.subr.bf16.mxu0 0
      %3386 = vmatpush1.bf16.msra.mxu0 0
      %3387 = vmatprep.subr.bf16.mxu0 0
      %3388 = vmatpush1.bf16.msra.mxu0 0
      %3389 = vmatprep.subr.bf16.mxu0 0
      %3390 = vmatpush1.bf16.msra.mxu0 0
      %3391 = vmatprep.subr.bf16.mxu0 0
      %3392 = vmatpush1.bf16.msra.mxu0 0
      %3393 = vmatprep.subr.bf16.mxu0 0
      %3394 = vmatpush1.bf16.msra.mxu0 0
      %3395 = vmatprep.mubr.bf16.mxu0 0
      %3396 = vmatmul.mubr.bf16.gmra.mrb[0].mxu0 %v3361
      %v3397 = vpop.f32.mrb[0].mxu0
      %v3398 = vadd.f32 0.0, %v3397
      %v3399 = vpop.f32.mrb[0].mxu0
      %v3400 = vadd.f32 0.0, %v3399
      %v3401 = vpop.f32.mrb[0].mxu0
      %v3402 = vadd.f32 0.0, %v3401
      %v3403 = vpop.f32.mrb[0].mxu0
      %v3404 = vadd.f32 0.0, %v3403
      %3405 = vdwg.mxu0
      %v3406 = vadd.f32 %v3346, %v3398
      %v3407 = vadd.f32 %v3347, %v3400
      %v3408 = vadd.f32 %v3348, %v3402
      %v3409 = vadd.f32 %v3349, %v3404
      %v3410 = vld [vmem:[#allocation2] sm:$0xff]
      %v3411 = vld [vmem:[#allocation2 + $0x8] sm:$0xff]
      %v3412 = vld [vmem:[#allocation2 + $0x10] sm:$0xff]
      %v3413 = vld [vmem:[#allocation2 + $0x20] sm:$0xff]
      %v3414 = vld [vmem:[#allocation2 + $0x28] sm:$0xff]
      %v3415 = vld [vmem:[#allocation2 + $0x30] sm:$0xff]
      %v3416 = vld [vmem:[%s678] sm:$0x3]
      %v3418 = vlaneseq
      %v3419 = vshrl.u32 %v3418, 7
      %v3420 = vsub.s32 0, %v3419
      %v3421 = vrot.slane %v3416, %v3420
      %v3422 = vlaneseq
      %v3423 = vshrl.u32 %v3422, 7
      %v3424 = vsub.s32 1, %v3423
      %v3425 = vrot.slane %v3416, %v3424
      %3426 = vrot.lane.b32.xlu0 %v3421, 1
      %v3427 = vpop.permute.xlu0 %3426
      %3428 = vrot.lane.b32.xlu0 %v3425, 1
      %v3429 = vpop.permute.xlu0 %3428
      %v3430 = vsel %vm693, %v3427, %v3429
      %v3434 = vmul.f32 %v3410, %v3427
      %v3435 = vmul.f32 %v3411, %v3430
      %v3436 = vmul.f32 %v3412, %v3429
      %v3437 = vmul.f32 %v3413, %v3427
      %v3438 = vmul.f32 %v3414, %v3430
      %v3439 = vmul.f32 %v3415, %v3429
      %s3440 = scalar_lea.vmem %s1, 256
      %v3441 = vld [vmem:[%s3440] sm:$0xf]
      %v3442 = vld [vmem:[%s3440 + $0x4] sm:$0xf]
      %v3443 = vpack.c.bf16 %v3437, %v3434
      %v3444 = vpack.c.bf16 %v3438, %v3435
      %v3445 = vpack.c.bf16 %v3439, %v3436
      %v3448 = vunpack.c.l.b16 %v3441
      %v3449 = vunpack.c.l.b16 %v3442
      %v3450 = vpack.c.b16 %v3449, %v3448
      %3454 = vrot.lane.b32.xlu0 %v3443, 127
      %v3455 = vpop.permute.xlu0 %3454
      %3456 = vrot.lane.b32.xlu0 %v3444, 127
      %v3457 = vpop.permute.xlu0 %3456
      %3458 = vrot.lane.b32.xlu0 %v3445, 127
      %v3459 = vpop.permute.xlu0 %3458
      %v3460 = vsel %vm724, %v3455, %v3457
      %v3461 = vsel %vm724, %v3457, %v3459
      %v3465 = vsel %vm298, %v3450, 0
      %3467 = vmatprep.subr.bf16.mxu0 %v3461
      %3468 = vmatpush1.bf16.msra.mxu0 %v3460
      %3469 = vmatprep.subr.bf16.mxu0 0
      %3470 = vmatpush1.bf16.msra.mxu0 0
      %3471 = vmatprep.subr.bf16.mxu0 0
      %3472 = vmatpush1.bf16.msra.mxu0 0
      %3473 = vmatprep.subr.bf16.mxu0 0
      %3474 = vmatpush1.bf16.msra.mxu0 0
      %3475 = vmatprep.subr.bf16.mxu0 0
      %3476 = vmatpush1.bf16.msra.mxu0 0
      %3477 = vmatprep.subr.bf16.mxu0 0
      %3478 = vmatpush1.bf16.msra.mxu0 0
      %3479 = vmatprep.subr.bf16.mxu0 0
      %3480 = vmatpush1.bf16.msra.mxu0 0
      %3481 = vmatprep.subr.bf16.mxu0 0
      %3482 = vmatpush1.bf16.msra.mxu0 0
      %3483 = vmatprep.subr.bf16.mxu0 0
      %3484 = vmatpush1.bf16.msra.mxu0 0
      %3485 = vmatprep.subr.bf16.mxu0 0
      %3486 = vmatpush1.bf16.msra.mxu0 0
      %3487 = vmatprep.subr.bf16.mxu0 0
      %3488 = vmatpush1.bf16.msra.mxu0 0
      %3489 = vmatprep.subr.bf16.mxu0 0
      %3490 = vmatpush1.bf16.msra.mxu0 0
      %3491 = vmatprep.subr.bf16.mxu0 0
      %3492 = vmatpush1.bf16.msra.mxu0 0
      %3493 = vmatprep.subr.bf16.mxu0 0
      %3494 = vmatpush1.bf16.msra.mxu0 0
      %3495 = vmatprep.subr.bf16.mxu0 0
      %3496 = vmatpush1.bf16.msra.mxu0 0
      %3497 = vmatprep.subr.bf16.mxu0 0
      %3498 = vmatpush1.bf16.msra.mxu0 0
      %3499 = vmatprep.mubr.bf16.mxu0 0
      %3500 = vmatmul.mubr.bf16.gmra.mrb[0].mxu0 %v3465
      %v3501 = vpop.f32.mrb[0].mxu0
      %v3502 = vadd.f32 0.0, %v3501
      %v3503 = vpop.f32.mrb[0].mxu0
      %v3504 = vadd.f32 0.0, %v3503
      %v3505 = vpop.f32.mrb[0].mxu0
      %v3506 = vadd.f32 0.0, %v3505
      %v3507 = vpop.f32.mrb[0].mxu0
      %v3508 = vadd.f32 0.0, %v3507
      %3509 = vdwg.mxu0
      %v3510 = vadd.f32 %v3406, %v3502
      %v3511 = vadd.f32 %v3407, %v3504
      %v3512 = vadd.f32 %v3408, %v3506
      %v3513 = vadd.f32 %v3409, %v3508
      %v3514 = vld [vmem:[%s779] sm:$0x3]
      %v3516 = vlaneseq
      %v3517 = vshrl.u32 %v3516, 7
      %v3518 = vsub.s32 0, %v3517
      %v3519 = vrot.slane %v3514, %v3518
      %v3520 = vlaneseq
      %v3521 = vshrl.u32 %v3520, 7
      %v3522 = vsub.s32 1, %v3521
      %v3523 = vrot.slane %v3514, %v3522
      %3524 = vrot.lane.b32.xlu0 %v3519, 15
      %v3525 = vpop.permute.xlu0 %3524
      %3526 = vrot.lane.b32.xlu0 %v3523, 15
      %v3527 = vpop.permute.xlu0 %3526
      %v3528 = vsel %vm794, %v3525, %v3527
      %v3532 = vmul.f32 %v3410, %v3525
      %v3533 = vmul.f32 %v3411, %v3528
      %v3534 = vmul.f32 %v3412, %v3527
      %v3535 = vmul.f32 %v3413, %v3525
      %v3536 = vmul.f32 %v3414, %v3528
      %v3537 = vmul.f32 %v3415, %v3527
      %s3538 = scalar_lea.vmem %s1, 264
      %v3539 = vld [vmem:[%s3538] sm:$0xf]
      %v3540 = vld [vmem:[%s3538 + $0x4] sm:$0xf]
      %v3541 = vpack.c.bf16 %v3535, %v3532
      %v3542 = vpack.c.bf16 %v3536, %v3533
      %v3543 = vpack.c.bf16 %v3537, %v3534
      %v3546 = vunpack.c.l.b16 %v3539
      %v3547 = vunpack.c.l.b16 %v3540
      %v3548 = vpack.c.b16 %v3547, %v3546
      %3552 = vrot.lane.b32.xlu0 %v3541, 113
      %v3553 = vpop.permute.xlu0 %3552
      %3554 = vrot.lane.b32.xlu0 %v3542, 113
      %v3555 = vpop.permute.xlu0 %3554
      %3556 = vrot.lane.b32.xlu0 %v3543, 113
      %v3557 = vpop.permute.xlu0 %3556
      %v3558 = vsel %vm825, %v3553, %v3555
      %v3559 = vsel %vm825, %v3555, %v3557
      %v3563 = vsel %vm298, %v3548, 0
      %3565 = vmatprep.subr.bf16.mxu0 %v3559
      %3566 = vmatpush1.bf16.msra.mxu0 %v3558
      %3567 = vmatprep.subr.bf16.mxu0 0
      %3568 = vmatpush1.bf16.msra.mxu0 0
      %3569 = vmatprep.subr.bf16.mxu0 0
      %3570 = vmatpush1.bf16.msra.mxu0 0
      %3571 = vmatprep.subr.bf16.mxu0 0
      %3572 = vmatpush1.bf16.msra.mxu0 0
      %3573 = vmatprep.subr.bf16.mxu0 0
      %3574 = vmatpush1.bf16.msra.mxu0 0
      %3575 = vmatprep.subr.bf16.mxu0 0
      %3576 = vmatpush1.bf16.msra.mxu0 0
      %3577 = vmatprep.subr.bf16.mxu0 0
      %3578 = vmatpush1.bf16.msra.mxu0 0
      %3579 = vmatprep.subr.bf16.mxu0 0
      %3580 = vmatpush1.bf16.msra.mxu0 0
      %3581 = vmatprep.subr.bf16.mxu0 0
      %3582 = vmatpush1.bf16.msra.mxu0 0
      %3583 = vmatprep.subr.bf16.mxu0 0
      %3584 = vmatpush1.bf16.msra.mxu0 0
      %3585 = vmatprep.subr.bf16.mxu0 0
      %3586 = vmatpush1.bf16.msra.mxu0 0
      %3587 = vmatprep.subr.bf16.mxu0 0
      %3588 = vmatpush1.bf16.msra.mxu0 0
      %3589 = vmatprep.subr.bf16.mxu0 0
      %3590 = vmatpush1.bf16.msra.mxu0 0
      %3591 = vmatprep.subr.bf16.mxu0 0
      %3592 = vmatpush1.bf16.msra.mxu0 0
      %3593 = vmatprep.subr.bf16.mxu0 0
      %3594 = vmatpush1.bf16.msra.mxu0 0
      %3595 = vmatprep.subr.bf16.mxu0 0
      %3596 = vmatpush1.bf16.msra.mxu0 0
      %3597 = vmatprep.mubr.bf16.mxu0 0
      %3598 = vmatmul.mubr.bf16.gmra.mrb[0].mxu0 %v3563
      %v3599 = vpop.f32.mrb[0].mxu0
      %v3600 = vadd.f32 0.0, %v3599
      %v3601 = vpop.f32.mrb[0].mxu0
      %v3602 = vadd.f32 0.0, %v3601
      %v3603 = vpop.f32.mrb[0].mxu0
      %v3604 = vadd.f32 0.0, %v3603
      %v3605 = vpop.f32.mrb[0].mxu0
      %v3606 = vadd.f32 0.0, %v3605
      %3607 = vdwg.mxu0
      %v3608 = vadd.f32 %v3510, %v3600
      %v3609 = vadd.f32 %v3511, %v3602
      %v3610 = vadd.f32 %v3512, %v3604
      %v3611 = vadd.f32 %v3513, %v3606
      %v3612 = vld [vmem:[%s880] sm:$0x3]
      %v3614 = vlaneseq
      %v3615 = vshrl.u32 %v3614, 7
      %v3616 = vsub.s32 0, %v3615
      %v3617 = vrot.slane %v3612, %v3616
      %v3618 = vlaneseq
      %v3619 = vshrl.u32 %v3618, 7
      %v3620 = vsub.s32 1, %v3619
      %v3621 = vrot.slane %v3612, %v3620
      %3622 = vrot.lane.b32.xlu0 %v3617, 16
      %v3623 = vpop.permute.xlu0 %3622
      %3624 = vrot.lane.b32.xlu0 %v3621, 16
      %v3625 = vpop.permute.xlu0 %3624
      %v3626 = vsel %vm298, %v3623, %v3625
      %v3630 = vmul.f32 %v3410, %v3623
      %v3631 = vmul.f32 %v3411, %v3626
      %v3632 = vmul.f32 %v3412, %v3625
      %v3633 = vmul.f32 %v3413, %v3623
      %v3634 = vmul.f32 %v3414, %v3626
      %v3635 = vmul.f32 %v3415, %v3625
      %s3636 = scalar_lea.vmem %s1, 272
      %v3637 = vld [vmem:[%s3636] sm:$0xf]
      %v3638 = vld [vmem:[%s3636 + $0x4] sm:$0xf]
      %v3639 = vpack.c.bf16 %v3633, %v3630
      %v3640 = vpack.c.bf16 %v3634, %v3631
      %v3641 = vpack.c.bf16 %v3635, %v3632
      %v3644 = vunpack.c.l.b16 %v3637
      %v3645 = vunpack.c.l.b16 %v3638
      %v3646 = vpack.c.b16 %v3645, %v3644
      %3650 = vrot.lane.b32.xlu0 %v3639, 112
      %v3651 = vpop.permute.xlu0 %3650
      %3652 = vrot.lane.b32.xlu0 %v3640, 112
      %v3653 = vpop.permute.xlu0 %3652
      %3654 = vrot.lane.b32.xlu0 %v3641, 112
      %v3655 = vpop.permute.xlu0 %3654
      %v3656 = vsel %vm925, %v3651, %v3653
      %v3657 = vsel %vm925, %v3653, %v3655
      %v3661 = vsel %vm298, %v3646, 0
      %3663 = vmatprep.subr.bf16.mxu0 %v3657
      %3664 = vmatpush1.bf16.msra.mxu0 %v3656
      %3665 = vmatprep.subr.bf16.mxu0 0
      %3666 = vmatpush1.bf16.msra.mxu0 0
      %3667 = vmatprep.subr.bf16.mxu0 0
      %3668 = vmatpush1.bf16.msra.mxu0 0
      %3669 = vmatprep.subr.bf16.mxu0 0
      %3670 = vmatpush1.bf16.msra.mxu0 0
      %3671 = vmatprep.subr.bf16.mxu0 0
      %3672 = vmatpush1.bf16.msra.mxu0 0
      %3673 = vmatprep.subr.bf16.mxu0 0
      %3674 = vmatpush1.bf16.msra.mxu0 0
      %3675 = vmatprep.subr.bf16.mxu0 0
      %3676 = vmatpush1.bf16.msra.mxu0 0
      %3677 = vmatprep.subr.bf16.mxu0 0
      %3678 = vmatpush1.bf16.msra.mxu0 0
      %3679 = vmatprep.subr.bf16.mxu0 0
      %3680 = vmatpush1.bf16.msra.mxu0 0
      %3681 = vmatprep.subr.bf16.mxu0 0
      %3682 = vmatpush1.bf16.msra.mxu0 0
      %3683 = vmatprep.subr.bf16.mxu0 0
      %3684 = vmatpush1.bf16.msra.mxu0 0
      %3685 = vmatprep.subr.bf16.mxu0 0
      %3686 = vmatpush1.bf16.msra.mxu0 0
      %3687 = vmatprep.subr.bf16.mxu0 0
      %3688 = vmatpush1.bf16.msra.mxu0 0
      %3689 = vmatprep.subr.bf16.mxu0 0
      %3690 = vmatpush1.bf16.msra.mxu0 0
      %3691 = vmatprep.subr.bf16.mxu0 0
      %3692 = vmatpush1.bf16.msra.mxu0 0
      %3693 = vmatprep.subr.bf16.mxu0 0
      %3694 = vmatpush1.bf16.msra.mxu0 0
      %3695 = vmatprep.mubr.bf16.mxu0 0
      %3696 = vmatmul.mubr.bf16.gmra.mrb[0].mxu0 %v3661
      %v3697 = vpop.f32.mrb[0].mxu0
      %v3698 = vadd.f32 0.0, %v3697
      %v3699 = vpop.f32.mrb[0].mxu0
      %v3700 = vadd.f32 0.0, %v3699
      %v3701 = vpop.f32.mrb[0].mxu0
      %v3702 = vadd.f32 0.0, %v3701
      %v3703 = vpop.f32.mrb[0].mxu0
      %v3704 = vadd.f32 0.0, %v3703
      %3705 = vdwg.mxu0
      %v3706 = vadd.f32 %v3608, %v3698
      %v3707 = vadd.f32 %v3609, %v3700
      %v3708 = vadd.f32 %v3610, %v3702
      %v3709 = vadd.f32 %v3611, %v3704
      %v3710 = vld [vmem:[%s980] sm:$0x3]
      %v3712 = vlaneseq
      %v3713 = vshrl.u32 %v3712, 7
      %v3714 = vsub.s32 0, %v3713
      %v3715 = vrot.slane %v3710, %v3714
      %v3716 = vlaneseq
      %v3717 = vshrl.u32 %v3716, 7
      %v3718 = vsub.s32 1, %v3717
      %v3719 = vrot.slane %v3710, %v3718
      %3720 = vrot.lane.b32.xlu0 %v3715, 17
      %v3721 = vpop.permute.xlu0 %3720
      %3722 = vrot.lane.b32.xlu0 %v3719, 17
      %v3723 = vpop.permute.xlu0 %3722
      %v3724 = vsel %vm995, %v3721, %v3723
      %v3728 = vmul.f32 %v3410, %v3721
      %v3729 = vmul.f32 %v3411, %v3724
      %v3730 = vmul.f32 %v3412, %v3723
      %v3731 = vmul.f32 %v3413, %v3721
      %v3732 = vmul.f32 %v3414, %v3724
      %v3733 = vmul.f32 %v3415, %v3723
      %s3734 = scalar_lea.vmem %s1, 280
      %v3735 = vld [vmem:[%s3734] sm:$0xf]
      %v3736 = vld [vmem:[%s3734 + $0x4] sm:$0xf]
      %v3737 = vpack.c.bf16 %v3731, %v3728
      %v3738 = vpack.c.bf16 %v3732, %v3729
      %v3739 = vpack.c.bf16 %v3733, %v3730
      %v3742 = vunpack.c.l.b16 %v3735
      %v3743 = vunpack.c.l.b16 %v3736
      %v3744 = vpack.c.b16 %v3743, %v3742
      %3748 = vrot.lane.b32.xlu0 %v3737, 111
      %v3749 = vpop.permute.xlu0 %3748
      %3750 = vrot.lane.b32.xlu0 %v3738, 111
      %v3751 = vpop.permute.xlu0 %3750
      %3752 = vrot.lane.b32.xlu0 %v3739, 111
      %v3753 = vpop.permute.xlu0 %3752
      %v3754 = vsel %vm1026, %v3749, %v3751
      %v3755 = vsel %vm1026, %v3751, %v3753
      %v3759 = vsel %vm298, %v3744, 0
      %3761 = vmatprep.subr.bf16.mxu0 %v3755
      %3762 = vmatpush1.bf16.msra.mxu0 %v3754
      %3763 = vmatprep.subr.bf16.mxu0 0
      %3764 = vmatpush1.bf16.msra.mxu0 0
      %3765 = vmatprep.subr.bf16.mxu0 0
      %3766 = vmatpush1.bf16.msra.mxu0 0
      %3767 = vmatprep.subr.bf16.mxu0 0
      %3768 = vmatpush1.bf16.msra.mxu0 0
      %3769 = vmatprep.subr.bf16.mxu0 0
      %3770 = vmatpush1.bf16.msra.mxu0 0
      %3771 = vmatprep.subr.bf16.mxu0 0
      %3772 = vmatpush1.bf16.msra.mxu0 0
      %3773 = vmatprep.subr.bf16.mxu0 0
      %3774 = vmatpush1.bf16.msra.mxu0 0
      %3775 = vmatprep.subr.bf16.mxu0 0
      %3776 = vmatpush1.bf16.msra.mxu0 0
      %3777 = vmatprep.subr.bf16.mxu0 0
      %3778 = vmatpush1.bf16.msra.mxu0 0
      %3779 = vmatprep.subr.bf16.mxu0 0
      %3780 = vmatpush1.bf16.msra.mxu0 0
      %3781 = vmatprep.subr.bf16.mxu0 0
      %3782 = vmatpush1.bf16.msra.mxu0 0
      %3783 = vmatprep.subr.bf16.mxu0 0
      %3784 = vmatpush1.bf16.msra.mxu0 0
      %3785 = vmatprep.subr.bf16.mxu0 0
      %3786 = vmatpush1.bf16.msra.mxu0 0
      %3787 = vmatprep.subr.bf16.mxu0 0
      %3788 = vmatpush1.bf16.msra.mxu0 0
      %3789 = vmatprep.subr.bf16.mxu0 0
      %3790 = vmatpush1.bf16.msra.mxu0 0
      %3791 = vmatprep.subr.bf16.mxu0 0
      %3792 = vmatpush1.bf16.msra.mxu0 0
      %3793 = vmatprep.mubr.bf16.mxu0 0
      %3794 = vmatmul.mubr.bf16.gmra.mrb[0].mxu0 %v3759
      %v3795 = vpop.f32.mrb[0].mxu0
      %v3796 = vadd.f32 0.0, %v3795
      %v3797 = vpop.f32.mrb[0].mxu0
      %v3798 = vadd.f32 0.0, %v3797
      %v3799 = vpop.f32.mrb[0].mxu0
      %v3800 = vadd.f32 0.0, %v3799
      %v3801 = vpop.f32.mrb[0].mxu0
      %v3802 = vadd.f32 0.0, %v3801
      %3803 = vdwg.mxu0
      %v3804 = vadd.f32 %v3706, %v3796
      %v3805 = vadd.f32 %v3707, %v3798
      %v3806 = vadd.f32 %v3708, %v3800
      %v3807 = vadd.f32 %v3709, %v3802
      %s3808 = scalar_lea.vmem %s2, 48
      %v3809 = vld [vmem:[%s3808] sm:$0xff]
      %v3810 = vld [vmem:[%s3808 + $0x8] sm:$0xff]
      %3812 = vset.pattern.permute.xlu0 0
      %3813 = vperm.xlu0 %3812, %v3809
      %v3814 = vpop.permute.xlu0 %3813
      %3817 = vset.pattern.permute.xlu0 0
      %3818 = vperm.xlu0 %3817, %v3810
      %v3819 = vpop.permute.xlu0 %3818
      %v3821 = vadd.f32 %v3804, %v3814
      %v3822 = vadd.f32 %v3805, %v3814
      %v3823 = vadd.f32 %v3806, %v3819
      %v3824 = vadd.f32 %v3807, %v3819
      %v3825 = vadd.f32 %v3821, %v3822
      %3826 = vadd.xlane.f32.xlu0 %v3825
      %v3827 = vpop.xlane.xlu0 %3826
      %v3828 = vadd.f32 %v3823, %v3824
      %3829 = vadd.xlane.f32.xlu0 %v3828
      %v3830 = vpop.xlane.xlu0 %3829
      %v3831 = vmul.f32 %v3827, %v1103
      %v3832 = vmul.f32 %v3830, %v1103
      %v3833 = vsub.f32 %v3821, %v3831
      %v3834 = vsub.f32 %v3822, %v3831
      %v3835 = vsub.f32 %v3823, %v3832
      %v3836 = vsub.f32 %v3824, %v3832
      %v3837 = vmul.f32 %v3833, %v3833
      %v3838 = vmul.f32 %v3834, %v3834
      %v3839 = vmul.f32 %v3835, %v3835
      %v3840 = vmul.f32 %v3836, %v3836
      %v3841 = vadd.f32 %v3837, %v3838
      %3842 = vadd.xlane.f32.xlu0 %v3841
      %v3843 = vpop.xlane.xlu0 %3842
      %v3844 = vadd.f32 %v3839, %v3840
      %3845 = vadd.xlane.f32.xlu0 %v3844
      %v3846 = vpop.xlane.xlu0 %3845
      %v3847 = vmul.f32 %v3843, %v1103
      %v3848 = vmul.f32 %v3846, %v1103
      %v3849 = vadd.f32 %v3847, 1e-05
      %v3850 = vadd.f32 %v3848, 1e-05
      %v3851 = vrsqrt.pop %v3849
      %v3852 = vrsqrt.pop %v3850
      %v3853 = vmul.f32 %v3833, %v3851
      %v3854 = vmul.f32 %v3834, %v3851
      %v3855 = vmul.f32 %v3835, %v3852
      %v3856 = vmul.f32 %v3836, %v3852
      %v3857 = vadd.f32 %v3853, %v2039
      %v3858 = vadd.f32 %v3854, %v2040
      %v3859 = vadd.f32 %v3855, %v2041
      %v3860 = vadd.f32 %v3856, %v2042
      %3861 = vst [vmem:[%s197] sm:$0xff] %v3857
      %3862 = vst [vmem:[%s197 + $0x8] sm:$0xff] %v3858
      %3863 = vst [vmem:[%s197 + $0x10] sm:$0xff] %v3859
      %3864 = vst [vmem:[%s197 + $0x18] sm:$0xff] %v3860
      %p3865 = scmp.lt.s32.totalorder %s15, 1
      %s3866 = scalar_select %p3865, %s15, 1
      %s3867 = smul.addr %s3866, 4
      %s3868 = smul.addr %s3867, 8
      %s3869 = scalar_lea.vmem %s4, %s3868
      // Predicated region
      $region37: #{resblocks_forward.1} parent=35 // pred_check
        %p3870 = pneg %p122
      $region38: #{resblocks_forward.1} parent=35 // pred_check_branch
        %3872 = sbr.rel (%p3870) target = $region40
      $region39: #{resblocks_forward.1} parent=35 // pred_region
        _
      $region40: #{resblocks_forward.1} parent=35 // pred_fallthru
        _
    $region36: #{resblocks_forward.1} parent=5 // pred_fallthru
      _
    %p3873 = scmp.le.s32.totalorder 2, %s10
    // Predicated region
    $region41: #{resblocks_forward.1} parent=5 // pred_check
      %p3874 = pneg %p3873
    $region42: #{resblocks_forward.1} parent=5 // pred_check_branch
      %3876 = sbr.rel (%p3874) target = $region44
    $region43: #{resblocks_forward.1} parent=5 // pred_region
      %s3877 = ssub.s32 %s10, 2
      // Predicated region
      $region45: #{resblocks_forward.1} parent=43 // pred_check
        %p3878 = pneg %p128
      $region46: #{resblocks_forward.1} parent=43 // pred_check_branch
        %3880 = sbr.rel (%p3878) target = $region48
      $region47: #{resblocks_forward.1} parent=43 // pred_region
        %p3881 = scmp.lt.s32.totalorder %s16, 1
        %s3882 = scalar_select %p3881, %s16, 1
        %s3883 = smul.addr %s3882, 4
        %s3884 = smul.addr %s3883, 8
        %s3885 = scalar_lea.vmem %s4, %s3884
      $region48: #{resblocks_forward.1} parent=43 // pred_fallthru
        _
    $region44: #{resblocks_forward.1} parent=5 // pred_fallthru
      _
  $region6: #{resblocks_forward.1} parent=0 // loop_footer
    %s14 = sadd.s32 1, %s10
  $region7: #{resblocks_forward.1} parent=0 // loop_footer_branch
    %9 = sbr.rel target = $region3
  $region8: #{resblocks_forward.1} parent=0 // loop_exit
    _

</llo_original>
